<compile_context>
chip_gen: v5e
topology: v5e:2x2
jax: 0.10.0
libtpu: 0.0.40
codegen_flags: <defaults>
</compile_context>

<pallas_src>
import functools

import jax
import jax.numpy as jnp
from jax.experimental import pallas as pl
from jax.experimental.pallas import tpu as pltpu


def _mpd_kernel(x_ref, w_ref, scale_ref, shift_ref, o_ref, xpad_ref,
                *, H, W, C, K, stride, activation):
    """Fused mixed-kernel depthwise conv + folded BatchNorm + activation.

    Packed layout: lane index = w * C + c (lane-dense last dim = W*C).

    x_ref:     (1, H, W*C)          un-padded packed input (one image)
    w_ref:     (K*K, W*C)           depthwise taps, tiled across W
    scale_ref: (1, W*C)             folded BN scale (gamma / sqrt(var+eps)), tiled
    shift_ref: (1, W*C)             folded BN shift (beta - mean*scale), tiled
    o_ref:     (1, Ho, Wo*C)        strided packed output
    xpad_ref:  (H+K-1, (W+K-1)*C)   f32 VMEM scratch for the zero-padded image
    """
    pad = K // 2
    L = W * C
    Hp = H + 2 * pad
    Lp = (W + 2 * pad) * C

    # 1) Build the zero-padded packed image in VMEM (no HBM padding round trip).
    xpad_ref[...] = jnp.zeros((Hp, Lp), jnp.float32)
    xpad_ref[pad:pad + H, pad * C:pad * C + L] = x_ref[0].astype(jnp.float32)

    wv = w_ref[...]                                     # (K*K, L) f32
    acc = jnp.zeros((H, L), jnp.float32)

    # 2) Depthwise conv: K sublane-shifted row bands (kh), K lane-shifted reads
    #    per band (kw).  The kw offset lives on the *lane* axis in this packed
    #    layout; the static lane slice lowers to an XLU lane-rotate + select,
    #    so the 81 unaligned sublane copies of the previous version are gone.
    # TODO(synk): per-branch true-kernel tap skipping (avg 41 vs 81 taps) only
    #             pays off when per-branch channels fill >=128 lanes on their
    #             own; at 2 channels/branch lane density wins, so all taps run.
    for kh in range(K):
        band = xpad_ref[kh:kh + H, :]                   # (H, Lp)
        for kw in range(K):
            acc = acc + band[:, kw * C:kw * C + L] * wv[kh * K + kw, :]

    # 3) Folded BatchNorm + activation, still lane-dense.
    # TODO(synk): training-mode BatchNorm batch statistics are not computed
    #             in-kernel; BN is folded with running stats (eval semantics).
    y = acc * scale_ref[0, :] + shift_ref[0, :]
    if activation == "relu":
        y = jnp.clip(y, 0.0, 6.0)                       # ReLU6
    else:                                               # 'hswish'
        y = y * jnp.clip(y + 3.0, 0.0, 6.0) * (1.0 / 6.0)

    # 4) In-kernel striding: only the strided output ever reaches HBM.
    if stride > 1:
        Ho = (H - 1) // stride + 1
        Wo = (W - 1) // stride + 1
        y = jnp.concatenate(
            [y[i * stride:i * stride + 1, :] for i in range(Ho)], axis=0)
        y = jnp.concatenate(
            [y[:, j * stride * C:j * stride * C + C] for j in range(Wo)], axis=1)
        # TODO(synk): the s^2 extra VPU MACs of the stride-1 accumulator remain;
        #             a residue-class (mod-stride) W packing would remove them.

    o_ref[0] = y.astype(o_ref.dtype)


def mpd_block_forward(x_nchw, w_dw, scale, shift, *, stride=1,
                      activation="relu", io_dtype=jnp.float32):
    """x_nchw: (N, C, H, W); w_dw: (K, K, C); scale/shift: (C,) folded BN."""
    N, C, H, W = x_nchw.shape
    K = w_dw.shape[0]
    pad = K // 2
    L = W * C
    Ho = (H - 1) // stride + 1
    Wo = (W - 1) // stride + 1
    Lo = Wo * C

    # NCHW -> NHWC -> lane-packed (N, H, W*C).  One layout pass; the separate
    # zero-pad HBM round trip of the previous version is gone (padding is built
    # in VMEM inside the kernel).  In a real NHWC pipeline this transpose is
    # pure layout plumbing that disappears entirely.
    x_packed = jnp.transpose(x_nchw, (0, 2, 3, 1)).reshape(N, H, L).astype(io_dtype)
    # Pre-broadcast weights / BN params to the packed (lane-dense) layout.
    w_packed = jnp.tile(w_dw.reshape(K * K, 1, C), (1, W, 1)).reshape(K * K, L)
    w_packed = w_packed.astype(jnp.float32)
    scale_p = jnp.tile(scale.reshape(1, 1, C), (1, W, 1)).reshape(1, L)
    scale_p = scale_p.astype(jnp.float32)
    shift_p = jnp.tile(shift.reshape(1, 1, C), (1, W, 1)).reshape(1, L)
    shift_p = shift_p.astype(jnp.float32)

    # VMEM budget: sized for v7x (64 MiB physical), generous headroom elsewhere.
    Hp, Lp = H + 2 * pad, (W + 2 * pad) * C
    io_bytes = jnp.dtype(io_dtype).itemsize
    vmem_est = (2 * (H * L * io_bytes + Ho * Lo * io_bytes        # dbl-buffered I/O
                     + K * K * L * 4 + 2 * L * 4)                 # weights + BN params
                + Hp * Lp * 4                                     # padded scratch
                + 4 * H * L * 4)                                  # accumulator headroom
    assert vmem_est < 48 * 1024 * 1024, (
        "per-image block exceeds the VMEM budget; "
        "TODO(synk): add H row-band tiling with a (K-1)-row halo for large images")

    kernel = functools.partial(_mpd_kernel, H=H, W=W, C=C, K=K,
                               stride=stride, activation=activation)
    out = pl.pallas_call(
        kernel,
        out_shape=jax.ShapeDtypeStruct((N, Ho, Lo), io_dtype),
        grid=(N,),                      # one image per step; N steps in parallel
        in_specs=[
            pl.BlockSpec((1, H, L), lambda n: (n, 0, 0)),
            pl.BlockSpec((K * K, L), lambda n: (0, 0)),
            pl.BlockSpec((1, L), lambda n: (0, 0)),
            pl.BlockSpec((1, L), lambda n: (0, 0)),
        ],
        out_specs=pl.BlockSpec((1, Ho, Lo), lambda n: (n, 0, 0)),
        scratch_shapes=[pltpu.VMEM((Hp, Lp), jnp.float32)],
        compiler_params=pltpu.CompilerParams(
            dimension_semantics=("parallel",),
            vmem_limit_bytes=48 * 1024 * 1024),
    )(x_packed, w_packed, scale_p, shift_p)

    # Packed (N, Ho, Wo*C) -> NCHW for the PyTorch-convention caller.
    return jnp.transpose(out.reshape(N, Ho, Wo, C), (0, 3, 1, 2))


def init_mpd_params(key, input_channel, output_channel, split_block, kernels):
    """Deterministic synthetic parameters matching the module's __init__ shapes."""
    bic = input_channel // split_block
    boc = output_channel // split_block
    # Conv2d(bic, boc, k, groups=boc) with bic == boc is pure depthwise.
    assert bic == boc, "kernel implements the depthwise case (in == out per split)"
    Kmax = max(kernels)
    branch_ws, padded = [], []
    for k in kernels:
        key, sub = jax.random.split(key)
        w = 0.2 * jax.random.normal(sub, (boc, 1, k, k), dtype=jnp.float32)
        branch_ws.append(w)
        off = (Kmax - k) // 2
        padded.append(jnp.pad(w[:, 0],
                              ((0, 0), (off, Kmax - k - off), (off, Kmax - k - off))))
    w_dw = jnp.transpose(jnp.concatenate(padded, axis=0), (1, 2, 0))   # (Kmax,Kmax,C)

    key, k1, k2, k3, k4 = jax.random.split(key, 5)
    gamma = 1.0 + 0.1 * jax.random.normal(k1, (output_channel,), jnp.float32)
    beta = 0.1 * jax.random.normal(k2, (output_channel,), jnp.float32)
    running_mean = 0.1 * jax.random.normal(k3, (output_channel,), jnp.float32)
    running_var = jax.random.uniform(k4, (output_channel,), jnp.float32, 0.5, 1.5)
    eps = 1e-5
    scale = gamma / jnp.sqrt(running_var + eps)
    shift = beta - running_mean * scale
    return w_dw, branch_ws, scale, shift


def reference_forward(x_nchw, branch_ws, kernels, stride, scale, shift, activation):
    """Pure-JAX reference mirroring the PyTorch forward (split/conv/concat/BN/act)."""
    split = len(kernels)
    bic = x_nchw.shape[1] // split
    outs = []
    for b, (k, w) in enumerate(zip(kernels, branch_ws)):
        xi = x_nchw[:, b * bic:(b + 1) * bic]
        yi = jax.lax.conv_general_dilated(
            xi, w, window_strides=(stride, stride),
            padding=[(k // 2, k // 2), (k // 2, k // 2)],
            dimension_numbers=("NCHW", "OIHW", "NCHW"),
            feature_group_count=w.shape[0],
            precision=jax.lax.Precision.HIGHEST)
        outs.append(yi)
    y = jnp.concatenate(outs, axis=1)
    y = y * scale[None, :, None, None] + shift[None, :, None, None]
    if activation == "relu":
        return jnp.clip(y, 0.0, 6.0)
    return y * jnp.clip(y + 3.0, 0.0, 6.0) / 6.0


if __name__ == "__main__":
    key = jax.random.PRNGKey(0)

    N, H, W = 2, 16, 16
    input_channel = output_channel = 8      # W*C = 128 -> exactly one lane-dense vreg row
    split_block = 4
    kernels = [3, 5, 7, 9]

    key, kx, kp = jax.random.split(key, 3)
    x = jax.random.normal(kx, (N, input_channel, H, W), jnp.float32)
    w_dw, branch_ws, scale, shift = init_mpd_params(
        kp, input_channel, output_channel, split_block, kernels)

    configs = [
        # (stride, activation, io_dtype, atol, rtol)
        (1, "relu",   jnp.float32,  1e-4, 1e-4),
        (2, "hswish", jnp.float32,  1e-4, 1e-4),   # in-kernel striding path
        (1, "hswish", jnp.bfloat16, 8e-2, 5e-2),   # bf16 I/O halves HBM traffic
    ]
    for stride, activation, io_dtype, atol, rtol in configs:
        fwd = jax.jit(functools.partial(mpd_block_forward, stride=stride,
                                        activation=activation, io_dtype=io_dtype))
        out = jax.block_until_ready(fwd(x, w_dw, scale, shift))

        # Reference sees the same (possibly bf16-quantized) input.
        x_ref_in = x.astype(io_dtype).astype(jnp.float32)
        ref = reference_forward(x_ref_in, branch_ws, kernels, stride, scale,
                                shift, activation)
        assert out.shape == ref.shape, (out.shape, ref.shape)
        out_f32 = out.astype(jnp.float32)
        err = float(jnp.max(jnp.abs(out_f32 - ref)))
        assert jnp.allclose(out_f32, ref, atol=atol, rtol=rtol), \
            (stride, activation, str(io_dtype), err)

    print("KERNEL_OK")
</pallas_src>

<mosaic_0001>
module attributes {stable_mosaic.version = 11 : i64} {
  func.func @_mpd_kernel(%arg0: i32, %arg1: memref<1x16x128xf32, #tpu.memory_space<vmem>>, %arg2: memref<81x128xf32, #tpu.memory_space<vmem>>, %arg3: memref<1x128xf32, #tpu.memory_space<vmem>>, %arg4: memref<1x128xf32, #tpu.memory_space<vmem>>, %arg5: memref<1x16x128xf32, #tpu.memory_space<vmem>>, %arg6: memref<24x192xf32, #tpu.memory_space<vmem>>) attributes {dimension_semantics = [#tpu.dimension_semantics<parallel>], iteration_bounds = array<i64: 2>, scalar_prefetch = 0 : i64, scratch_operands = 1 : i64, tpu.core_type = #tpu.core_type<tc>, window_params = [{transform_indices = @transform_0, window_bounds = array<i64: 1, 16, 128>}, {pipeline_mode = #tpu.pipeline_mode<synchronous>, transform_indices = @transform_1, window_bounds = array<i64: 81, 128>}, {pipeline_mode = #tpu.pipeline_mode<synchronous>, transform_indices = @transform_2, window_bounds = array<i64: 1, 128>}, {pipeline_mode = #tpu.pipeline_mode<synchronous>, transform_indices = @transform_3, window_bounds = array<i64: 1, 128>}, {transform_indices = @transform_4, window_bounds = array<i64: 1, 16, 128>}]} {
    %cst = arith.constant 0.000000e+00 : f32
    %0 = vector.broadcast %cst : f32 to vector<24x192xf32>
    %c0 = arith.constant 0 : index
    %c0_0 = arith.constant 0 : index
    %1 = vector.load %arg6[%c0, %c0_0] : memref<24x192xf32, #tpu.memory_space<vmem>>, vector<24x192xf32>
    tpu.vector_store %arg6[%c0, %c0_0], %0 {strides = array<i32>} : memref<24x192xf32, #tpu.memory_space<vmem>>, vector<24x192xf32>,
    %c0_1 = arith.constant 0 : index
    %c0_2 = arith.constant 0 : index
    %c0_3 = arith.constant 0 : index
    %2 = vector.load %arg1[%c0_1, %c0_2, %c0_3] : memref<1x16x128xf32, #tpu.memory_space<vmem>>, vector<1x16x128xf32>
    %3 = vector.shape_cast %2 : vector<1x16x128xf32> to vector<16x128xf32>
    %c4 = arith.constant 4 : index
    %c32 = arith.constant 32 : index
    %4 = vector.load %arg6[%c4, %c32] : memref<24x192xf32, #tpu.memory_space<vmem>>, vector<16x128xf32>
    tpu.vector_store %arg6[%c4, %c32], %3 {strides = array<i32>} : memref<24x192xf32, #tpu.memory_space<vmem>>, vector<16x128xf32>,
    %c0_4 = arith.constant 0 : index
    %c0_5 = arith.constant 0 : index
    %5 = vector.load %arg2[%c0_4, %c0_5] : memref<81x128xf32, #tpu.memory_space<vmem>>, vector<81x128xf32>
    %cst_6 = arith.constant 0.000000e+00 : f32
    %6 = vector.broadcast %cst_6 : f32 to vector<16x128xf32>
    %c0_7 = arith.constant 0 : index
    %c0_8 = arith.constant 0 : index
    %7 = vector.load %arg6[%c0_7, %c0_8] : memref<24x192xf32, #tpu.memory_space<vmem>>, vector<16x192xf32>
    %8 = vector.extract_strided_slice %7 {offsets = [0, 0], sizes = [16, 128], strides = [1, 1]} : vector<16x192xf32> to vector<16x128xf32>
    %9 = vector.extract_strided_slice %5 {offsets = [0, 0], sizes = [1, 128], strides = [1, 1]} : vector<81x128xf32> to vector<1x128xf32>
    %10 = vector.shape_cast %9 : vector<1x128xf32> to vector<128xf32>
    %11 = vector.shape_cast %10 : vector<128xf32> to vector<1x128xf32>
    %12 = vector.broadcast %11 : vector<1x128xf32> to vector<16x128xf32>
    %13 = arith.mulf %8, %12 : vector<16x128xf32>
    %14 = arith.addf %6, %13 : vector<16x128xf32>
    %15 = vector.extract_strided_slice %7 {offsets = [0, 8], sizes = [16, 128], strides = [1, 1]} : vector<16x192xf32> to vector<16x128xf32>
    %16 = vector.extract_strided_slice %5 {offsets = [1, 0], sizes = [1, 128], strides = [1, 1]} : vector<81x128xf32> to vector<1x128xf32>
    %17 = vector.shape_cast %16 : vector<1x128xf32> to vector<128xf32>
    %18 = vector.shape_cast %17 : vector<128xf32> to vector<1x128xf32>
    %19 = vector.broadcast %18 : vector<1x128xf32> to vector<16x128xf32>
    %20 = arith.mulf %15, %19 : vector<16x128xf32>
    %21 = arith.addf %14, %20 : vector<16x128xf32>
    %22 = vector.extract_strided_slice %7 {offsets = [0, 16], sizes = [16, 128], strides = [1, 1]} : vector<16x192xf32> to vector<16x128xf32>
    %23 = vector.extract_strided_slice %5 {offsets = [2, 0], sizes = [1, 128], strides = [1, 1]} : vector<81x128xf32> to vector<1x128xf32>
    %24 = vector.shape_cast %23 : vector<1x128xf32> to vector<128xf32>
    %25 = vector.shape_cast %24 : vector<128xf32> to vector<1x128xf32>
    %26 = vector.broadcast %25 : vector<1x128xf32> to vector<16x128xf32>
    %27 = arith.mulf %22, %26 : vector<16x128xf32>
    %28 = arith.addf %21, %27 : vector<16x128xf32>
    %29 = vector.extract_strided_slice %7 {offsets = [0, 24], sizes = [16, 128], strides = [1, 1]} : vector<16x192xf32> to vector<16x128xf32>
    %30 = vector.extract_strided_slice %5 {offsets = [3, 0], sizes = [1, 128], strides = [1, 1]} : vector<81x128xf32> to vector<1x128xf32>
    %31 = vector.shape_cast %30 : vector<1x128xf32> to vector<128xf32>
    %32 = vector.shape_cast %31 : vector<128xf32> to vector<1x128xf32>
    %33 = vector.broadcast %32 : vector<1x128xf32> to vector<16x128xf32>
    %34 = arith.mulf %29, %33 : vector<16x128xf32>
    %35 = arith.addf %28, %34 : vector<16x128xf32>
    %36 = vector.extract_strided_slice %7 {offsets = [0, 32], sizes = [16, 128], strides = [1, 1]} : vector<16x192xf32> to vector<16x128xf32>
    %37 = vector.extract_strided_slice %5 {offsets = [4, 0], sizes = [1, 128], strides = [1, 1]} : vector<81x128xf32> to vector<1x128xf32>
    %38 = vector.shape_cast %37 : vector<1x128xf32> to vector<128xf32>
    %39 = vector.shape_cast %38 : vector<128xf32> to vector<1x128xf32>
    %40 = vector.broadcast %39 : vector<1x128xf32> to vector<16x128xf32>
    %41 = arith.mulf %36, %40 : vector<16x128xf32>
    %42 = arith.addf %35, %41 : vector<16x128xf32>
    %43 = vector.extract_strided_slice %7 {offsets = [0, 40], sizes = [16, 128], strides = [1, 1]} : vector<16x192xf32> to vector<16x128xf32>
    %44 = vector.extract_strided_slice %5 {offsets = [5, 0], sizes = [1, 128], strides = [1, 1]} : vector<81x128xf32> to vector<1x128xf32>
    %45 = vector.shape_cast %44 : vector<1x128xf32> to vector<128xf32>
    %46 = vector.shape_cast %45 : vector<128xf32> to vector<1x128xf32>
    %47 = vector.broadcast %46 : vector<1x128xf32> to vector<16x128xf32>
    %48 = arith.mulf %43, %47 : vector<16x128xf32>
    %49 = arith.addf %42, %48 : vector<16x128xf32>
    %50 = vector.extract_strided_slice %7 {offsets = [0, 48], sizes = [16, 128], strides = [1, 1]} : vector<16x192xf32> to vector<16x128xf32>
    %51 = vector.extract_strided_slice %5 {offsets = [6, 0], sizes = [1, 128], strides = [1, 1]} : vector<81x128xf32> to vector<1x128xf32>
    %52 = vector.shape_cast %51 : vector<1x128xf32> to vector<128xf32>
    %53 = vector.shape_cast %52 : vector<128xf32> to vector<1x128xf32>
    %54 = vector.broadcast %53 : vector<1x128xf32> to vector<16x128xf32>
    %55 = arith.mulf %50, %54 : vector<16x128xf32>
    %56 = arith.addf %49, %55 : vector<16x128xf32>
    %57 = vector.extract_strided_slice %7 {offsets = [0, 56], sizes = [16, 128], strides = [1, 1]} : vector<16x192xf32> to vector<16x128xf32>
    %58 = vector.extract_strided_slice %5 {offsets = [7, 0], sizes = [1, 128], strides = [1, 1]} : vector<81x128xf32> to vector<1x128xf32>
    %59 = vector.shape_cast %58 : vector<1x128xf32> to vector<128xf32>
    %60 = vector.shape_cast %59 : vector<128xf32> to vector<1x128xf32>
    %61 = vector.broadcast %60 : vector<1x128xf32> to vector<16x128xf32>
    %62 = arith.mulf %57, %61 : vector<16x128xf32>
    %63 = arith.addf %56, %62 : vector<16x128xf32>
    %64 = vector.extract_strided_slice %7 {offsets = [0, 64], sizes = [16, 128], strides = [1, 1]} : vector<16x192xf32> to vector<16x128xf32>
    %65 = vector.extract_strided_slice %5 {offsets = [8, 0], sizes = [1, 128], strides = [1, 1]} : vector<81x128xf32> to vector<1x128xf32>
    %66 = vector.shape_cast %65 : vector<1x128xf32> to vector<128xf32>
    %67 = vector.shape_cast %66 : vector<128xf32> to vector<1x128xf32>
    %68 = vector.broadcast %67 : vector<1x128xf32> to vector<16x128xf32>
    %69 = arith.mulf %64, %68 : vector<16x128xf32>
    %70 = arith.addf %63, %69 : vector<16x128xf32>
    %c1 = arith.constant 1 : index
    %c0_9 = arith.constant 0 : index
    %71 = vector.load %arg6[%c1, %c0_9] : memref<24x192xf32, #tpu.memory_space<vmem>>, vector<16x192xf32>
    %72 = vector.extract_strided_slice %71 {offsets = [0, 0], sizes = [16, 128], strides = [1, 1]} : vector<16x192xf32> to vector<16x128xf32>
    %73 = vector.extract_strided_slice %5 {offsets = [9, 0], sizes = [1, 128], strides = [1, 1]} : vector<81x128xf32> to vector<1x128xf32>
    %74 = vector.shape_cast %73 : vector<1x128xf32> to vector<128xf32>
    %75 = vector.shape_cast %74 : vector<128xf32> to vector<1x128xf32>
    %76 = vector.broadcast %75 : vector<1x128xf32> to vector<16x128xf32>
    %77 = arith.mulf %72, %76 : vector<16x128xf32>
    %78 = arith.addf %70, %77 : vector<16x128xf32>
    %79 = vector.extract_strided_slice %71 {offsets = [0, 8], sizes = [16, 128], strides = [1, 1]} : vector<16x192xf32> to vector<16x128xf32>
    %80 = vector.extract_strided_slice %5 {offsets = [10, 0], sizes = [1, 128], strides = [1, 1]} : vector<81x128xf32> to vector<1x128xf32>
    %81 = vector.shape_cast %80 : vector<1x128xf32> to vector<128xf32>
    %82 = vector.shape_cast %81 : vector<128xf32> to vector<1x128xf32>
    %83 = vector.broadcast %82 : vector<1x128xf32> to vector<16x128xf32>
    %84 = arith.mulf %79, %83 : vector<16x128xf32>
    %85 = arith.addf %78, %84 : vector<16x128xf32>
    %86 = vector.extract_strided_slice %71 {offsets = [0, 16], sizes = [16, 128], strides = [1, 1]} : vector<16x192xf32> to vector<16x128xf32>
    %87 = vector.extract_strided_slice %5 {offsets = [11, 0], sizes = [1, 128], strides = [1, 1]} : vector<81x128xf32> to vector<1x128xf32>
    %88 = vector.shape_cast %87 : vector<1x128xf32> to vector<128xf32>
    %89 = vector.shape_cast %88 : vector<128xf32> to vector<1x128xf32>
    %90 = vector.broadcast %89 : vector<1x128xf32> to vector<16x128xf32>
    %91 = arith.mulf %86, %90 : vector<16x128xf32>
    %92 = arith.addf %85, %91 : vector<16x128xf32>
    %93 = vector.extract_strided_slice %71 {offsets = [0, 24], sizes = [16, 128], strides = [1, 1]} : vector<16x192xf32> to vector<16x128xf32>
    %94 = vector.extract_strided_slice %5 {offsets = [12, 0], sizes = [1, 128], strides = [1, 1]} : vector<81x128xf32> to vector<1x128xf32>
    %95 = vector.shape_cast %94 : vector<1x128xf32> to vector<128xf32>
    %96 = vector.shape_cast %95 : vector<128xf32> to vector<1x128xf32>
    %97 = vector.broadcast %96 : vector<1x128xf32> to vector<16x128xf32>
    %98 = arith.mulf %93, %97 : vector<16x128xf32>
    %99 = arith.addf %92, %98 : vector<16x128xf32>
    %100 = vector.extract_strided_slice %71 {offsets = [0, 32], sizes = [16, 128], strides = [1, 1]} : vector<16x192xf32> to vector<16x128xf32>
    %101 = vector.extract_strided_slice %5 {offsets = [13, 0], sizes = [1, 128], strides = [1, 1]} : vector<81x128xf32> to vector<1x128xf32>
    %102 = vector.shape_cast %101 : vector<1x128xf32> to vector<128xf32>
    %103 = vector.shape_cast %102 : vector<128xf32> to vector<1x128xf32>
    %104 = vector.broadcast %103 : vector<1x128xf32> to vector<16x128xf32>
    %105 = arith.mulf %100, %104 : vector<16x128xf32>
    %106 = arith.addf %99, %105 : vector<16x128xf32>
    %107 = vector.extract_strided_slice %71 {offsets = [0, 40], sizes = [16, 128], strides = [1, 1]} : vector<16x192xf32> to vector<16x128xf32>
    %108 = vector.extract_strided_slice %5 {offsets = [14, 0], sizes = [1, 128], strides = [1, 1]} : vector<81x128xf32> to vector<1x128xf32>
    %109 = vector.shape_cast %108 : vector<1x128xf32> to vector<128xf32>
    %110 = vector.shape_cast %109 : vector<128xf32> to vector<1x128xf32>
    %111 = vector.broadcast %110 : vector<1x128xf32> to vector<16x128xf32>
    %112 = arith.mulf %107, %111 : vector<16x128xf32>
    %113 = arith.addf %106, %112 : vector<16x128xf32>
    %114 = vector.extract_strided_slice %71 {offsets = [0, 48], sizes = [16, 128], strides = [1, 1]} : vector<16x192xf32> to vector<16x128xf32>
    %115 = vector.extract_strided_slice %5 {offsets = [15, 0], sizes = [1, 128], strides = [1, 1]} : vector<81x128xf32> to vector<1x128xf32>
    %116 = vector.shape_cast %115 : vector<1x128xf32> to vector<128xf32>
    %117 = vector.shape_cast %116 : vector<128xf32> to vector<1x128xf32>
    %118 = vector.broadcast %117 : vector<1x128xf32> to vector<16x128xf32>
    %119 = arith.mulf %114, %118 : vector<16x128xf32>
    %120 = arith.addf %113, %119 : vector<16x128xf32>
    %121 = vector.extract_strided_slice %71 {offsets = [0, 56], sizes = [16, 128], strides = [1, 1]} : vector<16x192xf32> to vector<16x128xf32>
    %122 = vector.extract_strided_slice %5 {offsets = [16, 0], sizes = [1, 128], strides = [1, 1]} : vector<81x128xf32> to vector<1x128xf32>
    %123 = vector.shape_cast %122 : vector<1x128xf32> to vector<128xf32>
    %124 = vector.shape_cast %123 : vector<128xf32> to vector<1x128xf32>
    %125 = vector.broadcast %124 : vector<1x128xf32> to vector<16x128xf32>
    %126 = arith.mulf %121, %125 : vector<16x128xf32>
    %127 = arith.addf %120, %126 : vector<16x128xf32>
    %128 = vector.extract_strided_slice %71 {offsets = [0, 64], sizes = [16, 128], strides = [1, 1]} : vector<16x192xf32> to vector<16x128xf32>
    %129 = vector.extract_strided_slice %5 {offsets = [17, 0], sizes = [1, 128], strides = [1, 1]} : vector<81x128xf32> to vector<1x128xf32>
    %130 = vector.shape_cast %129 : vector<1x128xf32> to vector<128xf32>
    %131 = vector.shape_cast %130 : vector<128xf32> to vector<1x128xf32>
    %132 = vector.broadcast %131 : vector<1x128xf32> to vector<16x128xf32>
    %133 = arith.mulf %128, %132 : vector<16x128xf32>
    %134 = arith.addf %127, %133 : vector<16x128xf32>
    %c2 = arith.constant 2 : index
    %c0_10 = arith.constant 0 : index
    %135 = vector.load %arg6[%c2, %c0_10] : memref<24x192xf32, #tpu.memory_space<vmem>>, vector<16x192xf32>
    %136 = vector.extract_strided_slice %135 {offsets = [0, 0], sizes = [16, 128], strides = [1, 1]} : vector<16x192xf32> to vector<16x128xf32>
    %137 = vector.extract_strided_slice %5 {offsets = [18, 0], sizes = [1, 128], strides = [1, 1]} : vector<81x128xf32> to vector<1x128xf32>
    %138 = vector.shape_cast %137 : vector<1x128xf32> to vector<128xf32>
    %139 = vector.shape_cast %138 : vector<128xf32> to vector<1x128xf32>
    %140 = vector.broadcast %139 : vector<1x128xf32> to vector<16x128xf32>
    %141 = arith.mulf %136, %140 : vector<16x128xf32>
    %142 = arith.addf %134, %141 : vector<16x128xf32>
    %143 = vector.extract_strided_slice %135 {offsets = [0, 8], sizes = [16, 128], strides = [1, 1]} : vector<16x192xf32> to vector<16x128xf32>
    %144 = vector.extract_strided_slice %5 {offsets = [19, 0], sizes = [1, 128], strides = [1, 1]} : vector<81x128xf32> to vector<1x128xf32>
    %145 = vector.shape_cast %144 : vector<1x128xf32> to vector<128xf32>
    %146 = vector.shape_cast %145 : vector<128xf32> to vector<1x128xf32>
    %147 = vector.broadcast %146 : vector<1x128xf32> to vector<16x128xf32>
    %148 = arith.mulf %143, %147 : vector<16x128xf32>
    %149 = arith.addf %142, %148 : vector<16x128xf32>
    %150 = vector.extract_strided_slice %135 {offsets = [0, 16], sizes = [16, 128], strides = [1, 1]} : vector<16x192xf32> to vector<16x128xf32>
    %151 = vector.extract_strided_slice %5 {offsets = [20, 0], sizes = [1, 128], strides = [1, 1]} : vector<81x128xf32> to vector<1x128xf32>
    %152 = vector.shape_cast %151 : vector<1x128xf32> to vector<128xf32>
    %153 = vector.shape_cast %152 : vector<128xf32> to vector<1x128xf32>
    %154 = vector.broadcast %153 : vector<1x128xf32> to vector<16x128xf32>
    %155 = arith.mulf %150, %154 : vector<16x128xf32>
    %156 = arith.addf %149, %155 : vector<16x128xf32>
    %157 = vector.extract_strided_slice %135 {offsets = [0, 24], sizes = [16, 128], strides = [1, 1]} : vector<16x192xf32> to vector<16x128xf32>
    %158 = vector.extract_strided_slice %5 {offsets = [21, 0], sizes = [1, 128], strides = [1, 1]} : vector<81x128xf32> to vector<1x128xf32>
    %159 = vector.shape_cast %158 : vector<1x128xf32> to vector<128xf32>
    %160 = vector.shape_cast %159 : vector<128xf32> to vector<1x128xf32>
    %161 = vector.broadcast %160 : vector<1x128xf32> to vector<16x128xf32>
    %162 = arith.mulf %157, %161 : vector<16x128xf32>
    %163 = arith.addf %156, %162 : vector<16x128xf32>
    %164 = vector.extract_strided_slice %135 {offsets = [0, 32], sizes = [16, 128], strides = [1, 1]} : vector<16x192xf32> to vector<16x128xf32>
    %165 = vector.extract_strided_slice %5 {offsets = [22, 0], sizes = [1, 128], strides = [1, 1]} : vector<81x128xf32> to vector<1x128xf32>
    %166 = vector.shape_cast %165 : vector<1x128xf32> to vector<128xf32>
    %167 = vector.shape_cast %166 : vector<128xf32> to vector<1x128xf32>
    %168 = vector.broadcast %167 : vector<1x128xf32> to vector<16x128xf32>
    %169 = arith.mulf %164, %168 : vector<16x128xf32>
    %170 = arith.addf %163, %169 : vector<16x128xf32>
    %171 = vector.extract_strided_slice %135 {offsets = [0, 40], sizes = [16, 128], strides = [1, 1]} : vector<16x192xf32> to vector<16x128xf32>
    %172 = vector.extract_strided_slice %5 {offsets = [23, 0], sizes = [1, 128], strides = [1, 1]} : vector<81x128xf32> to vector<1x128xf32>
    %173 = vector.shape_cast %172 : vector<1x128xf32> to vector<128xf32>
    %174 = vector.shape_cast %173 : vector<128xf32> to vector<1x128xf32>
    %175 = vector.broadcast %174 : vector<1x128xf32> to vector<16x128xf32>
    %176 = arith.mulf %171, %175 : vector<16x128xf32>
    %177 = arith.addf %170, %176 : vector<16x128xf32>
    %178 = vector.extract_strided_slice %135 {offsets = [0, 48], sizes = [16, 128], strides = [1, 1]} : vector<16x192xf32> to vector<16x128xf32>
    %179 = vector.extract_strided_slice %5 {offsets = [24, 0], sizes = [1, 128], strides = [1, 1]} : vector<81x128xf32> to vector<1x128xf32>
    %180 = vector.shape_cast %179 : vector<1x128xf32> to vector<128xf32>
    %181 = vector.shape_cast %180 : vector<128xf32> to vector<1x128xf32>
    %182 = vector.broadcast %181 : vector<1x128xf32> to vector<16x128xf32>
    %183 = arith.mulf %178, %182 : vector<16x128xf32>
    %184 = arith.addf %177, %183 : vector<16x128xf32>
    %185 = vector.extract_strided_slice %135 {offsets = [0, 56], sizes = [16, 128], strides = [1, 1]} : vector<16x192xf32> to vector<16x128xf32>
    %186 = vector.extract_strided_slice %5 {offsets = [25, 0], sizes = [1, 128], strides = [1, 1]} : vector<81x128xf32> to vector<1x128xf32>
    %187 = vector.shape_cast %186 : vector<1x128xf32> to vector<128xf32>
    %188 = vector.shape_cast %187 : vector<128xf32> to vector<1x128xf32>
    %189 = vector.broadcast %188 : vector<1x128xf32> to vector<16x128xf32>
    %190 = arith.mulf %185, %189 : vector<16x128xf32>
    %191 = arith.addf %184, %190 : vector<16x128xf32>
    %192 = vector.extract_strided_slice %135 {offsets = [0, 64], sizes = [16, 128], strides = [1, 1]} : vector<16x192xf32> to vector<16x128xf32>
    %193 = vector.extract_strided_slice %5 {offsets = [26, 0], sizes = [1, 128], strides = [1, 1]} : vector<81x128xf32> to vector<1x128xf32>
    %194 = vector.shape_cast %193 : vector<1x128xf32> to vector<128xf32>
    %195 = vector.shape_cast %194 : vector<128xf32> to vector<1x128xf32>
    %196 = vector.broadcast %195 : vector<1x128xf32> to vector<16x128xf32>
    %197 = arith.mulf %192, %196 : vector<16x128xf32>
    %198 = arith.addf %191, %197 : vector<16x128xf32>
    %c3 = arith.constant 3 : index
    %c0_11 = arith.constant 0 : index
    %199 = vector.load %arg6[%c3, %c0_11] : memref<24x192xf32, #tpu.memory_space<vmem>>, vector<16x192xf32>
    %200 = vector.extract_strided_slice %199 {offsets = [0, 0], sizes = [16, 128], strides = [1, 1]} : vector<16x192xf32> to vector<16x128xf32>
    %201 = vector.extract_strided_slice %5 {offsets = [27, 0], sizes = [1, 128], strides = [1, 1]} : vector<81x128xf32> to vector<1x128xf32>
    %202 = vector.shape_cast %201 : vector<1x128xf32> to vector<128xf32>
    %203 = vector.shape_cast %202 : vector<128xf32> to vector<1x128xf32>
    %204 = vector.broadcast %203 : vector<1x128xf32> to vector<16x128xf32>
    %205 = arith.mulf %200, %204 : vector<16x128xf32>
    %206 = arith.addf %198, %205 : vector<16x128xf32>
    %207 = vector.extract_strided_slice %199 {offsets = [0, 8], sizes = [16, 128], strides = [1, 1]} : vector<16x192xf32> to vector<16x128xf32>
    %208 = vector.extract_strided_slice %5 {offsets = [28, 0], sizes = [1, 128], strides = [1, 1]} : vector<81x128xf32> to vector<1x128xf32>
    %209 = vector.shape_cast %208 : vector<1x128xf32> to vector<128xf32>
    %210 = vector.shape_cast %209 : vector<128xf32> to vector<1x128xf32>
    %211 = vector.broadcast %210 : vector<1x128xf32> to vector<16x128xf32>
    %212 = arith.mulf %207, %211 : vector<16x128xf32>
    %213 = arith.addf %206, %212 : vector<16x128xf32>
    %214 = vector.extract_strided_slice %199 {offsets = [0, 16], sizes = [16, 128], strides = [1, 1]} : vector<16x192xf32> to vector<16x128xf32>
    %215 = vector.extract_strided_slice %5 {offsets = [29, 0], sizes = [1, 128], strides = [1, 1]} : vector<81x128xf32> to vector<1x128xf32>
    %216 = vector.shape_cast %215 : vector<1x128xf32> to vector<128xf32>
    %217 = vector.shape_cast %216 : vector<128xf32> to vector<1x128xf32>
    %218 = vector.broadcast %217 : vector<1x128xf32> to vector<16x128xf32>
    %219 = arith.mulf %214, %218 : vector<16x128xf32>
    %220 = arith.addf %213, %219 : vector<16x128xf32>
    %221 = vector.extract_strided_slice %199 {offsets = [0, 24], sizes = [16, 128], strides = [1, 1]} : vector<16x192xf32> to vector<16x128xf32>
    %222 = vector.extract_strided_slice %5 {offsets = [30, 0], sizes = [1, 128], strides = [1, 1]} : vector<81x128xf32> to vector<1x128xf32>
    %223 = vector.shape_cast %222 : vector<1x128xf32> to vector<128xf32>
    %224 = vector.shape_cast %223 : vector<128xf32> to vector<1x128xf32>
    %225 = vector.broadcast %224 : vector<1x128xf32> to vector<16x128xf32>
    %226 = arith.mulf %221, %225 : vector<16x128xf32>
    %227 = arith.addf %220, %226 : vector<16x128xf32>
    %228 = vector.extract_strided_slice %199 {offsets = [0, 32], sizes = [16, 128], strides = [1, 1]} : vector<16x192xf32> to vector<16x128xf32>
    %229 = vector.extract_strided_slice %5 {offsets = [31, 0], sizes = [1, 128], strides = [1, 1]} : vector<81x128xf32> to vector<1x128xf32>
    %230 = vector.shape_cast %229 : vector<1x128xf32> to vector<128xf32>
    %231 = vector.shape_cast %230 : vector<128xf32> to vector<1x128xf32>
    %232 = vector.broadcast %231 : vector<1x128xf32> to vector<16x128xf32>
    %233 = arith.mulf %228, %232 : vector<16x128xf32>
    %234 = arith.addf %227, %233 : vector<16x128xf32>
    %235 = vector.extract_strided_slice %199 {offsets = [0, 40], sizes = [16, 128], strides = [1, 1]} : vector<16x192xf32> to vector<16x128xf32>
    %236 = vector.extract_strided_slice %5 {offsets = [32, 0], sizes = [1, 128], strides = [1, 1]} : vector<81x128xf32> to vector<1x128xf32>
    %237 = vector.shape_cast %236 : vector<1x128xf32> to vector<128xf32>
    %238 = vector.shape_cast %237 : vector<128xf32> to vector<1x128xf32>
    %239 = vector.broadcast %238 : vector<1x128xf32> to vector<16x128xf32>
    %240 = arith.mulf %235, %239 : vector<16x128xf32>
    %241 = arith.addf %234, %240 : vector<16x128xf32>
    %242 = vector.extract_strided_slice %199 {offsets = [0, 48], sizes = [16, 128], strides = [1, 1]} : vector<16x192xf32> to vector<16x128xf32>
    %243 = vector.extract_strided_slice %5 {offsets = [33, 0], sizes = [1, 128], strides = [1, 1]} : vector<81x128xf32> to vector<1x128xf32>
    %244 = vector.shape_cast %243 : vector<1x128xf32> to vector<128xf32>
    %245 = vector.shape_cast %244 : vector<128xf32> to vector<1x128xf32>
    %246 = vector.broadcast %245 : vector<1x128xf32> to vector<16x128xf32>
    %247 = arith.mulf %242, %246 : vector<16x128xf32>
    %248 = arith.addf %241, %247 : vector<16x128xf32>
    %249 = vector.extract_strided_slice %199 {offsets = [0, 56], sizes = [16, 128], strides = [1, 1]} : vector<16x192xf32> to vector<16x128xf32>
    %250 = vector.extract_strided_slice %5 {offsets = [34, 0], sizes = [1, 128], strides = [1, 1]} : vector<81x128xf32> to vector<1x128xf32>
    %251 = vector.shape_cast %250 : vector<1x128xf32> to vector<128xf32>
    %252 = vector.shape_cast %251 : vector<128xf32> to vector<1x128xf32>
    %253 = vector.broadcast %252 : vector<1x128xf32> to vector<16x128xf32>
    %254 = arith.mulf %249, %253 : vector<16x128xf32>
    %255 = arith.addf %248, %254 : vector<16x128xf32>
    %256 = vector.extract_strided_slice %199 {offsets = [0, 64], sizes = [16, 128], strides = [1, 1]} : vector<16x192xf32> to vector<16x128xf32>
    %257 = vector.extract_strided_slice %5 {offsets = [35, 0], sizes = [1, 128], strides = [1, 1]} : vector<81x128xf32> to vector<1x128xf32>
    %258 = vector.shape_cast %257 : vector<1x128xf32> to vector<128xf32>
    %259 = vector.shape_cast %258 : vector<128xf32> to vector<1x128xf32>
    %260 = vector.broadcast %259 : vector<1x128xf32> to vector<16x128xf32>
    %261 = arith.mulf %256, %260 : vector<16x128xf32>
    %262 = arith.addf %255, %261 : vector<16x128xf32>
    %c4_12 = arith.constant 4 : index
    %c0_13 = arith.constant 0 : index
    %263 = vector.load %arg6[%c4_12, %c0_13] : memref<24x192xf32, #tpu.memory_space<vmem>>, vector<16x192xf32>
    %264 = vector.extract_strided_slice %263 {offsets = [0, 0], sizes = [16, 128], strides = [1, 1]} : vector<16x192xf32> to vector<16x128xf32>
    %265 = vector.extract_strided_slice %5 {offsets = [36, 0], sizes = [1, 128], strides = [1, 1]} : vector<81x128xf32> to vector<1x128xf32>
    %266 = vector.shape_cast %265 : vector<1x128xf32> to vector<128xf32>
    %267 = vector.shape_cast %266 : vector<128xf32> to vector<1x128xf32>
    %268 = vector.broadcast %267 : vector<1x128xf32> to vector<16x128xf32>
    %269 = arith.mulf %264, %268 : vector<16x128xf32>
    %270 = arith.addf %262, %269 : vector<16x128xf32>
    %271 = vector.extract_strided_slice %263 {offsets = [0, 8], sizes = [16, 128], strides = [1, 1]} : vector<16x192xf32> to vector<16x128xf32>
    %272 = vector.extract_strided_slice %5 {offsets = [37, 0], sizes = [1, 128], strides = [1, 1]} : vector<81x128xf32> to vector<1x128xf32>
    %273 = vector.shape_cast %272 : vector<1x128xf32> to vector<128xf32>
    %274 = vector.shape_cast %273 : vector<128xf32> to vector<1x128xf32>
    %275 = vector.broadcast %274 : vector<1x128xf32> to vector<16x128xf32>
    %276 = arith.mulf %271, %275 : vector<16x128xf32>
    %277 = arith.addf %270, %276 : vector<16x128xf32>
    %278 = vector.extract_strided_slice %263 {offsets = [0, 16], sizes = [16, 128], strides = [1, 1]} : vector<16x192xf32> to vector<16x128xf32>
    %279 = vector.extract_strided_slice %5 {offsets = [38, 0], sizes = [1, 128], strides = [1, 1]} : vector<81x128xf32> to vector<1x128xf32>
    %280 = vector.shape_cast %279 : vector<1x128xf32> to vector<128xf32>
    %281 = vector.shape_cast %280 : vector<128xf32> to vector<1x128xf32>
    %282 = vector.broadcast %281 : vector<1x128xf32> to vector<16x128xf32>
    %283 = arith.mulf %278, %282 : vector<16x128xf32>
    %284 = arith.addf %277, %283 : vector<16x128xf32>
    %285 = vector.extract_strided_slice %263 {offsets = [0, 24], sizes = [16, 128], strides = [1, 1]} : vector<16x192xf32> to vector<16x128xf32>
    %286 = vector.extract_strided_slice %5 {offsets = [39, 0], sizes = [1, 128], strides = [1, 1]} : vector<81x128xf32> to vector<1x128xf32>
    %287 = vector.shape_cast %286 : vector<1x128xf32> to vector<128xf32>
    %288 = vector.shape_cast %287 : vector<128xf32> to vector<1x128xf32>
    %289 = vector.broadcast %288 : vector<1x128xf32> to vector<16x128xf32>
    %290 = arith.mulf %285, %289 : vector<16x128xf32>
    %291 = arith.addf %284, %290 : vector<16x128xf32>
    %292 = vector.extract_strided_slice %263 {offsets = [0, 32], sizes = [16, 128], strides = [1, 1]} : vector<16x192xf32> to vector<16x128xf32>
    %293 = vector.extract_strided_slice %5 {offsets = [40, 0], sizes = [1, 128], strides = [1, 1]} : vector<81x128xf32> to vector<1x128xf32>
    %294 = vector.shape_cast %293 : vector<1x128xf32> to vector<128xf32>
    %295 = vector.shape_cast %294 : vector<128xf32> to vector<1x128xf32>
    %296 = vector.broadcast %295 : vector<1x128xf32> to vector<16x128xf32>
    %297 = arith.mulf %292, %296 : vector<16x128xf32>
    %298 = arith.addf %291, %297 : vector<16x128xf32>
    %299 = vector.extract_strided_slice %263 {offsets = [0, 40], sizes = [16, 128], strides = [1, 1]} : vector<16x192xf32> to vector<16x128xf32>
    %300 = vector.extract_strided_slice %5 {offsets = [41, 0], sizes = [1, 128], strides = [1, 1]} : vector<81x128xf32> to vector<1x128xf32>
    %301 = vector.shape_cast %300 : vector<1x128xf32> to vector<128xf32>
    %302 = vector.shape_cast %301 : vector<128xf32> to vector<1x128xf32>
    %303 = vector.broadcast %302 : vector<1x128xf32> to vector<16x128xf32>
    %304 = arith.mulf %299, %303 : vector<16x128xf32>
    %305 = arith.addf %298, %304 : vector<16x128xf32>
    %306 = vector.extract_strided_slice %263 {offsets = [0, 48], sizes = [16, 128], strides = [1, 1]} : vector<16x192xf32> to vector<16x128xf32>
    %307 = vector.extract_strided_slice %5 {offsets = [42, 0], sizes = [1, 128], strides = [1, 1]} : vector<81x128xf32> to vector<1x128xf32>
    %308 = vector.shape_cast %307 : vector<1x128xf32> to vector<128xf32>
    %309 = vector.shape_cast %308 : vector<128xf32> to vector<1x128xf32>
    %310 = vector.broadcast %309 : vector<1x128xf32> to vector<16x128xf32>
    %311 = arith.mulf %306, %310 : vector<16x128xf32>
    %312 = arith.addf %305, %311 : vector<16x128xf32>
    %313 = vector.extract_strided_slice %263 {offsets = [0, 56], sizes = [16, 128], strides = [1, 1]} : vector<16x192xf32> to vector<16x128xf32>
    %314 = vector.extract_strided_slice %5 {offsets = [43, 0], sizes = [1, 128], strides = [1, 1]} : vector<81x128xf32> to vector<1x128xf32>
    %315 = vector.shape_cast %314 : vector<1x128xf32> to vector<128xf32>
    %316 = vector.shape_cast %315 : vector<128xf32> to vector<1x128xf32>
    %317 = vector.broadcast %316 : vector<1x128xf32> to vector<16x128xf32>
    %318 = arith.mulf %313, %317 : vector<16x128xf32>
    %319 = arith.addf %312, %318 : vector<16x128xf32>
    %320 = vector.extract_strided_slice %263 {offsets = [0, 64], sizes = [16, 128], strides = [1, 1]} : vector<16x192xf32> to vector<16x128xf32>
    %321 = vector.extract_strided_slice %5 {offsets = [44, 0], sizes = [1, 128], strides = [1, 1]} : vector<81x128xf32> to vector<1x128xf32>
    %322 = vector.shape_cast %321 : vector<1x128xf32> to vector<128xf32>
    %323 = vector.shape_cast %322 : vector<128xf32> to vector<1x128xf32>
    %324 = vector.broadcast %323 : vector<1x128xf32> to vector<16x128xf32>
    %325 = arith.mulf %320, %324 : vector<16x128xf32>
    %326 = arith.addf %319, %325 : vector<16x128xf32>
    %c5 = arith.constant 5 : index
    %c0_14 = arith.constant 0 : index
    %327 = vector.load %arg6[%c5, %c0_14] : memref<24x192xf32, #tpu.memory_space<vmem>>, vector<16x192xf32>
    %328 = vector.extract_strided_slice %327 {offsets = [0, 0], sizes = [16, 128], strides = [1, 1]} : vector<16x192xf32> to vector<16x128xf32>
    %329 = vector.extract_strided_slice %5 {offsets = [45, 0], sizes = [1, 128], strides = [1, 1]} : vector<81x128xf32> to vector<1x128xf32>
    %330 = vector.shape_cast %329 : vector<1x128xf32> to vector<128xf32>
    %331 = vector.shape_cast %330 : vector<128xf32> to vector<1x128xf32>
    %332 = vector.broadcast %331 : vector<1x128xf32> to vector<16x128xf32>
    %333 = arith.mulf %328, %332 : vector<16x128xf32>
    %334 = arith.addf %326, %333 : vector<16x128xf32>
    %335 = vector.extract_strided_slice %327 {offsets = [0, 8], sizes = [16, 128], strides = [1, 1]} : vector<16x192xf32> to vector<16x128xf32>
    %336 = vector.extract_strided_slice %5 {offsets = [46, 0], sizes = [1, 128], strides = [1, 1]} : vector<81x128xf32> to vector<1x128xf32>
    %337 = vector.shape_cast %336 : vector<1x128xf32> to vector<128xf32>
    %338 = vector.shape_cast %337 : vector<128xf32> to vector<1x128xf32>
    %339 = vector.broadcast %338 : vector<1x128xf32> to vector<16x128xf32>
    %340 = arith.mulf %335, %339 : vector<16x128xf32>
    %341 = arith.addf %334, %340 : vector<16x128xf32>
    %342 = vector.extract_strided_slice %327 {offsets = [0, 16], sizes = [16, 128], strides = [1, 1]} : vector<16x192xf32> to vector<16x128xf32>
    %343 = vector.extract_strided_slice %5 {offsets = [47, 0], sizes = [1, 128], strides = [1, 1]} : vector<81x128xf32> to vector<1x128xf32>
    %344 = vector.shape_cast %343 : vector<1x128xf32> to vector<128xf32>
    %345 = vector.shape_cast %344 : vector<128xf32> to vector<1x128xf32>
    %346 = vector.broadcast %345 : vector<1x128xf32> to vector<16x128xf32>
    %347 = arith.mulf %342, %346 : vector<16x128xf32>
    %348 = arith.addf %341, %347 : vector<16x128xf32>
    %349 = vector.extract_strided_slice %327 {offsets = [0, 24], sizes = [16, 128], strides = [1, 1]} : vector<16x192xf32> to vector<16x128xf32>
    %350 = vector.extract_strided_slice %5 {offsets = [48, 0], sizes = [1, 128], strides = [1, 1]} : vector<81x128xf32> to vector<1x128xf32>
    %351 = vector.shape_cast %350 : vector<1x128xf32> to vector<128xf32>
    %352 = vector.shape_cast %351 : vector<128xf32> to vector<1x128xf32>
    %353 = vector.broadcast %352 : vector<1x128xf32> to vector<16x128xf32>
    %354 = arith.mulf %349, %353 : vector<16x128xf32>
    %355 = arith.addf %348, %354 : vector<16x128xf32>
    %356 = vector.extract_strided_slice %327 {offsets = [0, 32], sizes = [16, 128], strides = [1, 1]} : vector<16x192xf32> to vector<16x128xf32>
    %357 = vector.extract_strided_slice %5 {offsets = [49, 0], sizes = [1, 128], strides = [1, 1]} : vector<81x128xf32> to vector<1x128xf32>
    %358 = vector.shape_cast %357 : vector<1x128xf32> to vector<128xf32>
    %359 = vector.shape_cast %358 : vector<128xf32> to vector<1x128xf32>
    %360 = vector.broadcast %359 : vector<1x128xf32> to vector<16x128xf32>
    %361 = arith.mulf %356, %360 : vector<16x128xf32>
    %362 = arith.addf %355, %361 : vector<16x128xf32>
    %363 = vector.extract_strided_slice %327 {offsets = [0, 40], sizes = [16, 128], strides = [1, 1]} : vector<16x192xf32> to vector<16x128xf32>
    %364 = vector.extract_strided_slice %5 {offsets = [50, 0], sizes = [1, 128], strides = [1, 1]} : vector<81x128xf32> to vector<1x128xf32>
    %365 = vector.shape_cast %364 : vector<1x128xf32> to vector<128xf32>
    %366 = vector.shape_cast %365 : vector<128xf32> to vector<1x128xf32>
    %367 = vector.broadcast %366 : vector<1x128xf32> to vector<16x128xf32>
    %368 = arith.mulf %363, %367 : vector<16x128xf32>
    %369 = arith.addf %362, %368 : vector<16x128xf32>
    %370 = vector.extract_strided_slice %327 {offsets = [0, 48], sizes = [16, 128], strides = [1, 1]} : vector<16x192xf32> to vector<16x128xf32>
    %371 = vector.extract_strided_slice %5 {offsets = [51, 0], sizes = [1, 128], strides = [1, 1]} : vector<81x128xf32> to vector<1x128xf32>
    %372 = vector.shape_cast %371 : vector<1x128xf32> to vector<128xf32>
    %373 = vector.shape_cast %372 : vector<128xf32> to vector<1x128xf32>
    %374 = vector.broadcast %373 : vector<1x128xf32> to vector<16x128xf32>
    %375 = arith.mulf %370, %374 : vector<16x128xf32>
    %376 = arith.addf %369, %375 : vector<16x128xf32>
    %377 = vector.extract_strided_slice %327 {offsets = [0, 56], sizes = [16, 128], strides = [1, 1]} : vector<16x192xf32> to vector<16x128xf32>
    %378 = vector.extract_strided_slice %5 {offsets = [52, 0], sizes = [1, 128], strides = [1, 1]} : vector<81x128xf32> to vector<1x128xf32>
    %379 = vector.shape_cast %378 : vector<1x128xf32> to vector<128xf32>
    %380 = vector.shape_cast %379 : vector<128xf32> to vector<1x128xf32>
    %381 = vector.broadcast %380 : vector<1x128xf32> to vector<16x128xf32>
    %382 = arith.mulf %377, %381 : vector<16x128xf32>
    %383 = arith.addf %376, %382 : vector<16x128xf32>
    %384 = vector.extract_strided_slice %327 {offsets = [0, 64], sizes = [16, 128], strides = [1, 1]} : vector<16x192xf32> to vector<16x128xf32>
    %385 = vector.extract_strided_slice %5 {offsets = [53, 0], sizes = [1, 128], strides = [1, 1]} : vector<81x128xf32> to vector<1x128xf32>
    %386 = vector.shape_cast %385 : vector<1x128xf32> to vector<128xf32>
    %387 = vector.shape_cast %386 : vector<128xf32> to vector<1x128xf32>
    %388 = vector.broadcast %387 : vector<1x128xf32> to vector<16x128xf32>
    %389 = arith.mulf %384, %388 : vector<16x128xf32>
    %390 = arith.addf %383, %389 : vector<16x128xf32>
    %c6 = arith.constant 6 : index
    %c0_15 = arith.constant 0 : index
    %391 = vector.load %arg6[%c6, %c0_15] : memref<24x192xf32, #tpu.memory_space<vmem>>, vector<16x192xf32>
    %392 = vector.extract_strided_slice %391 {offsets = [0, 0], sizes = [16, 128], strides = [1, 1]} : vector<16x192xf32> to vector<16x128xf32>
    %393 = vector.extract_strided_slice %5 {offsets = [54, 0], sizes = [1, 128], strides = [1, 1]} : vector<81x128xf32> to vector<1x128xf32>
    %394 = vector.shape_cast %393 : vector<1x128xf32> to vector<128xf32>
    %395 = vector.shape_cast %394 : vector<128xf32> to vector<1x128xf32>
    %396 = vector.broadcast %395 : vector<1x128xf32> to vector<16x128xf32>
    %397 = arith.mulf %392, %396 : vector<16x128xf32>
    %398 = arith.addf %390, %397 : vector<16x128xf32>
    %399 = vector.extract_strided_slice %391 {offsets = [0, 8], sizes = [16, 128], strides = [1, 1]} : vector<16x192xf32> to vector<16x128xf32>
    %400 = vector.extract_strided_slice %5 {offsets = [55, 0], sizes = [1, 128], strides = [1, 1]} : vector<81x128xf32> to vector<1x128xf32>
    %401 = vector.shape_cast %400 : vector<1x128xf32> to vector<128xf32>
    %402 = vector.shape_cast %401 : vector<128xf32> to vector<1x128xf32>
    %403 = vector.broadcast %402 : vector<1x128xf32> to vector<16x128xf32>
    %404 = arith.mulf %399, %403 : vector<16x128xf32>
    %405 = arith.addf %398, %404 : vector<16x128xf32>
    %406 = vector.extract_strided_slice %391 {offsets = [0, 16], sizes = [16, 128], strides = [1, 1]} : vector<16x192xf32> to vector<16x128xf32>
    %407 = vector.extract_strided_slice %5 {offsets = [56, 0], sizes = [1, 128], strides = [1, 1]} : vector<81x128xf32> to vector<1x128xf32>
    %408 = vector.shape_cast %407 : vector<1x128xf32> to vector<128xf32>
    %409 = vector.shape_cast %408 : vector<128xf32> to vector<1x128xf32>
    %410 = vector.broadcast %409 : vector<1x128xf32> to vector<16x128xf32>
    %411 = arith.mulf %406, %410 : vector<16x128xf32>
    %412 = arith.addf %405, %411 : vector<16x128xf32>
    %413 = vector.extract_strided_slice %391 {offsets = [0, 24], sizes = [16, 128], strides = [1, 1]} : vector<16x192xf32> to vector<16x128xf32>
    %414 = vector.extract_strided_slice %5 {offsets = [57, 0], sizes = [1, 128], strides = [1, 1]} : vector<81x128xf32> to vector<1x128xf32>
    %415 = vector.shape_cast %414 : vector<1x128xf32> to vector<128xf32>
    %416 = vector.shape_cast %415 : vector<128xf32> to vector<1x128xf32>
    %417 = vector.broadcast %416 : vector<1x128xf32> to vector<16x128xf32>
    %418 = arith.mulf %413, %417 : vector<16x128xf32>
    %419 = arith.addf %412, %418 : vector<16x128xf32>
    %420 = vector.extract_strided_slice %391 {offsets = [0, 32], sizes = [16, 128], strides = [1, 1]} : vector<16x192xf32> to vector<16x128xf32>
    %421 = vector.extract_strided_slice %5 {offsets = [58, 0], sizes = [1, 128], strides = [1, 1]} : vector<81x128xf32> to vector<1x128xf32>
    %422 = vector.shape_cast %421 : vector<1x128xf32> to vector<128xf32>
    %423 = vector.shape_cast %422 : vector<128xf32> to vector<1x128xf32>
    %424 = vector.broadcast %423 : vector<1x128xf32> to vector<16x128xf32>
    %425 = arith.mulf %420, %424 : vector<16x128xf32>
    %426 = arith.addf %419, %425 : vector<16x128xf32>
    %427 = vector.extract_strided_slice %391 {offsets = [0, 40], sizes = [16, 128], strides = [1, 1]} : vector<16x192xf32> to vector<16x128xf32>
    %428 = vector.extract_strided_slice %5 {offsets = [59, 0], sizes = [1, 128], strides = [1, 1]} : vector<81x128xf32> to vector<1x128xf32>
    %429 = vector.shape_cast %428 : vector<1x128xf32> to vector<128xf32>
    %430 = vector.shape_cast %429 : vector<128xf32> to vector<1x128xf32>
    %431 = vector.broadcast %430 : vector<1x128xf32> to vector<16x128xf32>
    %432 = arith.mulf %427, %431 : vector<16x128xf32>
    %433 = arith.addf %426, %432 : vector<16x128xf32>
    %434 = vector.extract_strided_slice %391 {offsets = [0, 48], sizes = [16, 128], strides = [1, 1]} : vector<16x192xf32> to vector<16x128xf32>
    %435 = vector.extract_strided_slice %5 {offsets = [60, 0], sizes = [1, 128], strides = [1, 1]} : vector<81x128xf32> to vector<1x128xf32>
    %436 = vector.shape_cast %435 : vector<1x128xf32> to vector<128xf32>
    %437 = vector.shape_cast %436 : vector<128xf32> to vector<1x128xf32>
    %438 = vector.broadcast %437 : vector<1x128xf32> to vector<16x128xf32>
    %439 = arith.mulf %434, %438 : vector<16x128xf32>
    %440 = arith.addf %433, %439 : vector<16x128xf32>
    %441 = vector.extract_strided_slice %391 {offsets = [0, 56], sizes = [16, 128], strides = [1, 1]} : vector<16x192xf32> to vector<16x128xf32>
    %442 = vector.extract_strided_slice %5 {offsets = [61, 0], sizes = [1, 128], strides = [1, 1]} : vector<81x128xf32> to vector<1x128xf32>
    %443 = vector.shape_cast %442 : vector<1x128xf32> to vector<128xf32>
    %444 = vector.shape_cast %443 : vector<128xf32> to vector<1x128xf32>
    %445 = vector.broadcast %444 : vector<1x128xf32> to vector<16x128xf32>
    %446 = arith.mulf %441, %445 : vector<16x128xf32>
    %447 = arith.addf %440, %446 : vector<16x128xf32>
    %448 = vector.extract_strided_slice %391 {offsets = [0, 64], sizes = [16, 128], strides = [1, 1]} : vector<16x192xf32> to vector<16x128xf32>
    %449 = vector.extract_strided_slice %5 {offsets = [62, 0], sizes = [1, 128], strides = [1, 1]} : vector<81x128xf32> to vector<1x128xf32>
    %450 = vector.shape_cast %449 : vector<1x128xf32> to vector<128xf32>
    %451 = vector.shape_cast %450 : vector<128xf32> to vector<1x128xf32>
    %452 = vector.broadcast %451 : vector<1x128xf32> to vector<16x128xf32>
    %453 = arith.mulf %448, %452 : vector<16x128xf32>
    %454 = arith.addf %447, %453 : vector<16x128xf32>
    %c7 = arith.constant 7 : index
    %c0_16 = arith.constant 0 : index
    %455 = vector.load %arg6[%c7, %c0_16] : memref<24x192xf32, #tpu.memory_space<vmem>>, vector<16x192xf32>
    %456 = vector.extract_strided_slice %455 {offsets = [0, 0], sizes = [16, 128], strides = [1, 1]} : vector<16x192xf32> to vector<16x128xf32>
    %457 = vector.extract_strided_slice %5 {offsets = [63, 0], sizes = [1, 128], strides = [1, 1]} : vector<81x128xf32> to vector<1x128xf32>
    %458 = vector.shape_cast %457 : vector<1x128xf32> to vector<128xf32>
    %459 = vector.shape_cast %458 : vector<128xf32> to vector<1x128xf32>
    %460 = vector.broadcast %459 : vector<1x128xf32> to vector<16x128xf32>
    %461 = arith.mulf %456, %460 : vector<16x128xf32>
    %462 = arith.addf %454, %461 : vector<16x128xf32>
    %463 = vector.extract_strided_slice %455 {offsets = [0, 8], sizes = [16, 128], strides = [1, 1]} : vector<16x192xf32> to vector<16x128xf32>
    %464 = vector.extract_strided_slice %5 {offsets = [64, 0], sizes = [1, 128], strides = [1, 1]} : vector<81x128xf32> to vector<1x128xf32>
    %465 = vector.shape_cast %464 : vector<1x128xf32> to vector<128xf32>
    %466 = vector.shape_cast %465 : vector<128xf32> to vector<1x128xf32>
    %467 = vector.broadcast %466 : vector<1x128xf32> to vector<16x128xf32>
    %468 = arith.mulf %463, %467 : vector<16x128xf32>
    %469 = arith.addf %462, %468 : vector<16x128xf32>
    %470 = vector.extract_strided_slice %455 {offsets = [0, 16], sizes = [16, 128], strides = [1, 1]} : vector<16x192xf32> to vector<16x128xf32>
    %471 = vector.extract_strided_slice %5 {offsets = [65, 0], sizes = [1, 128], strides = [1, 1]} : vector<81x128xf32> to vector<1x128xf32>
    %472 = vector.shape_cast %471 : vector<1x128xf32> to vector<128xf32>
    %473 = vector.shape_cast %472 : vector<128xf32> to vector<1x128xf32>
    %474 = vector.broadcast %473 : vector<1x128xf32> to vector<16x128xf32>
    %475 = arith.mulf %470, %474 : vector<16x128xf32>
    %476 = arith.addf %469, %475 : vector<16x128xf32>
    %477 = vector.extract_strided_slice %455 {offsets = [0, 24], sizes = [16, 128], strides = [1, 1]} : vector<16x192xf32> to vector<16x128xf32>
    %478 = vector.extract_strided_slice %5 {offsets = [66, 0], sizes = [1, 128], strides = [1, 1]} : vector<81x128xf32> to vector<1x128xf32>
    %479 = vector.shape_cast %478 : vector<1x128xf32> to vector<128xf32>
    %480 = vector.shape_cast %479 : vector<128xf32> to vector<1x128xf32>
    %481 = vector.broadcast %480 : vector<1x128xf32> to vector<16x128xf32>
    %482 = arith.mulf %477, %481 : vector<16x128xf32>
    %483 = arith.addf %476, %482 : vector<16x128xf32>
    %484 = vector.extract_strided_slice %455 {offsets = [0, 32], sizes = [16, 128], strides = [1, 1]} : vector<16x192xf32> to vector<16x128xf32>
    %485 = vector.extract_strided_slice %5 {offsets = [67, 0], sizes = [1, 128], strides = [1, 1]} : vector<81x128xf32> to vector<1x128xf32>
    %486 = vector.shape_cast %485 : vector<1x128xf32> to vector<128xf32>
    %487 = vector.shape_cast %486 : vector<128xf32> to vector<1x128xf32>
    %488 = vector.broadcast %487 : vector<1x128xf32> to vector<16x128xf32>
    %489 = arith.mulf %484, %488 : vector<16x128xf32>
    %490 = arith.addf %483, %489 : vector<16x128xf32>
    %491 = vector.extract_strided_slice %455 {offsets = [0, 40], sizes = [16, 128], strides = [1, 1]} : vector<16x192xf32> to vector<16x128xf32>
    %492 = vector.extract_strided_slice %5 {offsets = [68, 0], sizes = [1, 128], strides = [1, 1]} : vector<81x128xf32> to vector<1x128xf32>
    %493 = vector.shape_cast %492 : vector<1x128xf32> to vector<128xf32>
    %494 = vector.shape_cast %493 : vector<128xf32> to vector<1x128xf32>
    %495 = vector.broadcast %494 : vector<1x128xf32> to vector<16x128xf32>
    %496 = arith.mulf %491, %495 : vector<16x128xf32>
    %497 = arith.addf %490, %496 : vector<16x128xf32>
    %498 = vector.extract_strided_slice %455 {offsets = [0, 48], sizes = [16, 128], strides = [1, 1]} : vector<16x192xf32> to vector<16x128xf32>
    %499 = vector.extract_strided_slice %5 {offsets = [69, 0], sizes = [1, 128], strides = [1, 1]} : vector<81x128xf32> to vector<1x128xf32>
    %500 = vector.shape_cast %499 : vector<1x128xf32> to vector<128xf32>
    %501 = vector.shape_cast %500 : vector<128xf32> to vector<1x128xf32>
    %502 = vector.broadcast %501 : vector<1x128xf32> to vector<16x128xf32>
    %503 = arith.mulf %498, %502 : vector<16x128xf32>
    %504 = arith.addf %497, %503 : vector<16x128xf32>
    %505 = vector.extract_strided_slice %455 {offsets = [0, 56], sizes = [16, 128], strides = [1, 1]} : vector<16x192xf32> to vector<16x128xf32>
    %506 = vector.extract_strided_slice %5 {offsets = [70, 0], sizes = [1, 128], strides = [1, 1]} : vector<81x128xf32> to vector<1x128xf32>
    %507 = vector.shape_cast %506 : vector<1x128xf32> to vector<128xf32>
    %508 = vector.shape_cast %507 : vector<128xf32> to vector<1x128xf32>
    %509 = vector.broadcast %508 : vector<1x128xf32> to vector<16x128xf32>
    %510 = arith.mulf %505, %509 : vector<16x128xf32>
    %511 = arith.addf %504, %510 : vector<16x128xf32>
    %512 = vector.extract_strided_slice %455 {offsets = [0, 64], sizes = [16, 128], strides = [1, 1]} : vector<16x192xf32> to vector<16x128xf32>
    %513 = vector.extract_strided_slice %5 {offsets = [71, 0], sizes = [1, 128], strides = [1, 1]} : vector<81x128xf32> to vector<1x128xf32>
    %514 = vector.shape_cast %513 : vector<1x128xf32> to vector<128xf32>
    %515 = vector.shape_cast %514 : vector<128xf32> to vector<1x128xf32>
    %516 = vector.broadcast %515 : vector<1x128xf32> to vector<16x128xf32>
    %517 = arith.mulf %512, %516 : vector<16x128xf32>
    %518 = arith.addf %511, %517 : vector<16x128xf32>
    %c8 = arith.constant 8 : index
    %c0_17 = arith.constant 0 : index
    %519 = vector.load %arg6[%c8, %c0_17] : memref<24x192xf32, #tpu.memory_space<vmem>>, vector<16x192xf32>
    %520 = vector.extract_strided_slice %519 {offsets = [0, 0], sizes = [16, 128], strides = [1, 1]} : vector<16x192xf32> to vector<16x128xf32>
    %521 = vector.extract_strided_slice %5 {offsets = [72, 0], sizes = [1, 128], strides = [1, 1]} : vector<81x128xf32> to vector<1x128xf32>
    %522 = vector.shape_cast %521 : vector<1x128xf32> to vector<128xf32>
    %523 = vector.shape_cast %522 : vector<128xf32> to vector<1x128xf32>
    %524 = vector.broadcast %523 : vector<1x128xf32> to vector<16x128xf32>
    %525 = arith.mulf %520, %524 : vector<16x128xf32>
    %526 = arith.addf %518, %525 : vector<16x128xf32>
    %527 = vector.extract_strided_slice %519 {offsets = [0, 8], sizes = [16, 128], strides = [1, 1]} : vector<16x192xf32> to vector<16x128xf32>
    %528 = vector.extract_strided_slice %5 {offsets = [73, 0], sizes = [1, 128], strides = [1, 1]} : vector<81x128xf32> to vector<1x128xf32>
    %529 = vector.shape_cast %528 : vector<1x128xf32> to vector<128xf32>
    %530 = vector.shape_cast %529 : vector<128xf32> to vector<1x128xf32>
    %531 = vector.broadcast %530 : vector<1x128xf32> to vector<16x128xf32>
    %532 = arith.mulf %527, %531 : vector<16x128xf32>
    %533 = arith.addf %526, %532 : vector<16x128xf32>
    %534 = vector.extract_strided_slice %519 {offsets = [0, 16], sizes = [16, 128], strides = [1, 1]} : vector<16x192xf32> to vector<16x128xf32>
    %535 = vector.extract_strided_slice %5 {offsets = [74, 0], sizes = [1, 128], strides = [1, 1]} : vector<81x128xf32> to vector<1x128xf32>
    %536 = vector.shape_cast %535 : vector<1x128xf32> to vector<128xf32>
    %537 = vector.shape_cast %536 : vector<128xf32> to vector<1x128xf32>
    %538 = vector.broadcast %537 : vector<1x128xf32> to vector<16x128xf32>
    %539 = arith.mulf %534, %538 : vector<16x128xf32>
    %540 = arith.addf %533, %539 : vector<16x128xf32>
    %541 = vector.extract_strided_slice %519 {offsets = [0, 24], sizes = [16, 128], strides = [1, 1]} : vector<16x192xf32> to vector<16x128xf32>
    %542 = vector.extract_strided_slice %5 {offsets = [75, 0], sizes = [1, 128], strides = [1, 1]} : vector<81x128xf32> to vector<1x128xf32>
    %543 = vector.shape_cast %542 : vector<1x128xf32> to vector<128xf32>
    %544 = vector.shape_cast %543 : vector<128xf32> to vector<1x128xf32>
    %545 = vector.broadcast %544 : vector<1x128xf32> to vector<16x128xf32>
    %546 = arith.mulf %541, %545 : vector<16x128xf32>
    %547 = arith.addf %540, %546 : vector<16x128xf32>
    %548 = vector.extract_strided_slice %519 {offsets = [0, 32], sizes = [16, 128], strides = [1, 1]} : vector<16x192xf32> to vector<16x128xf32>
    %549 = vector.extract_strided_slice %5 {offsets = [76, 0], sizes = [1, 128], strides = [1, 1]} : vector<81x128xf32> to vector<1x128xf32>
    %550 = vector.shape_cast %549 : vector<1x128xf32> to vector<128xf32>
    %551 = vector.shape_cast %550 : vector<128xf32> to vector<1x128xf32>
    %552 = vector.broadcast %551 : vector<1x128xf32> to vector<16x128xf32>
    %553 = arith.mulf %548, %552 : vector<16x128xf32>
    %554 = arith.addf %547, %553 : vector<16x128xf32>
    %555 = vector.extract_strided_slice %519 {offsets = [0, 40], sizes = [16, 128], strides = [1, 1]} : vector<16x192xf32> to vector<16x128xf32>
    %556 = vector.extract_strided_slice %5 {offsets = [77, 0], sizes = [1, 128], strides = [1, 1]} : vector<81x128xf32> to vector<1x128xf32>
    %557 = vector.shape_cast %556 : vector<1x128xf32> to vector<128xf32>
    %558 = vector.shape_cast %557 : vector<128xf32> to vector<1x128xf32>
    %559 = vector.broadcast %558 : vector<1x128xf32> to vector<16x128xf32>
    %560 = arith.mulf %555, %559 : vector<16x128xf32>
    %561 = arith.addf %554, %560 : vector<16x128xf32>
    %562 = vector.extract_strided_slice %519 {offsets = [0, 48], sizes = [16, 128], strides = [1, 1]} : vector<16x192xf32> to vector<16x128xf32>
    %563 = vector.extract_strided_slice %5 {offsets = [78, 0], sizes = [1, 128], strides = [1, 1]} : vector<81x128xf32> to vector<1x128xf32>
    %564 = vector.shape_cast %563 : vector<1x128xf32> to vector<128xf32>
    %565 = vector.shape_cast %564 : vector<128xf32> to vector<1x128xf32>
    %566 = vector.broadcast %565 : vector<1x128xf32> to vector<16x128xf32>
    %567 = arith.mulf %562, %566 : vector<16x128xf32>
    %568 = arith.addf %561, %567 : vector<16x128xf32>
    %569 = vector.extract_strided_slice %519 {offsets = [0, 56], sizes = [16, 128], strides = [1, 1]} : vector<16x192xf32> to vector<16x128xf32>
    %570 = vector.extract_strided_slice %5 {offsets = [79, 0], sizes = [1, 128], strides = [1, 1]} : vector<81x128xf32> to vector<1x128xf32>
    %571 = vector.shape_cast %570 : vector<1x128xf32> to vector<128xf32>
    %572 = vector.shape_cast %571 : vector<128xf32> to vector<1x128xf32>
    %573 = vector.broadcast %572 : vector<1x128xf32> to vector<16x128xf32>
    %574 = arith.mulf %569, %573 : vector<16x128xf32>
    %575 = arith.addf %568, %574 : vector<16x128xf32>
    %576 = vector.extract_strided_slice %519 {offsets = [0, 64], sizes = [16, 128], strides = [1, 1]} : vector<16x192xf32> to vector<16x128xf32>
    %577 = vector.extract_strided_slice %5 {offsets = [80, 0], sizes = [1, 128], strides = [1, 1]} : vector<81x128xf32> to vector<1x128xf32>
    %578 = vector.shape_cast %577 : vector<1x128xf32> to vector<128xf32>
    %579 = vector.shape_cast %578 : vector<128xf32> to vector<1x128xf32>
    %580 = vector.broadcast %579 : vector<1x128xf32> to vector<16x128xf32>
    %581 = arith.mulf %576, %580 : vector<16x128xf32>
    %582 = arith.addf %575, %581 : vector<16x128xf32>
    %c0_18 = arith.constant 0 : index
    %c0_19 = arith.constant 0 : index
    %583 = vector.load %arg3[%c0_18, %c0_19] : memref<1x128xf32, #tpu.memory_space<vmem>>, vector<1x128xf32>
    %584 = vector.shape_cast %583 : vector<1x128xf32> to vector<128xf32>
    %585 = vector.shape_cast %584 : vector<128xf32> to vector<1x128xf32>
    %586 = vector.broadcast %585 : vector<1x128xf32> to vector<16x128xf32>
    %587 = arith.mulf %582, %586 : vector<16x128xf32>
    %c0_20 = arith.constant 0 : index
    %c0_21 = arith.constant 0 : index
    %588 = vector.load %arg4[%c0_20, %c0_21] : memref<1x128xf32, #tpu.memory_space<vmem>>, vector<1x128xf32>
    %589 = vector.shape_cast %588 : vector<1x128xf32> to vector<128xf32>
    %590 = vector.shape_cast %589 : vector<128xf32> to vector<1x128xf32>
    %591 = vector.broadcast %590 : vector<1x128xf32> to vector<16x128xf32>
    %592 = arith.addf %587, %591 : vector<16x128xf32>
    %cst_22 = arith.constant 0.000000e+00 : f32
    %cst_23 = arith.constant 6.000000e+00 : f32
    %593 = vector.broadcast %cst_22 : f32 to vector<16x128xf32>
    %594 = arith.maximumf %593, %592 : vector<16x128xf32>
    %595 = vector.broadcast %cst_23 : f32 to vector<16x128xf32>
    %596 = arith.minimumf %595, %594 : vector<16x128xf32>
    %c0_24 = arith.constant 0 : index
    %c0_25 = arith.constant 0 : index
    %c0_26 = arith.constant 0 : index
    %597 = vector.load %arg5[%c0_24, %c0_25, %c0_26] : memref<1x16x128xf32, #tpu.memory_space<vmem>>, vector<1x16x128xf32>
    %598 = vector.shape_cast %597 : vector<1x16x128xf32> to vector<16x128xf32>
    %599 = vector.shape_cast %596 : vector<16x128xf32> to vector<1x16x128xf32>
    tpu.vector_store %arg5[%c0_24, %c0_25, %c0_26], %599 {strides = array<i32>} : memref<1x16x128xf32, #tpu.memory_space<vmem>>, vector<1x16x128xf32>,
    return
  }
  func.func @transform_0(%arg0: i32) -> (i32, i32, i32) {
    %c0_i32 = arith.constant 0 : i32
    %c0_i32_0 = arith.constant 0 : i32
    %c0_i32_1 = arith.constant 0 : i32
    return %arg0, %c0_i32, %c0_i32_0 : i32, i32, i32
  }
  func.func @transform_1(%arg0: i32) -> (i32, i32) {
    %c0_i32 = arith.constant 0 : i32
    %c0_i32_0 = arith.constant 0 : i32
    %c0_i32_1 = arith.constant 0 : i32
    return %c0_i32, %c0_i32_0 : i32, i32
  }
  func.func @transform_2(%arg0: i32) -> (i32, i32) {
    %c0_i32 = arith.constant 0 : i32
    %c0_i32_0 = arith.constant 0 : i32
    %c0_i32_1 = arith.constant 0 : i32
    return %c0_i32, %c0_i32_0 : i32, i32
  }
  func.func @transform_3(%arg0: i32) -> (i32, i32) {
    %c0_i32 = arith.constant 0 : i32
    %c0_i32_0 = arith.constant 0 : i32
    %c0_i32_1 = arith.constant 0 : i32
    return %c0_i32, %c0_i32_0 : i32, i32
  }
  func.func @transform_4(%arg0: i32) -> (i32, i32, i32) {
    %c0_i32 = arith.constant 0 : i32
    %c0_i32_0 = arith.constant 0 : i32
    %c0_i32_1 = arith.constant 0 : i32
    return %arg0, %c0_i32, %c0_i32_0 : i32, i32, i32
  }
}

</mosaic_0001>

<llo_original>
// kernel: mpd_block_forward.1
$region0: #{mpd_block_forward.1}
  #allocation0 [shape = 'u32[]', space=smem, size = 0x4, offset = 0x4, fixed_abs, tag = 'smem constant byte address 0x4 - core index']
  #allocation1 [shape = 'u32[72,128]{1,0:T(1,128)}', space=vmem, size = 0x9000, scoped, tag = 'internal scratch']
  #allocation2 [shape = 'f32[24,192]{1,0:T(8,128)}', space=vmem, size = 0x6000, scoped, tag = 'scratch operand']
  %s0 = inlined_call_operand.vmem [shape: f32[2,16,128], index: 0, kind: input, shape index: {}]
  %s1 = inlined_call_operand.vmem [shape: f32[81,128], index: 1, kind: input, shape index: {}]
  %s2 = inlined_call_operand.vmem [shape: f32[1,128], index: 2, kind: input, shape index: {}]
  %s3 = inlined_call_operand.vmem [shape: f32[1,128], index: 3, kind: input, shape index: {}]
  %s4 = inlined_call_operand.vmem [shape: f32[2,16,128], index: 4, kind: output, shape index: {}]
  %s5 = sld [smem:[#allocation0]]
  $region49: #{mpd_block_forward.1} parent=0
    _
  %s7 = ssub.s32 1, %s5
  %s8 = scalar_select 0, %s7, %s5
  loop: start=0, step=1, limit=4
  $region2: #{mpd_block_forward.1} parent=0 // loop_pre_header
    _
  $region3: #{mpd_block_forward.1} parent=0 // loop_header
    %s10 = sphi 0, %s14
    %p11 = scmp.ge.s32.totalorder %s10, 4
    %s20 = sphi 0, %s22
    %s23 = sphi 0, %s20
    %s24 = sphi 0, %s23
    %s40 = sphi 0, %s24
    %s44 = sphi 0, %s44
    %s46 = sphi 0, %s44
    %s47 = sphi 0, %s46
    %s61 = sphi 0, %s47
    %s65 = sphi 0, %s65
    %s67 = sphi 0, %s65
    %s68 = sphi 0, %s67
    %s82 = sphi 0, %s68
    %s86 = sphi 0, %s86
    %s88 = sphi 0, %s86
    %s89 = sphi 0, %s88
    %s103 = sphi 0, %s89
    %s109 = sphi 0, %s111
    %s112 = sphi 0, %s109
    %s113 = sphi 0, %s112
    %s129 = sphi 0, %s113
  $region4: #{mpd_block_forward.1} parent=0 // loop_header_branch
    %13 = sbr.rel (%p11) target = $region8
  $region5: #{mpd_block_forward.1} parent=0 // loop_body
    %s15 = ssub.s32 %s10, 1
    %s16 = ssub.s32 %s10, 2
    %s17 = sadd.s32 %s10, 1
    %s18 = ssub.s32 %s10, %s17
    %p19 = scmp.eq.s32.totalorder %s18, 0
    %s21 = sadd.s32 %s20, 1
    %s22 = scalar_select %p19, %s20, %s21
    %p25 = pneg %p19
    %p26 = scmp.eq.s32.totalorder %s10, 1
    %p27 = por %p25, %p26
    %p28 = scmp.ne.s32.totalorder %s20, %s23
    %p29 = scmp.eq.s32.totalorder %s10, 0
    %p30 = por %p28, %p29
    %p31 = scmp.ne.s32.totalorder %s20, %s23
    %p32 = scmp.eq.s32.totalorder %s15, 1
    %p33 = por %p31, %p32
    %p34 = scmp.ne.s32.totalorder %s23, %s24
    %p35 = scmp.eq.s32.totalorder %s15, 0
    %p36 = por %p34, %p35
    %p37 = scmp.ne.s32.totalorder %s23, %s24
    %p38 = scmp.eq.s32.totalorder %s16, 1
    %p39 = por %p37, %p38
    %p41 = scmp.ne.s32.totalorder %s24, %s40
    %p42 = scmp.eq.s32.totalorder %s16, 0
    %p43 = por %p41, %p42
    %s45 = sadd.s32 %s44, 1
    %p48 = scmp.eq.s32.totalorder %s10, 1
    %p49 = scmp.ne.s32.totalorder %s44, %s46
    %p50 = scmp.eq.s32.totalorder %s10, 0
    %p51 = por %p49, %p50
    %p52 = scmp.ne.s32.totalorder %s44, %s46
    %p53 = scmp.eq.s32.totalorder %s15, 1
    %p54 = por %p52, %p53
    %p55 = scmp.ne.s32.totalorder %s46, %s47
    %p56 = scmp.eq.s32.totalorder %s15, 0
    %p57 = por %p55, %p56
    %p58 = scmp.ne.s32.totalorder %s46, %s47
    %p59 = scmp.eq.s32.totalorder %s16, 1
    %p60 = por %p58, %p59
    %p62 = scmp.ne.s32.totalorder %s47, %s61
    %p63 = scmp.eq.s32.totalorder %s16, 0
    %p64 = por %p62, %p63
    %s66 = sadd.s32 %s65, 1
    %p69 = scmp.eq.s32.totalorder %s10, 1
    %p70 = scmp.ne.s32.totalorder %s65, %s67
    %p71 = scmp.eq.s32.totalorder %s10, 0
    %p72 = por %p70, %p71
    %p73 = scmp.ne.s32.totalorder %s65, %s67
    %p74 = scmp.eq.s32.totalorder %s15, 1
    %p75 = por %p73, %p74
    %p76 = scmp.ne.s32.totalorder %s67, %s68
    %p77 = scmp.eq.s32.totalorder %s15, 0
    %p78 = por %p76, %p77
    %p79 = scmp.ne.s32.totalorder %s67, %s68
    %p80 = scmp.eq.s32.totalorder %s16, 1
    %p81 = por %p79, %p80
    %p83 = scmp.ne.s32.totalorder %s68, %s82
    %p84 = scmp.eq.s32.totalorder %s16, 0
    %p85 = por %p83, %p84
    %s87 = sadd.s32 %s86, 1
    %p90 = scmp.eq.s32.totalorder %s10, 1
    %p91 = scmp.ne.s32.totalorder %s86, %s88
    %p92 = scmp.eq.s32.totalorder %s10, 0
    %p93 = por %p91, %p92
    %p94 = scmp.ne.s32.totalorder %s86, %s88
    %p95 = scmp.eq.s32.totalorder %s15, 1
    %p96 = por %p94, %p95
    %p97 = scmp.ne.s32.totalorder %s88, %s89
    %p98 = scmp.eq.s32.totalorder %s15, 0
    %p99 = por %p97, %p98
    %p100 = scmp.ne.s32.totalorder %s88, %s89
    %p101 = scmp.eq.s32.totalorder %s16, 1
    %p102 = por %p100, %p101
    %p104 = scmp.ne.s32.totalorder %s89, %s103
    %p105 = scmp.eq.s32.totalorder %s16, 0
    %p106 = por %p104, %p105
    %s107 = ssub.s32 %s10, %s17
    %p108 = scmp.eq.s32.totalorder %s107, 0
    %s110 = sadd.s32 %s109, 1
    %s111 = scalar_select %p108, %s109, %s110
    %p114 = pneg %p108
    %p115 = scmp.eq.s32.totalorder %s10, 1
    %p116 = por %p114, %p115
    %p117 = scmp.ne.s32.totalorder %s109, %s112
    %p118 = scmp.eq.s32.totalorder %s10, 0
    %p119 = por %p117, %p118
    %p120 = scmp.ne.s32.totalorder %s109, %s112
    %p121 = scmp.eq.s32.totalorder %s15, 1
    %p122 = por %p120, %p121
    %p123 = scmp.ne.s32.totalorder %s112, %s113
    %p124 = scmp.eq.s32.totalorder %s15, 0
    %p125 = por %p123, %p124
    %p126 = scmp.ne.s32.totalorder %s112, %s113
    %p127 = scmp.eq.s32.totalorder %s16, 1
    %p128 = por %p126, %p127
    %p130 = scmp.ne.s32.totalorder %s113, %s129
    %p131 = scmp.eq.s32.totalorder %s16, 0
    %p132 = por %p130, %p131
    %p133 = scmp.le.s32.totalorder 1, %s10
    %p134 = scmp.lt.s32.totalorder %s10, 3
    %p135 = pnand %p133, %p134
    %p136 = pneg %p135
    // Predicated region
    $region9: #{mpd_block_forward.1} parent=5 // pred_check
      _
    $region10: #{mpd_block_forward.1} parent=5 // pred_check_branch
      %138 = sbr.rel (%p135) target = $region12
    $region11: #{mpd_block_forward.1} parent=5 // pred_region
      %s139 = ssub.s32 %s10, 1
      // Predicated region
      $region13: #{mpd_block_forward.1} parent=11 // pred_check
        %p140 = pneg %p57
      $region14: #{mpd_block_forward.1} parent=11 // pred_check_branch
        %142 = sbr.rel (%p140) target = $region16
      $region15: #{mpd_block_forward.1} parent=11 // pred_region
        _
      $region16: #{mpd_block_forward.1} parent=11 // pred_fallthru
        _
      // Predicated region
      $region17: #{mpd_block_forward.1} parent=11 // pred_check
        %p143 = pneg %p78
      $region18: #{mpd_block_forward.1} parent=11 // pred_check_branch
        %145 = sbr.rel (%p143) target = $region20
      $region19: #{mpd_block_forward.1} parent=11 // pred_region
        _
      $region20: #{mpd_block_forward.1} parent=11 // pred_fallthru
        _
      // Predicated region
      $region21: #{mpd_block_forward.1} parent=11 // pred_check
        %p146 = pneg %p99
      $region22: #{mpd_block_forward.1} parent=11 // pred_check_branch
        %148 = sbr.rel (%p146) target = $region24
      $region23: #{mpd_block_forward.1} parent=11 // pred_region
        _
      $region24: #{mpd_block_forward.1} parent=11 // pred_fallthru
        _
    $region12: #{mpd_block_forward.1} parent=5 // pred_fallthru
      _
    %p149 = scmp.lt.s32.totalorder %s10, 2
    // Predicated region
    $region25: #{mpd_block_forward.1} parent=5 // pred_check
      %p150 = pneg %p149
    $region26: #{mpd_block_forward.1} parent=5 // pred_check_branch
      %152 = sbr.rel (%p150) target = $region28
    $region27: #{mpd_block_forward.1} parent=5 // pred_region
      // Predicated region
      $region29: #{mpd_block_forward.1} parent=27 // pred_check
        %p153 = pneg %p30
      $region30: #{mpd_block_forward.1} parent=27 // pred_check_branch
        %155 = sbr.rel (%p153) target = $region32
      $region31: #{mpd_block_forward.1} parent=27 // pred_region
        %p156 = scmp.lt.s32.totalorder %s10, 1
        %s157 = scalar_select %p156, %s10, 1
        %s158 = smul.addr %s157, 2
        %s159 = smul.addr %s158, 8
        %s160 = scalar_lea.vmem %s0, %s159
      $region32: #{mpd_block_forward.1} parent=27 // pred_fallthru
        _
    $region28: #{mpd_block_forward.1} parent=5 // pred_fallthru
      _
    %p161 = scmp.le.s32.totalorder 1, %s10
    %p162 = scmp.lt.s32.totalorder %s10, 3
    %p163 = pnand %p161, %p162
    %p164 = pneg %p163
    // Predicated region
    $region33: #{mpd_block_forward.1} parent=5 // pred_check
      _
    $region34: #{mpd_block_forward.1} parent=5 // pred_check_branch
      %166 = sbr.rel (%p163) target = $region36
    $region35: #{mpd_block_forward.1} parent=5 // pred_region
      %s167 = ssub.s32 %s10, 1
      %p168 = scmp.lt.s32.totalorder %s15, 1
      %s169 = scalar_select %p168, %s15, 1
      %s170 = smul.addr %s169, 2
      %s171 = smul.addr %s170, 8
      %s172 = scalar_lea.vmem %s0, %s171
      %p173 = pneg %p36
      %p174 = pneg %p33
      %p175 = pneg %p57
      %p176 = pneg %p54
      %p177 = pneg %p78
      %p178 = pneg %p75
      %p179 = pneg %p99
      %p180 = pneg %p96
      %p181 = pneg %p125
      %p182 = pneg %p122
      %p183 = scmp.lt.s32.totalorder %s15, 1
      %s184 = scalar_select %p183, %s15, 1
      %s185 = smul.addr %s184, 2
      %s186 = smul.addr %s185, 8
      %s187 = scalar_lea.vmem %s4, %s186
      %p188 = scmp.lt.s32.totalorder %s15, 1
      %s189 = scalar_select %p188, %s15, 1
      %s190 = smul.addr %s189, 2
      %s191 = smul.addr %s190, 8
      %s192 = scalar_lea.vmem %s0, %s191
      %p193 = scmp.lt.s32.totalorder %s15, 1
      %s194 = scalar_select %p193, %s15, 1
      %s195 = smul.addr %s194, 2
      %s196 = smul.addr %s195, 8
      %s197 = scalar_lea.vmem %s4, %s196
      %198 = vst [vmem:[#allocation2] sm:$0xff] 0.0
      %vm199 = vcmask 523264
      %200 = vst.msk [vmem:[#allocation2 + $0x8] sm:$0xff] %vm199, 0.0
      %201 = vst [vmem:[#allocation2 + $0x10] sm:$0xff] 0.0
      %202 = vst.msk [vmem:[#allocation2 + $0x18] sm:$0xff] %vm199, 0.0
      %203 = vst [vmem:[#allocation2 + $0x20] sm:$0xff] 0.0
      %204 = vst.msk [vmem:[#allocation2 + $0x28] sm:$0xff] %vm199, 0.0
      %v205 = vld [vmem:[%s192] sm:$0xff]
      %v206 = vld [vmem:[%s192 + $0x8] sm:$0xff]
      %vm209 = vcmask 1043456
      %v210 = vrot.slane %v205, 4
      %v211 = vrot.slane %v206, 4
      %v212 = vsel %vm209, %v210, %v211
      %213 = vrot.lane.b32.xlu0 %v210, 32
      %v214 = vpop.permute.xlu0 %213
      %215 = vrot.lane.b32.xlu0 %v212, 32
      %v216 = vpop.permute.xlu0 %215
      %217 = vrot.lane.b32.xlu0 %v211, 32
      %v218 = vpop.permute.xlu0 %217
      %vm222 = vcmask 1047812
      %223 = vst.msk [vmem:[#allocation2] sm:$0xf0] %vm222, %v214
      %vm224 = vcmask 261124
      %225 = vst.msk [vmem:[#allocation2 + $0x8] sm:$0xf0] %vm224, %v214
      %vm226 = vcmask 1047808
      %227 = vst.msk [vmem:[#allocation2 + $0x10] sm:$0xff] %vm226, %v216
      %vm228 = vcmask 261120
      %229 = vst.msk [vmem:[#allocation2 + $0x18] sm:$0xff] %vm228, %v216
      %vm230 = vcmask 1043712
      %231 = vst.msk [vmem:[#allocation2 + $0x20] sm:$0xf] %vm230, %v218
      %vm232 = vcmask 257024
      %233 = vst.msk [vmem:[#allocation2 + $0x28] sm:$0xf] %vm232, %v218
      %v234 = vld [vmem:[%s1] sm:$0xff]
      %v235 = vld [vmem:[%s1 + $0x8] sm:$0xff]
      %v236 = vld [vmem:[%s1 + $0x10] sm:$0xff]
      %v237 = vld [vmem:[%s1 + $0x18] sm:$0xff]
      %v238 = vld [vmem:[%s1 + $0x20] sm:$0xff]
      %v239 = vld [vmem:[%s1 + $0x28] sm:$0xff]
      %v240 = vld [vmem:[%s1 + $0x30] sm:$0xff]
      %v241 = vld [vmem:[%s1 + $0x38] sm:$0xff]
      %v242 = vld [vmem:[%s1 + $0x40] sm:$0xff]
      %v243 = vld [vmem:[%s1 + $0x48] sm:$0xff]
      %v244 = vld [vmem:[%s1 + $0x50] sm:$0x1]
      %v245 = vld [vmem:[#allocation2] sm:$0xff]
      %v246 = vld [vmem:[#allocation2 + $0x8] sm:$0xff]
      %v247 = vld [vmem:[#allocation2 + $0x10] sm:$0xff]
      %v248 = vld [vmem:[#allocation2 + $0x18] sm:$0xff]
      %v249 = vperm.slane %v234, 0
      %v250 = vmul.f32 %v245, %v249
      %v251 = vmul.f32 %v247, %v249
      %v252 = vadd.f32 %v250, 0.0
      %v253 = vadd.f32 %v251, 0.0
      %v254 = vperm.slane %v234, 1
      %256 = vrot.lane.b32.xlu0 %v254, 8
      %v257 = vpop.permute.xlu0 %256
      %v259 = vmul.f32 %v245, %v257
      %v260 = vmul.f32 %v246, %v257
      %v261 = vmul.f32 %v247, %v257
      %v262 = vmul.f32 %v248, %v257
      %267 = vrot.lane.b32.xlu0 %v259, 120
      %v268 = vpop.permute.xlu0 %267
      %269 = vrot.lane.b32.xlu0 %v260, 120
      %v270 = vpop.permute.xlu0 %269
      %271 = vrot.lane.b32.xlu0 %v261, 120
      %v272 = vpop.permute.xlu0 %271
      %273 = vrot.lane.b32.xlu0 %v262, 120
      %v274 = vpop.permute.xlu0 %273
      %vm275 = vcmask 982016
      %v276 = vsel %vm275, %v268, %v270
      %v277 = vsel %vm275, %v272, %v274
      %v280 = vadd.f32 %v252, %v276
      %v281 = vadd.f32 %v253, %v277
      %v282 = vperm.slane %v234, 2
      %284 = vrot.lane.b32.xlu0 %v282, 16
      %v285 = vpop.permute.xlu0 %284
      %v287 = vmul.f32 %v245, %v285
      %v288 = vmul.f32 %v246, %v285
      %v289 = vmul.f32 %v247, %v285
      %v290 = vmul.f32 %v248, %v285
      %295 = vrot.lane.b32.xlu0 %v287, 112
      %v296 = vpop.permute.xlu0 %295
      %297 = vrot.lane.b32.xlu0 %v288, 112
      %v298 = vpop.permute.xlu0 %297
      %299 = vrot.lane.b32.xlu0 %v289, 112
      %v300 = vpop.permute.xlu0 %299
      %301 = vrot.lane.b32.xlu0 %v290, 112
      %v302 = vpop.permute.xlu0 %301
      %vm303 = vcmask 916480
      %v304 = vsel %vm303, %v296, %v298
      %v305 = vsel %vm303, %v300, %v302
      %v308 = vadd.f32 %v280, %v304
      %v309 = vadd.f32 %v281, %v305
      %v310 = vperm.slane %v234, 3
      %312 = vrot.lane.b32.xlu0 %v310, 24
      %v313 = vpop.permute.xlu0 %312
      %v315 = vmul.f32 %v245, %v313
      %v316 = vmul.f32 %v246, %v313
      %v317 = vmul.f32 %v247, %v313
      %v318 = vmul.f32 %v248, %v313
      %323 = vrot.lane.b32.xlu0 %v315, 104
      %v324 = vpop.permute.xlu0 %323
      %325 = vrot.lane.b32.xlu0 %v316, 104
      %v326 = vpop.permute.xlu0 %325
      %327 = vrot.lane.b32.xlu0 %v317, 104
      %v328 = vpop.permute.xlu0 %327
      %329 = vrot.lane.b32.xlu0 %v318, 104
      %v330 = vpop.permute.xlu0 %329
      %vm331 = vcmask 850944
      %v332 = vsel %vm331, %v324, %v326
      %v333 = vsel %vm331, %v328, %v330
      %v336 = vadd.f32 %v308, %v332
      %v337 = vadd.f32 %v309, %v333
      %v338 = vperm.slane %v234, 4
      %340 = vrot.lane.b32.xlu0 %v338, 32
      %v341 = vpop.permute.xlu0 %340
      %v343 = vmul.f32 %v245, %v341
      %v344 = vmul.f32 %v246, %v341
      %v345 = vmul.f32 %v247, %v341
      %v346 = vmul.f32 %v248, %v341
      %351 = vrot.lane.b32.xlu0 %v343, 96
      %v352 = vpop.permute.xlu0 %351
      %353 = vrot.lane.b32.xlu0 %v344, 96
      %v354 = vpop.permute.xlu0 %353
      %355 = vrot.lane.b32.xlu0 %v345, 96
      %v356 = vpop.permute.xlu0 %355
      %357 = vrot.lane.b32.xlu0 %v346, 96
      %v358 = vpop.permute.xlu0 %357
      %vm359 = vcmask 785408
      %v360 = vsel %vm359, %v352, %v354
      %v361 = vsel %vm359, %v356, %v358
      %v364 = vadd.f32 %v336, %v360
      %v365 = vadd.f32 %v337, %v361
      %v366 = vperm.slane %v234, 5
      %368 = vrot.lane.b32.xlu0 %v366, 40
      %v369 = vpop.permute.xlu0 %368
      %v371 = vmul.f32 %v245, %v369
      %v372 = vmul.f32 %v246, %v369
      %v373 = vmul.f32 %v247, %v369
      %v374 = vmul.f32 %v248, %v369
      %379 = vrot.lane.b32.xlu0 %v371, 88
      %v380 = vpop.permute.xlu0 %379
      %381 = vrot.lane.b32.xlu0 %v372, 88
      %v382 = vpop.permute.xlu0 %381
      %383 = vrot.lane.b32.xlu0 %v373, 88
      %v384 = vpop.permute.xlu0 %383
      %385 = vrot.lane.b32.xlu0 %v374, 88
      %v386 = vpop.permute.xlu0 %385
      %vm387 = vcmask 719872
      %v388 = vsel %vm387, %v380, %v382
      %v389 = vsel %vm387, %v384, %v386
      %v392 = vadd.f32 %v364, %v388
      %v393 = vadd.f32 %v365, %v389
      %v394 = vperm.slane %v234, 6
      %396 = vrot.lane.b32.xlu0 %v394, 48
      %v397 = vpop.permute.xlu0 %396
      %v399 = vmul.f32 %v245, %v397
      %v400 = vmul.f32 %v246, %v397
      %v401 = vmul.f32 %v247, %v397
      %v402 = vmul.f32 %v248, %v397
      %407 = vrot.lane.b32.xlu0 %v399, 80
      %v408 = vpop.permute.xlu0 %407
      %409 = vrot.lane.b32.xlu0 %v400, 80
      %v410 = vpop.permute.xlu0 %409
      %411 = vrot.lane.b32.xlu0 %v401, 80
      %v412 = vpop.permute.xlu0 %411
      %413 = vrot.lane.b32.xlu0 %v402, 80
      %v414 = vpop.permute.xlu0 %413
      %vm415 = vcmask 654336
      %v416 = vsel %vm415, %v408, %v410
      %v417 = vsel %vm415, %v412, %v414
      %v420 = vadd.f32 %v392, %v416
      %v421 = vadd.f32 %v393, %v417
      %v422 = vperm.slane %v234, 7
      %424 = vrot.lane.b32.xlu0 %v422, 56
      %v425 = vpop.permute.xlu0 %424
      %v427 = vmul.f32 %v245, %v425
      %v428 = vmul.f32 %v246, %v425
      %v429 = vmul.f32 %v247, %v425
      %v430 = vmul.f32 %v248, %v425
      %435 = vrot.lane.b32.xlu0 %v427, 72
      %v436 = vpop.permute.xlu0 %435
      %437 = vrot.lane.b32.xlu0 %v428, 72
      %v438 = vpop.permute.xlu0 %437
      %439 = vrot.lane.b32.xlu0 %v429, 72
      %v440 = vpop.permute.xlu0 %439
      %441 = vrot.lane.b32.xlu0 %v430, 72
      %v442 = vpop.permute.xlu0 %441
      %vm443 = vcmask 588800
      %v444 = vsel %vm443, %v436, %v438
      %v445 = vsel %vm443, %v440, %v442
      %v448 = vadd.f32 %v420, %v444
      %v449 = vadd.f32 %v421, %v445
      %v450 = vperm.slane %v235, 0
      %452 = vrot.lane.b32.xlu0 %v450, 64
      %v453 = vpop.permute.xlu0 %452
      %v455 = vmul.f32 %v245, %v453
      %v456 = vmul.f32 %v246, %v453
      %v457 = vmul.f32 %v247, %v453
      %v458 = vmul.f32 %v248, %v453
      %463 = vrot.lane.b32.xlu0 %v455, 64
      %v464 = vpop.permute.xlu0 %463
      %465 = vrot.lane.b32.xlu0 %v456, 64
      %v466 = vpop.permute.xlu0 %465
      %467 = vrot.lane.b32.xlu0 %v457, 64
      %v468 = vpop.permute.xlu0 %467
      %469 = vrot.lane.b32.xlu0 %v458, 64
      %v470 = vpop.permute.xlu0 %469
      %v471 = vsel %vm199, %v464, %v466
      %v472 = vsel %vm199, %v468, %v470
      %v475 = vadd.f32 %v448, %v471
      %v476 = vadd.f32 %v449, %v472
      %v477 = vld [vmem:[#allocation2] sm:$0xfe]
      %v478 = vld [vmem:[#allocation2 + $0x8] sm:$0xfe]
      %v479 = vld [vmem:[#allocation2 + $0x20] sm:$0x1]
      %v480 = vld [vmem:[#allocation2 + $0x28] sm:$0x1]
      %v481 = vperm.slane %v235, 1
      %v482 = vmul.f32 %v477, %v481
      %v483 = vmul.f32 %v247, %v481
      %v484 = vmul.f32 %v479, %v481
      %vm488 = vcmask 1046528
      %v489 = vrot.slane %v482, 1
      %v490 = vrot.slane %v483, 1
      %v491 = vsel %vm488, %v489, %v490
      %v492 = vrot.slane %v484, 1
      %v493 = vsel %vm488, %v490, %v492
      %v496 = vadd.f32 %v475, %v491
      %v497 = vadd.f32 %v476, %v493
      %v498 = vperm.slane %v235, 2
      %500 = vrot.lane.b32.xlu0 %v498, 8
      %v501 = vpop.permute.xlu0 %500
      %v503 = vmul.f32 %v477, %v501
      %v504 = vmul.f32 %v478, %v501
      %v505 = vmul.f32 %v247, %v501
      %v506 = vmul.f32 %v248, %v501
      %v507 = vmul.f32 %v479, %v501
      %v508 = vmul.f32 %v480, %v501
      %v515 = vrot.slane %v503, 1
      %v516 = vrot.slane %v505, 1
      %v517 = vsel %vm488, %v515, %v516
      %v518 = vrot.slane %v504, 1
      %v519 = vrot.slane %v506, 1
      %v520 = vsel %vm488, %v518, %v519
      %v521 = vrot.slane %v507, 1
      %v522 = vsel %vm488, %v516, %v521
      %v523 = vrot.slane %v508, 1
      %v524 = vsel %vm488, %v519, %v523
      %525 = vrot.lane.b32.xlu0 %v517, 120
      %v526 = vpop.permute.xlu0 %525
      %527 = vrot.lane.b32.xlu0 %v520, 120
      %v528 = vpop.permute.xlu0 %527
      %529 = vrot.lane.b32.xlu0 %v522, 120
      %v530 = vpop.permute.xlu0 %529
      %531 = vrot.lane.b32.xlu0 %v524, 120
      %v532 = vpop.permute.xlu0 %531
      %v533 = vsel %vm275, %v526, %v528
      %v534 = vsel %vm275, %v530, %v532
      %v537 = vadd.f32 %v496, %v533
      %v538 = vadd.f32 %v497, %v534
      %v539 = vperm.slane %v235, 3
      %541 = vrot.lane.b32.xlu0 %v539, 16
      %v542 = vpop.permute.xlu0 %541
      %v544 = vmul.f32 %v477, %v542
      %v545 = vmul.f32 %v478, %v542
      %v546 = vmul.f32 %v247, %v542
      %v547 = vmul.f32 %v248, %v542
      %v548 = vmul.f32 %v479, %v542
      %v549 = vmul.f32 %v480, %v542
      %v556 = vrot.slane %v544, 1
      %v557 = vrot.slane %v546, 1
      %v558 = vsel %vm488, %v556, %v557
      %v559 = vrot.slane %v545, 1
      %v560 = vrot.slane %v547, 1
      %v561 = vsel %vm488, %v559, %v560
      %v562 = vrot.slane %v548, 1
      %v563 = vsel %vm488, %v557, %v562
      %v564 = vrot.slane %v549, 1
      %v565 = vsel %vm488, %v560, %v564
      %566 = vrot.lane.b32.xlu0 %v558, 112
      %v567 = vpop.permute.xlu0 %566
      %568 = vrot.lane.b32.xlu0 %v561, 112
      %v569 = vpop.permute.xlu0 %568
      %570 = vrot.lane.b32.xlu0 %v563, 112
      %v571 = vpop.permute.xlu0 %570
      %572 = vrot.lane.b32.xlu0 %v565, 112
      %v573 = vpop.permute.xlu0 %572
      %v574 = vsel %vm303, %v567, %v569
      %v575 = vsel %vm303, %v571, %v573
      %v578 = vadd.f32 %v537, %v574
      %v579 = vadd.f32 %v538, %v575
      %v580 = vperm.slane %v235, 4
      %582 = vrot.lane.b32.xlu0 %v580, 24
      %v583 = vpop.permute.xlu0 %582
      %v585 = vmul.f32 %v477, %v583
      %v586 = vmul.f32 %v478, %v583
      %v587 = vmul.f32 %v247, %v583
      %v588 = vmul.f32 %v248, %v583
      %v589 = vmul.f32 %v479, %v583
      %v590 = vmul.f32 %v480, %v583
      %v597 = vrot.slane %v585, 1
      %v598 = vrot.slane %v587, 1
      %v599 = vsel %vm488, %v597, %v598
      %v600 = vrot.slane %v586, 1
      %v601 = vrot.slane %v588, 1
      %v602 = vsel %vm488, %v600, %v601
      %v603 = vrot.slane %v589, 1
      %v604 = vsel %vm488, %v598, %v603
      %v605 = vrot.slane %v590, 1
      %v606 = vsel %vm488, %v601, %v605
      %607 = vrot.lane.b32.xlu0 %v599, 104
      %v608 = vpop.permute.xlu0 %607
      %609 = vrot.lane.b32.xlu0 %v602, 104
      %v610 = vpop.permute.xlu0 %609
      %611 = vrot.lane.b32.xlu0 %v604, 104
      %v612 = vpop.permute.xlu0 %611
      %613 = vrot.lane.b32.xlu0 %v606, 104
      %v614 = vpop.permute.xlu0 %613
      %v615 = vsel %vm331, %v608, %v610
      %v616 = vsel %vm331, %v612, %v614
      %v619 = vadd.f32 %v578, %v615
      %v620 = vadd.f32 %v579, %v616
      %v621 = vperm.slane %v235, 5
      %623 = vrot.lane.b32.xlu0 %v621, 32
      %v624 = vpop.permute.xlu0 %623
      %v626 = vmul.f32 %v477, %v624
      %v627 = vmul.f32 %v478, %v624
      %v628 = vmul.f32 %v247, %v624
      %v629 = vmul.f32 %v248, %v624
      %v630 = vmul.f32 %v479, %v624
      %v631 = vmul.f32 %v480, %v624
      %v638 = vrot.slane %v626, 1
      %v639 = vrot.slane %v628, 1
      %v640 = vsel %vm488, %v638, %v639
      %v641 = vrot.slane %v627, 1
      %v642 = vrot.slane %v629, 1
      %v643 = vsel %vm488, %v641, %v642
      %v644 = vrot.slane %v630, 1
      %v645 = vsel %vm488, %v639, %v644
      %v646 = vrot.slane %v631, 1
      %v647 = vsel %vm488, %v642, %v646
      %648 = vrot.lane.b32.xlu0 %v640, 96
      %v649 = vpop.permute.xlu0 %648
      %650 = vrot.lane.b32.xlu0 %v643, 96
      %v651 = vpop.permute.xlu0 %650
      %652 = vrot.lane.b32.xlu0 %v645, 96
      %v653 = vpop.permute.xlu0 %652
      %654 = vrot.lane.b32.xlu0 %v647, 96
      %v655 = vpop.permute.xlu0 %654
      %v656 = vsel %vm359, %v649, %v651
      %v657 = vsel %vm359, %v653, %v655
      %v660 = vadd.f32 %v619, %v656
      %v661 = vadd.f32 %v620, %v657
      %v662 = vperm.slane %v235, 6
      %664 = vrot.lane.b32.xlu0 %v662, 40
      %v665 = vpop.permute.xlu0 %664
      %v667 = vmul.f32 %v477, %v665
      %v668 = vmul.f32 %v478, %v665
      %v669 = vmul.f32 %v247, %v665
      %v670 = vmul.f32 %v248, %v665
      %v671 = vmul.f32 %v479, %v665
      %v672 = vmul.f32 %v480, %v665
      %v679 = vrot.slane %v667, 1
      %v680 = vrot.slane %v669, 1
      %v681 = vsel %vm488, %v679, %v680
      %v682 = vrot.slane %v668, 1
      %v683 = vrot.slane %v670, 1
      %v684 = vsel %vm488, %v682, %v683
      %v685 = vrot.slane %v671, 1
      %v686 = vsel %vm488, %v680, %v685
      %v687 = vrot.slane %v672, 1
      %v688 = vsel %vm488, %v683, %v687
      %689 = vrot.lane.b32.xlu0 %v681, 88
      %v690 = vpop.permute.xlu0 %689
      %691 = vrot.lane.b32.xlu0 %v684, 88
      %v692 = vpop.permute.xlu0 %691
      %693 = vrot.lane.b32.xlu0 %v686, 88
      %v694 = vpop.permute.xlu0 %693
      %695 = vrot.lane.b32.xlu0 %v688, 88
      %v696 = vpop.permute.xlu0 %695
      %v697 = vsel %vm387, %v690, %v692
      %v698 = vsel %vm387, %v694, %v696
      %v701 = vadd.f32 %v660, %v697
      %v702 = vadd.f32 %v661, %v698
      %v703 = vperm.slane %v235, 7
      %705 = vrot.lane.b32.xlu0 %v703, 48
      %v706 = vpop.permute.xlu0 %705
      %v708 = vmul.f32 %v477, %v706
      %v709 = vmul.f32 %v478, %v706
      %v710 = vmul.f32 %v247, %v706
      %v711 = vmul.f32 %v248, %v706
      %v712 = vmul.f32 %v479, %v706
      %v713 = vmul.f32 %v480, %v706
      %v720 = vrot.slane %v708, 1
      %v721 = vrot.slane %v710, 1
      %v722 = vsel %vm488, %v720, %v721
      %v723 = vrot.slane %v709, 1
      %v724 = vrot.slane %v711, 1
      %v725 = vsel %vm488, %v723, %v724
      %v726 = vrot.slane %v712, 1
      %v727 = vsel %vm488, %v721, %v726
      %v728 = vrot.slane %v713, 1
      %v729 = vsel %vm488, %v724, %v728
      %730 = vrot.lane.b32.xlu0 %v722, 80
      %v731 = vpop.permute.xlu0 %730
      %732 = vrot.lane.b32.xlu0 %v725, 80
      %v733 = vpop.permute.xlu0 %732
      %734 = vrot.lane.b32.xlu0 %v727, 80
      %v735 = vpop.permute.xlu0 %734
      %736 = vrot.lane.b32.xlu0 %v729, 80
      %v737 = vpop.permute.xlu0 %736
      %v738 = vsel %vm415, %v731, %v733
      %v739 = vsel %vm415, %v735, %v737
      %v742 = vadd.f32 %v701, %v738
      %v743 = vadd.f32 %v702, %v739
      %v744 = vperm.slane %v236, 0
      %746 = vrot.lane.b32.xlu0 %v744, 56
      %v747 = vpop.permute.xlu0 %746
      %v749 = vmul.f32 %v477, %v747
      %v750 = vmul.f32 %v478, %v747
      %v751 = vmul.f32 %v247, %v747
      %v752 = vmul.f32 %v248, %v747
      %v753 = vmul.f32 %v479, %v747
      %v754 = vmul.f32 %v480, %v747
      %v761 = vrot.slane %v749, 1
      %v762 = vrot.slane %v751, 1
      %v763 = vsel %vm488, %v761, %v762
      %v764 = vrot.slane %v750, 1
      %v765 = vrot.slane %v752, 1
      %v766 = vsel %vm488, %v764, %v765
      %v767 = vrot.slane %v753, 1
      %v768 = vsel %vm488, %v762, %v767
      %v769 = vrot.slane %v754, 1
      %v770 = vsel %vm488, %v765, %v769
      %771 = vrot.lane.b32.xlu0 %v763, 72
      %v772 = vpop.permute.xlu0 %771
      %773 = vrot.lane.b32.xlu0 %v766, 72
      %v774 = vpop.permute.xlu0 %773
      %775 = vrot.lane.b32.xlu0 %v768, 72
      %v776 = vpop.permute.xlu0 %775
      %777 = vrot.lane.b32.xlu0 %v770, 72
      %v778 = vpop.permute.xlu0 %777
      %v779 = vsel %vm443, %v772, %v774
      %v780 = vsel %vm443, %v776, %v778
      %v783 = vadd.f32 %v742, %v779
      %v784 = vadd.f32 %v743, %v780
      %v785 = vperm.slane %v236, 1
      %787 = vrot.lane.b32.xlu0 %v785, 64
      %v788 = vpop.permute.xlu0 %787
      %v790 = vmul.f32 %v477, %v788
      %v791 = vmul.f32 %v478, %v788
      %v792 = vmul.f32 %v247, %v788
      %v793 = vmul.f32 %v248, %v788
      %v794 = vmul.f32 %v479, %v788
      %v795 = vmul.f32 %v480, %v788
      %v802 = vrot.slane %v790, 1
      %v803 = vrot.slane %v792, 1
      %v804 = vsel %vm488, %v802, %v803
      %v805 = vrot.slane %v791, 1
      %v806 = vrot.slane %v793, 1
      %v807 = vsel %vm488, %v805, %v806
      %v808 = vrot.slane %v794, 1
      %v809 = vsel %vm488, %v803, %v808
      %v810 = vrot.slane %v795, 1
      %v811 = vsel %vm488, %v806, %v810
      %812 = vrot.lane.b32.xlu0 %v804, 64
      %v813 = vpop.permute.xlu0 %812
      %814 = vrot.lane.b32.xlu0 %v807, 64
      %v815 = vpop.permute.xlu0 %814
      %816 = vrot.lane.b32.xlu0 %v809, 64
      %v817 = vpop.permute.xlu0 %816
      %818 = vrot.lane.b32.xlu0 %v811, 64
      %v819 = vpop.permute.xlu0 %818
      %v820 = vsel %vm199, %v813, %v815
      %v821 = vsel %vm199, %v817, %v819
      %v824 = vadd.f32 %v783, %v820
      %v825 = vadd.f32 %v784, %v821
      %v826 = vld [vmem:[#allocation2] sm:$0xfc]
      %v827 = vld [vmem:[#allocation2 + $0x8] sm:$0xfc]
      %v828 = vld [vmem:[#allocation2 + $0x20] sm:$0x3]
      %v829 = vld [vmem:[#allocation2 + $0x28] sm:$0x3]
      %v830 = vperm.slane %v236, 2
      %v831 = vmul.f32 %v826, %v830
      %v832 = vmul.f32 %v247, %v830
      %v833 = vmul.f32 %v828, %v830
      %vm837 = vcmask 1045504
      %v838 = vrot.slane %v831, 2
      %v839 = vrot.slane %v832, 2
      %v840 = vsel %vm837, %v838, %v839
      %v841 = vrot.slane %v833, 2
      %v842 = vsel %vm837, %v839, %v841
      %v845 = vadd.f32 %v824, %v840
      %v846 = vadd.f32 %v825, %v842
      %v847 = vperm.slane %v236, 3
      %849 = vrot.lane.b32.xlu0 %v847, 8
      %v850 = vpop.permute.xlu0 %849
      %v852 = vmul.f32 %v826, %v850
      %v853 = vmul.f32 %v827, %v850
      %v854 = vmul.f32 %v247, %v850
      %v855 = vmul.f32 %v248, %v850
      %v856 = vmul.f32 %v828, %v850
      %v857 = vmul.f32 %v829, %v850
      %v864 = vrot.slane %v852, 2
      %v865 = vrot.slane %v854, 2
      %v866 = vsel %vm837, %v864, %v865
      %v867 = vrot.slane %v853, 2
      %v868 = vrot.slane %v855, 2
      %v869 = vsel %vm837, %v867, %v868
      %v870 = vrot.slane %v856, 2
      %v871 = vsel %vm837, %v865, %v870
      %v872 = vrot.slane %v857, 2
      %v873 = vsel %vm837, %v868, %v872
      %874 = vrot.lane.b32.xlu0 %v866, 120
      %v875 = vpop.permute.xlu0 %874
      %876 = vrot.lane.b32.xlu0 %v869, 120
      %v877 = vpop.permute.xlu0 %876
      %878 = vrot.lane.b32.xlu0 %v871, 120
      %v879 = vpop.permute.xlu0 %878
      %880 = vrot.lane.b32.xlu0 %v873, 120
      %v881 = vpop.permute.xlu0 %880
      %v882 = vsel %vm275, %v875, %v877
      %v883 = vsel %vm275, %v879, %v881
      %v886 = vadd.f32 %v845, %v882
      %v887 = vadd.f32 %v846, %v883
      %v888 = vperm.slane %v236, 4
      %890 = vrot.lane.b32.xlu0 %v888, 16
      %v891 = vpop.permute.xlu0 %890
      %v893 = vmul.f32 %v826, %v891
      %v894 = vmul.f32 %v827, %v891
      %v895 = vmul.f32 %v247, %v891
      %v896 = vmul.f32 %v248, %v891
      %v897 = vmul.f32 %v828, %v891
      %v898 = vmul.f32 %v829, %v891
      %v905 = vrot.slane %v893, 2
      %v906 = vrot.slane %v895, 2
      %v907 = vsel %vm837, %v905, %v906
      %v908 = vrot.slane %v894, 2
      %v909 = vrot.slane %v896, 2
      %v910 = vsel %vm837, %v908, %v909
      %v911 = vrot.slane %v897, 2
      %v912 = vsel %vm837, %v906, %v911
      %v913 = vrot.slane %v898, 2
      %v914 = vsel %vm837, %v909, %v913
      %915 = vrot.lane.b32.xlu0 %v907, 112
      %v916 = vpop.permute.xlu0 %915
      %917 = vrot.lane.b32.xlu0 %v910, 112
      %v918 = vpop.permute.xlu0 %917
      %919 = vrot.lane.b32.xlu0 %v912, 112
      %v920 = vpop.permute.xlu0 %919
      %921 = vrot.lane.b32.xlu0 %v914, 112
      %v922 = vpop.permute.xlu0 %921
      %v923 = vsel %vm303, %v916, %v918
      %v924 = vsel %vm303, %v920, %v922
      %v927 = vadd.f32 %v886, %v923
      %v928 = vadd.f32 %v887, %v924
      %v929 = vperm.slane %v236, 5
      %931 = vrot.lane.b32.xlu0 %v929, 24
      %v932 = vpop.permute.xlu0 %931
      %v934 = vmul.f32 %v826, %v932
      %v935 = vmul.f32 %v827, %v932
      %v936 = vmul.f32 %v247, %v932
      %v937 = vmul.f32 %v248, %v932
      %v938 = vmul.f32 %v828, %v932
      %v939 = vmul.f32 %v829, %v932
      %v946 = vrot.slane %v934, 2
      %v947 = vrot.slane %v936, 2
      %v948 = vsel %vm837, %v946, %v947
      %v949 = vrot.slane %v935, 2
      %v950 = vrot.slane %v937, 2
      %v951 = vsel %vm837, %v949, %v950
      %v952 = vrot.slane %v938, 2
      %v953 = vsel %vm837, %v947, %v952
      %v954 = vrot.slane %v939, 2
      %v955 = vsel %vm837, %v950, %v954
      %956 = vrot.lane.b32.xlu0 %v948, 104
      %v957 = vpop.permute.xlu0 %956
      %958 = vrot.lane.b32.xlu0 %v951, 104
      %v959 = vpop.permute.xlu0 %958
      %960 = vrot.lane.b32.xlu0 %v953, 104
      %v961 = vpop.permute.xlu0 %960
      %962 = vrot.lane.b32.xlu0 %v955, 104
      %v963 = vpop.permute.xlu0 %962
      %v964 = vsel %vm331, %v957, %v959
      %v965 = vsel %vm331, %v961, %v963
      %v968 = vadd.f32 %v927, %v964
      %v969 = vadd.f32 %v928, %v965
      %v970 = vperm.slane %v236, 6
      %972 = vrot.lane.b32.xlu0 %v970, 32
      %v973 = vpop.permute.xlu0 %972
      %v975 = vmul.f32 %v826, %v973
      %v976 = vmul.f32 %v827, %v973
      %v977 = vmul.f32 %v247, %v973
      %v978 = vmul.f32 %v248, %v973
      %v979 = vmul.f32 %v828, %v973
      %v980 = vmul.f32 %v829, %v973
      %v987 = vrot.slane %v975, 2
      %v988 = vrot.slane %v977, 2
      %v989 = vsel %vm837, %v987, %v988
      %v990 = vrot.slane %v976, 2
      %v991 = vrot.slane %v978, 2
      %v992 = vsel %vm837, %v990, %v991
      %v993 = vrot.slane %v979, 2
      %v994 = vsel %vm837, %v988, %v993
      %v995 = vrot.slane %v980, 2
      %v996 = vsel %vm837, %v991, %v995
      %997 = vrot.lane.b32.xlu0 %v989, 96
      %v998 = vpop.permute.xlu0 %997
      %999 = vrot.lane.b32.xlu0 %v992, 96
      %v1000 = vpop.permute.xlu0 %999
      %1001 = vrot.lane.b32.xlu0 %v994, 96
      %v1002 = vpop.permute.xlu0 %1001
      %1003 = vrot.lane.b32.xlu0 %v996, 96
      %v1004 = vpop.permute.xlu0 %1003
      %v1005 = vsel %vm359, %v998, %v1000
      %v1006 = vsel %vm359, %v1002, %v1004
      %v1009 = vadd.f32 %v968, %v1005
      %v1010 = vadd.f32 %v969, %v1006
      %v1011 = vperm.slane %v236, 7
      %1013 = vrot.lane.b32.xlu0 %v1011, 40
      %v1014 = vpop.permute.xlu0 %1013
      %v1016 = vmul.f32 %v826, %v1014
      %v1017 = vmul.f32 %v827, %v1014
      %v1018 = vmul.f32 %v247, %v1014
      %v1019 = vmul.f32 %v248, %v1014
      %v1020 = vmul.f32 %v828, %v1014
      %v1021 = vmul.f32 %v829, %v1014
      %v1028 = vrot.slane %v1016, 2
      %v1029 = vrot.slane %v1018, 2
      %v1030 = vsel %vm837, %v1028, %v1029
      %v1031 = vrot.slane %v1017, 2
      %v1032 = vrot.slane %v1019, 2
      %v1033 = vsel %vm837, %v1031, %v1032
      %v1034 = vrot.slane %v1020, 2
      %v1035 = vsel %vm837, %v1029, %v1034
      %v1036 = vrot.slane %v1021, 2
      %v1037 = vsel %vm837, %v1032, %v1036
      %1038 = vrot.lane.b32.xlu0 %v1030, 88
      %v1039 = vpop.permute.xlu0 %1038
      %1040 = vrot.lane.b32.xlu0 %v1033, 88
      %v1041 = vpop.permute.xlu0 %1040
      %1042 = vrot.lane.b32.xlu0 %v1035, 88
      %v1043 = vpop.permute.xlu0 %1042
      %1044 = vrot.lane.b32.xlu0 %v1037, 88
      %v1045 = vpop.permute.xlu0 %1044
      %v1046 = vsel %vm387, %v1039, %v1041
      %v1047 = vsel %vm387, %v1043, %v1045
      %v1050 = vadd.f32 %v1009, %v1046
      %v1051 = vadd.f32 %v1010, %v1047
      %v1052 = vperm.slane %v237, 0
      %1054 = vrot.lane.b32.xlu0 %v1052, 48
      %v1055 = vpop.permute.xlu0 %1054
      %v1057 = vmul.f32 %v826, %v1055
      %v1058 = vmul.f32 %v827, %v1055
      %v1059 = vmul.f32 %v247, %v1055
      %v1060 = vmul.f32 %v248, %v1055
      %v1061 = vmul.f32 %v828, %v1055
      %v1062 = vmul.f32 %v829, %v1055
      %v1069 = vrot.slane %v1057, 2
      %v1070 = vrot.slane %v1059, 2
      %v1071 = vsel %vm837, %v1069, %v1070
      %v1072 = vrot.slane %v1058, 2
      %v1073 = vrot.slane %v1060, 2
      %v1074 = vsel %vm837, %v1072, %v1073
      %v1075 = vrot.slane %v1061, 2
      %v1076 = vsel %vm837, %v1070, %v1075
      %v1077 = vrot.slane %v1062, 2
      %v1078 = vsel %vm837, %v1073, %v1077
      %1079 = vrot.lane.b32.xlu0 %v1071, 80
      %v1080 = vpop.permute.xlu0 %1079
      %1081 = vrot.lane.b32.xlu0 %v1074, 80
      %v1082 = vpop.permute.xlu0 %1081
      %1083 = vrot.lane.b32.xlu0 %v1076, 80
      %v1084 = vpop.permute.xlu0 %1083
      %1085 = vrot.lane.b32.xlu0 %v1078, 80
      %v1086 = vpop.permute.xlu0 %1085
      %v1087 = vsel %vm415, %v1080, %v1082
      %v1088 = vsel %vm415, %v1084, %v1086
      %v1091 = vadd.f32 %v1050, %v1087
      %v1092 = vadd.f32 %v1051, %v1088
      %v1093 = vperm.slane %v237, 1
      %1095 = vrot.lane.b32.xlu0 %v1093, 56
      %v1096 = vpop.permute.xlu0 %1095
      %v1098 = vmul.f32 %v826, %v1096
      %v1099 = vmul.f32 %v827, %v1096
      %v1100 = vmul.f32 %v247, %v1096
      %v1101 = vmul.f32 %v248, %v1096
      %v1102 = vmul.f32 %v828, %v1096
      %v1103 = vmul.f32 %v829, %v1096
      %v1110 = vrot.slane %v1098, 2
      %v1111 = vrot.slane %v1100, 2
      %v1112 = vsel %vm837, %v1110, %v1111
      %v1113 = vrot.slane %v1099, 2
      %v1114 = vrot.slane %v1101, 2
      %v1115 = vsel %vm837, %v1113, %v1114
      %v1116 = vrot.slane %v1102, 2
      %v1117 = vsel %vm837, %v1111, %v1116
      %v1118 = vrot.slane %v1103, 2
      %v1119 = vsel %vm837, %v1114, %v1118
      %1120 = vrot.lane.b32.xlu0 %v1112, 72
      %v1121 = vpop.permute.xlu0 %1120
      %1122 = vrot.lane.b32.xlu0 %v1115, 72
      %v1123 = vpop.permute.xlu0 %1122
      %1124 = vrot.lane.b32.xlu0 %v1117, 72
      %v1125 = vpop.permute.xlu0 %1124
      %1126 = vrot.lane.b32.xlu0 %v1119, 72
      %v1127 = vpop.permute.xlu0 %1126
      %v1128 = vsel %vm443, %v1121, %v1123
      %v1129 = vsel %vm443, %v1125, %v1127
      %v1132 = vadd.f32 %v1091, %v1128
      %v1133 = vadd.f32 %v1092, %v1129
      %v1134 = vperm.slane %v237, 2
      %1136 = vrot.lane.b32.xlu0 %v1134, 64
      %v1137 = vpop.permute.xlu0 %1136
      %v1139 = vmul.f32 %v826, %v1137
      %v1140 = vmul.f32 %v827, %v1137
      %v1141 = vmul.f32 %v247, %v1137
      %v1142 = vmul.f32 %v248, %v1137
      %v1143 = vmul.f32 %v828, %v1137
      %v1144 = vmul.f32 %v829, %v1137
      %v1151 = vrot.slane %v1139, 2
      %v1152 = vrot.slane %v1141, 2
      %v1153 = vsel %vm837, %v1151, %v1152
      %v1154 = vrot.slane %v1140, 2
      %v1155 = vrot.slane %v1142, 2
      %v1156 = vsel %vm837, %v1154, %v1155
      %v1157 = vrot.slane %v1143, 2
      %v1158 = vsel %vm837, %v1152, %v1157
      %v1159 = vrot.slane %v1144, 2
      %v1160 = vsel %vm837, %v1155, %v1159
      %1161 = vrot.lane.b32.xlu0 %v1153, 64
      %v1162 = vpop.permute.xlu0 %1161
      %1163 = vrot.lane.b32.xlu0 %v1156, 64
      %v1164 = vpop.permute.xlu0 %1163
      %1165 = vrot.lane.b32.xlu0 %v1158, 64
      %v1166 = vpop.permute.xlu0 %1165
      %1167 = vrot.lane.b32.xlu0 %v1160, 64
      %v1168 = vpop.permute.xlu0 %1167
      %v1169 = vsel %vm199, %v1162, %v1164
      %v1170 = vsel %vm199, %v1166, %v1168
      %v1173 = vadd.f32 %v1132, %v1169
      %v1174 = vadd.f32 %v1133, %v1170
      %v1175 = vld [vmem:[#allocation2] sm:$0xf8]
      %v1176 = vld [vmem:[#allocation2 + $0x8] sm:$0xf8]
      %v1177 = vld [vmem:[#allocation2 + $0x20] sm:$0x7]
      %v1178 = vld [vmem:[#allocation2 + $0x28] sm:$0x7]
      %v1179 = vperm.slane %v237, 3
      %v1180 = vmul.f32 %v1175, %v1179
      %v1181 = vmul.f32 %v247, %v1179
      %v1182 = vmul.f32 %v1177, %v1179
      %vm1186 = vcmask 1044480
      %v1187 = vrot.slane %v1180, 3
      %v1188 = vrot.slane %v1181, 3
      %v1189 = vsel %vm1186, %v1187, %v1188
      %v1190 = vrot.slane %v1182, 3
      %v1191 = vsel %vm1186, %v1188, %v1190
      %v1194 = vadd.f32 %v1173, %v1189
      %v1195 = vadd.f32 %v1174, %v1191
      %v1196 = vperm.slane %v237, 4
      %1198 = vrot.lane.b32.xlu0 %v1196, 8
      %v1199 = vpop.permute.xlu0 %1198
      %v1201 = vmul.f32 %v1175, %v1199
      %v1202 = vmul.f32 %v1176, %v1199
      %v1203 = vmul.f32 %v247, %v1199
      %v1204 = vmul.f32 %v248, %v1199
      %v1205 = vmul.f32 %v1177, %v1199
      %v1206 = vmul.f32 %v1178, %v1199
      %v1213 = vrot.slane %v1201, 3
      %v1214 = vrot.slane %v1203, 3
      %v1215 = vsel %vm1186, %v1213, %v1214
      %v1216 = vrot.slane %v1202, 3
      %v1217 = vrot.slane %v1204, 3
      %v1218 = vsel %vm1186, %v1216, %v1217
      %v1219 = vrot.slane %v1205, 3
      %v1220 = vsel %vm1186, %v1214, %v1219
      %v1221 = vrot.slane %v1206, 3
      %v1222 = vsel %vm1186, %v1217, %v1221
      %1223 = vrot.lane.b32.xlu0 %v1215, 120
      %v1224 = vpop.permute.xlu0 %1223
      %1225 = vrot.lane.b32.xlu0 %v1218, 120
      %v1226 = vpop.permute.xlu0 %1225
      %1227 = vrot.lane.b32.xlu0 %v1220, 120
      %v1228 = vpop.permute.xlu0 %1227
      %1229 = vrot.lane.b32.xlu0 %v1222, 120
      %v1230 = vpop.permute.xlu0 %1229
      %v1231 = vsel %vm275, %v1224, %v1226
      %v1232 = vsel %vm275, %v1228, %v1230
      %v1235 = vadd.f32 %v1194, %v1231
      %v1236 = vadd.f32 %v1195, %v1232
      %v1237 = vperm.slane %v237, 5
      %1239 = vrot.lane.b32.xlu0 %v1237, 16
      %v1240 = vpop.permute.xlu0 %1239
      %v1242 = vmul.f32 %v1175, %v1240
      %v1243 = vmul.f32 %v1176, %v1240
      %v1244 = vmul.f32 %v247, %v1240
      %v1245 = vmul.f32 %v248, %v1240
      %v1246 = vmul.f32 %v1177, %v1240
      %v1247 = vmul.f32 %v1178, %v1240
      %v1254 = vrot.slane %v1242, 3
      %v1255 = vrot.slane %v1244, 3
      %v1256 = vsel %vm1186, %v1254, %v1255
      %v1257 = vrot.slane %v1243, 3
      %v1258 = vrot.slane %v1245, 3
      %v1259 = vsel %vm1186, %v1257, %v1258
      %v1260 = vrot.slane %v1246, 3
      %v1261 = vsel %vm1186, %v1255, %v1260
      %v1262 = vrot.slane %v1247, 3
      %v1263 = vsel %vm1186, %v1258, %v1262
      %1264 = vrot.lane.b32.xlu0 %v1256, 112
      %v1265 = vpop.permute.xlu0 %1264
      %1266 = vrot.lane.b32.xlu0 %v1259, 112
      %v1267 = vpop.permute.xlu0 %1266
      %1268 = vrot.lane.b32.xlu0 %v1261, 112
      %v1269 = vpop.permute.xlu0 %1268
      %1270 = vrot.lane.b32.xlu0 %v1263, 112
      %v1271 = vpop.permute.xlu0 %1270
      %v1272 = vsel %vm303, %v1265, %v1267
      %v1273 = vsel %vm303, %v1269, %v1271
      %v1276 = vadd.f32 %v1235, %v1272
      %v1277 = vadd.f32 %v1236, %v1273
      %v1278 = vperm.slane %v237, 6
      %1280 = vrot.lane.b32.xlu0 %v1278, 24
      %v1281 = vpop.permute.xlu0 %1280
      %v1283 = vmul.f32 %v1175, %v1281
      %v1284 = vmul.f32 %v1176, %v1281
      %v1285 = vmul.f32 %v247, %v1281
      %v1286 = vmul.f32 %v248, %v1281
      %v1287 = vmul.f32 %v1177, %v1281
      %v1288 = vmul.f32 %v1178, %v1281
      %v1295 = vrot.slane %v1283, 3
      %v1296 = vrot.slane %v1285, 3
      %v1297 = vsel %vm1186, %v1295, %v1296
      %v1298 = vrot.slane %v1284, 3
      %v1299 = vrot.slane %v1286, 3
      %v1300 = vsel %vm1186, %v1298, %v1299
      %v1301 = vrot.slane %v1287, 3
      %v1302 = vsel %vm1186, %v1296, %v1301
      %v1303 = vrot.slane %v1288, 3
      %v1304 = vsel %vm1186, %v1299, %v1303
      %1305 = vrot.lane.b32.xlu0 %v1297, 104
      %v1306 = vpop.permute.xlu0 %1305
      %1307 = vrot.lane.b32.xlu0 %v1300, 104
      %v1308 = vpop.permute.xlu0 %1307
      %1309 = vrot.lane.b32.xlu0 %v1302, 104
      %v1310 = vpop.permute.xlu0 %1309
      %1311 = vrot.lane.b32.xlu0 %v1304, 104
      %v1312 = vpop.permute.xlu0 %1311
      %v1313 = vsel %vm331, %v1306, %v1308
      %v1314 = vsel %vm331, %v1310, %v1312
      %v1317 = vadd.f32 %v1276, %v1313
      %v1318 = vadd.f32 %v1277, %v1314
      %v1319 = vperm.slane %v237, 7
      %1321 = vrot.lane.b32.xlu0 %v1319, 32
      %v1322 = vpop.permute.xlu0 %1321
      %v1324 = vmul.f32 %v1175, %v1322
      %v1325 = vmul.f32 %v1176, %v1322
      %v1326 = vmul.f32 %v247, %v1322
      %v1327 = vmul.f32 %v248, %v1322
      %v1328 = vmul.f32 %v1177, %v1322
      %v1329 = vmul.f32 %v1178, %v1322
      %v1336 = vrot.slane %v1324, 3
      %v1337 = vrot.slane %v1326, 3
      %v1338 = vsel %vm1186, %v1336, %v1337
      %v1339 = vrot.slane %v1325, 3
      %v1340 = vrot.slane %v1327, 3
      %v1341 = vsel %vm1186, %v1339, %v1340
      %v1342 = vrot.slane %v1328, 3
      %v1343 = vsel %vm1186, %v1337, %v1342
      %v1344 = vrot.slane %v1329, 3
      %v1345 = vsel %vm1186, %v1340, %v1344
      %1346 = vrot.lane.b32.xlu0 %v1338, 96
      %v1347 = vpop.permute.xlu0 %1346
      %1348 = vrot.lane.b32.xlu0 %v1341, 96
      %v1349 = vpop.permute.xlu0 %1348
      %1350 = vrot.lane.b32.xlu0 %v1343, 96
      %v1351 = vpop.permute.xlu0 %1350
      %1352 = vrot.lane.b32.xlu0 %v1345, 96
      %v1353 = vpop.permute.xlu0 %1352
      %v1354 = vsel %vm359, %v1347, %v1349
      %v1355 = vsel %vm359, %v1351, %v1353
      %v1358 = vadd.f32 %v1317, %v1354
      %v1359 = vadd.f32 %v1318, %v1355
      %v1360 = vperm.slane %v238, 0
      %1362 = vrot.lane.b32.xlu0 %v1360, 40
      %v1363 = vpop.permute.xlu0 %1362
      %v1365 = vmul.f32 %v1175, %v1363
      %v1366 = vmul.f32 %v1176, %v1363
      %v1367 = vmul.f32 %v247, %v1363
      %v1368 = vmul.f32 %v248, %v1363
      %v1369 = vmul.f32 %v1177, %v1363
      %v1370 = vmul.f32 %v1178, %v1363
      %v1377 = vrot.slane %v1365, 3
      %v1378 = vrot.slane %v1367, 3
      %v1379 = vsel %vm1186, %v1377, %v1378
      %v1380 = vrot.slane %v1366, 3
      %v1381 = vrot.slane %v1368, 3
      %v1382 = vsel %vm1186, %v1380, %v1381
      %v1383 = vrot.slane %v1369, 3
      %v1384 = vsel %vm1186, %v1378, %v1383
      %v1385 = vrot.slane %v1370, 3
      %v1386 = vsel %vm1186, %v1381, %v1385
      %1387 = vrot.lane.b32.xlu0 %v1379, 88
      %v1388 = vpop.permute.xlu0 %1387
      %1389 = vrot.lane.b32.xlu0 %v1382, 88
      %v1390 = vpop.permute.xlu0 %1389
      %1391 = vrot.lane.b32.xlu0 %v1384, 88
      %v1392 = vpop.permute.xlu0 %1391
      %1393 = vrot.lane.b32.xlu0 %v1386, 88
      %v1394 = vpop.permute.xlu0 %1393
      %v1395 = vsel %vm387, %v1388, %v1390
      %v1396 = vsel %vm387, %v1392, %v1394
      %v1399 = vadd.f32 %v1358, %v1395
      %v1400 = vadd.f32 %v1359, %v1396
      %v1401 = vperm.slane %v238, 1
      %1403 = vrot.lane.b32.xlu0 %v1401, 48
      %v1404 = vpop.permute.xlu0 %1403
      %v1406 = vmul.f32 %v1175, %v1404
      %v1407 = vmul.f32 %v1176, %v1404
      %v1408 = vmul.f32 %v247, %v1404
      %v1409 = vmul.f32 %v248, %v1404
      %v1410 = vmul.f32 %v1177, %v1404
      %v1411 = vmul.f32 %v1178, %v1404
      %v1418 = vrot.slane %v1406, 3
      %v1419 = vrot.slane %v1408, 3
      %v1420 = vsel %vm1186, %v1418, %v1419
      %v1421 = vrot.slane %v1407, 3
      %v1422 = vrot.slane %v1409, 3
      %v1423 = vsel %vm1186, %v1421, %v1422
      %v1424 = vrot.slane %v1410, 3
      %v1425 = vsel %vm1186, %v1419, %v1424
      %v1426 = vrot.slane %v1411, 3
      %v1427 = vsel %vm1186, %v1422, %v1426
      %1428 = vrot.lane.b32.xlu0 %v1420, 80
      %v1429 = vpop.permute.xlu0 %1428
      %1430 = vrot.lane.b32.xlu0 %v1423, 80
      %v1431 = vpop.permute.xlu0 %1430
      %1432 = vrot.lane.b32.xlu0 %v1425, 80
      %v1433 = vpop.permute.xlu0 %1432
      %1434 = vrot.lane.b32.xlu0 %v1427, 80
      %v1435 = vpop.permute.xlu0 %1434
      %v1436 = vsel %vm415, %v1429, %v1431
      %v1437 = vsel %vm415, %v1433, %v1435
      %v1440 = vadd.f32 %v1399, %v1436
      %v1441 = vadd.f32 %v1400, %v1437
      %v1442 = vperm.slane %v238, 2
      %1444 = vrot.lane.b32.xlu0 %v1442, 56
      %v1445 = vpop.permute.xlu0 %1444
      %v1447 = vmul.f32 %v1175, %v1445
      %v1448 = vmul.f32 %v1176, %v1445
      %v1449 = vmul.f32 %v247, %v1445
      %v1450 = vmul.f32 %v248, %v1445
      %v1451 = vmul.f32 %v1177, %v1445
      %v1452 = vmul.f32 %v1178, %v1445
      %v1459 = vrot.slane %v1447, 3
      %v1460 = vrot.slane %v1449, 3
      %v1461 = vsel %vm1186, %v1459, %v1460
      %v1462 = vrot.slane %v1448, 3
      %v1463 = vrot.slane %v1450, 3
      %v1464 = vsel %vm1186, %v1462, %v1463
      %v1465 = vrot.slane %v1451, 3
      %v1466 = vsel %vm1186, %v1460, %v1465
      %v1467 = vrot.slane %v1452, 3
      %v1468 = vsel %vm1186, %v1463, %v1467
      %1469 = vrot.lane.b32.xlu0 %v1461, 72
      %v1470 = vpop.permute.xlu0 %1469
      %1471 = vrot.lane.b32.xlu0 %v1464, 72
      %v1472 = vpop.permute.xlu0 %1471
      %1473 = vrot.lane.b32.xlu0 %v1466, 72
      %v1474 = vpop.permute.xlu0 %1473
      %1475 = vrot.lane.b32.xlu0 %v1468, 72
      %v1476 = vpop.permute.xlu0 %1475
      %v1477 = vsel %vm443, %v1470, %v1472
      %v1478 = vsel %vm443, %v1474, %v1476
      %v1481 = vadd.f32 %v1440, %v1477
      %v1482 = vadd.f32 %v1441, %v1478
      %v1483 = vperm.slane %v238, 3
      %1485 = vrot.lane.b32.xlu0 %v1483, 64
      %v1486 = vpop.permute.xlu0 %1485
      %v1488 = vmul.f32 %v1175, %v1486
      %v1489 = vmul.f32 %v1176, %v1486
      %v1490 = vmul.f32 %v247, %v1486
      %v1491 = vmul.f32 %v248, %v1486
      %v1492 = vmul.f32 %v1177, %v1486
      %v1493 = vmul.f32 %v1178, %v1486
      %v1500 = vrot.slane %v1488, 3
      %v1501 = vrot.slane %v1490, 3
      %v1502 = vsel %vm1186, %v1500, %v1501
      %v1503 = vrot.slane %v1489, 3
      %v1504 = vrot.slane %v1491, 3
      %v1505 = vsel %vm1186, %v1503, %v1504
      %v1506 = vrot.slane %v1492, 3
      %v1507 = vsel %vm1186, %v1501, %v1506
      %v1508 = vrot.slane %v1493, 3
      %v1509 = vsel %vm1186, %v1504, %v1508
      %1510 = vrot.lane.b32.xlu0 %v1502, 64
      %v1511 = vpop.permute.xlu0 %1510
      %1512 = vrot.lane.b32.xlu0 %v1505, 64
      %v1513 = vpop.permute.xlu0 %1512
      %1514 = vrot.lane.b32.xlu0 %v1507, 64
      %v1515 = vpop.permute.xlu0 %1514
      %1516 = vrot.lane.b32.xlu0 %v1509, 64
      %v1517 = vpop.permute.xlu0 %1516
      %v1518 = vsel %vm199, %v1511, %v1513
      %v1519 = vsel %vm199, %v1515, %v1517
      %v1522 = vadd.f32 %v1481, %v1518
      %v1523 = vadd.f32 %v1482, %v1519
      %v1524 = vld [vmem:[#allocation2] sm:$0xf0]
      %v1525 = vld [vmem:[#allocation2 + $0x8] sm:$0xf0]
      %v1526 = vld [vmem:[#allocation2 + $0x20] sm:$0xf]
      %v1527 = vld [vmem:[#allocation2 + $0x28] sm:$0xf]
      %v1528 = vperm.slane %v238, 4
      %v1529 = vmul.f32 %v1524, %v1528
      %v1530 = vmul.f32 %v247, %v1528
      %v1531 = vmul.f32 %v1526, %v1528
      %v1535 = vrot.slane %v1529, 4
      %v1536 = vrot.slane %v1530, 4
      %v1537 = vsel %vm209, %v1535, %v1536
      %v1538 = vrot.slane %v1531, 4
      %v1539 = vsel %vm209, %v1536, %v1538
      %v1542 = vadd.f32 %v1522, %v1537
      %v1543 = vadd.f32 %v1523, %v1539
      %v1544 = vperm.slane %v238, 5
      %1546 = vrot.lane.b32.xlu0 %v1544, 8
      %v1547 = vpop.permute.xlu0 %1546
      %v1549 = vmul.f32 %v1524, %v1547
      %v1550 = vmul.f32 %v1525, %v1547
      %v1551 = vmul.f32 %v247, %v1547
      %v1552 = vmul.f32 %v248, %v1547
      %v1553 = vmul.f32 %v1526, %v1547
      %v1554 = vmul.f32 %v1527, %v1547
      %v1561 = vrot.slane %v1549, 4
      %v1562 = vrot.slane %v1551, 4
      %v1563 = vsel %vm209, %v1561, %v1562
      %v1564 = vrot.slane %v1550, 4
      %v1565 = vrot.slane %v1552, 4
      %v1566 = vsel %vm209, %v1564, %v1565
      %v1567 = vrot.slane %v1553, 4
      %v1568 = vsel %vm209, %v1562, %v1567
      %v1569 = vrot.slane %v1554, 4
      %v1570 = vsel %vm209, %v1565, %v1569
      %1571 = vrot.lane.b32.xlu0 %v1563, 120
      %v1572 = vpop.permute.xlu0 %1571
      %1573 = vrot.lane.b32.xlu0 %v1566, 120
      %v1574 = vpop.permute.xlu0 %1573
      %1575 = vrot.lane.b32.xlu0 %v1568, 120
      %v1576 = vpop.permute.xlu0 %1575
      %1577 = vrot.lane.b32.xlu0 %v1570, 120
      %v1578 = vpop.permute.xlu0 %1577
      %v1579 = vsel %vm275, %v1572, %v1574
      %v1580 = vsel %vm275, %v1576, %v1578
      %v1583 = vadd.f32 %v1542, %v1579
      %v1584 = vadd.f32 %v1543, %v1580
      %v1585 = vperm.slane %v238, 6
      %1587 = vrot.lane.b32.xlu0 %v1585, 16
      %v1588 = vpop.permute.xlu0 %1587
      %v1590 = vmul.f32 %v1524, %v1588
      %v1591 = vmul.f32 %v1525, %v1588
      %v1592 = vmul.f32 %v247, %v1588
      %v1593 = vmul.f32 %v248, %v1588
      %v1594 = vmul.f32 %v1526, %v1588
      %v1595 = vmul.f32 %v1527, %v1588
      %v1602 = vrot.slane %v1590, 4
      %v1603 = vrot.slane %v1592, 4
      %v1604 = vsel %vm209, %v1602, %v1603
      %v1605 = vrot.slane %v1591, 4
      %v1606 = vrot.slane %v1593, 4
      %v1607 = vsel %vm209, %v1605, %v1606
      %v1608 = vrot.slane %v1594, 4
      %v1609 = vsel %vm209, %v1603, %v1608
      %v1610 = vrot.slane %v1595, 4
      %v1611 = vsel %vm209, %v1606, %v1610
      %1612 = vrot.lane.b32.xlu0 %v1604, 112
      %v1613 = vpop.permute.xlu0 %1612
      %1614 = vrot.lane.b32.xlu0 %v1607, 112
      %v1615 = vpop.permute.xlu0 %1614
      %1616 = vrot.lane.b32.xlu0 %v1609, 112
      %v1617 = vpop.permute.xlu0 %1616
      %1618 = vrot.lane.b32.xlu0 %v1611, 112
      %v1619 = vpop.permute.xlu0 %1618
      %v1620 = vsel %vm303, %v1613, %v1615
      %v1621 = vsel %vm303, %v1617, %v1619
      %v1624 = vadd.f32 %v1583, %v1620
      %v1625 = vadd.f32 %v1584, %v1621
      %v1626 = vperm.slane %v238, 7
      %1628 = vrot.lane.b32.xlu0 %v1626, 24
      %v1629 = vpop.permute.xlu0 %1628
      %v1631 = vmul.f32 %v1524, %v1629
      %v1632 = vmul.f32 %v1525, %v1629
      %v1633 = vmul.f32 %v247, %v1629
      %v1634 = vmul.f32 %v248, %v1629
      %v1635 = vmul.f32 %v1526, %v1629
      %v1636 = vmul.f32 %v1527, %v1629
      %v1643 = vrot.slane %v1631, 4
      %v1644 = vrot.slane %v1633, 4
      %v1645 = vsel %vm209, %v1643, %v1644
      %v1646 = vrot.slane %v1632, 4
      %v1647 = vrot.slane %v1634, 4
      %v1648 = vsel %vm209, %v1646, %v1647
      %v1649 = vrot.slane %v1635, 4
      %v1650 = vsel %vm209, %v1644, %v1649
      %v1651 = vrot.slane %v1636, 4
      %v1652 = vsel %vm209, %v1647, %v1651
      %1653 = vrot.lane.b32.xlu0 %v1645, 104
      %v1654 = vpop.permute.xlu0 %1653
      %1655 = vrot.lane.b32.xlu0 %v1648, 104
      %v1656 = vpop.permute.xlu0 %1655
      %1657 = vrot.lane.b32.xlu0 %v1650, 104
      %v1658 = vpop.permute.xlu0 %1657
      %1659 = vrot.lane.b32.xlu0 %v1652, 104
      %v1660 = vpop.permute.xlu0 %1659
      %v1661 = vsel %vm331, %v1654, %v1656
      %v1662 = vsel %vm331, %v1658, %v1660
      %v1665 = vadd.f32 %v1624, %v1661
      %v1666 = vadd.f32 %v1625, %v1662
      %v1667 = vperm.slane %v239, 0
      %1669 = vrot.lane.b32.xlu0 %v1667, 32
      %v1670 = vpop.permute.xlu0 %1669
      %v1672 = vmul.f32 %v1524, %v1670
      %v1673 = vmul.f32 %v1525, %v1670
      %v1674 = vmul.f32 %v247, %v1670
      %v1675 = vmul.f32 %v248, %v1670
      %v1676 = vmul.f32 %v1526, %v1670
      %v1677 = vmul.f32 %v1527, %v1670
      %v1684 = vrot.slane %v1672, 4
      %v1685 = vrot.slane %v1674, 4
      %v1686 = vsel %vm209, %v1684, %v1685
      %v1687 = vrot.slane %v1673, 4
      %v1688 = vrot.slane %v1675, 4
      %v1689 = vsel %vm209, %v1687, %v1688
      %v1690 = vrot.slane %v1676, 4
      %v1691 = vsel %vm209, %v1685, %v1690
      %v1692 = vrot.slane %v1677, 4
      %v1693 = vsel %vm209, %v1688, %v1692
      %1694 = vrot.lane.b32.xlu0 %v1686, 96
      %v1695 = vpop.permute.xlu0 %1694
      %1696 = vrot.lane.b32.xlu0 %v1689, 96
      %v1697 = vpop.permute.xlu0 %1696
      %1698 = vrot.lane.b32.xlu0 %v1691, 96
      %v1699 = vpop.permute.xlu0 %1698
      %1700 = vrot.lane.b32.xlu0 %v1693, 96
      %v1701 = vpop.permute.xlu0 %1700
      %v1702 = vsel %vm359, %v1695, %v1697
      %v1703 = vsel %vm359, %v1699, %v1701
      %v1706 = vadd.f32 %v1665, %v1702
      %v1707 = vadd.f32 %v1666, %v1703
      %v1708 = vperm.slane %v239, 1
      %1710 = vrot.lane.b32.xlu0 %v1708, 40
      %v1711 = vpop.permute.xlu0 %1710
      %v1713 = vmul.f32 %v1524, %v1711
      %v1714 = vmul.f32 %v1525, %v1711
      %v1715 = vmul.f32 %v247, %v1711
      %v1716 = vmul.f32 %v248, %v1711
      %v1717 = vmul.f32 %v1526, %v1711
      %v1718 = vmul.f32 %v1527, %v1711
      %v1725 = vrot.slane %v1713, 4
      %v1726 = vrot.slane %v1715, 4
      %v1727 = vsel %vm209, %v1725, %v1726
      %v1728 = vrot.slane %v1714, 4
      %v1729 = vrot.slane %v1716, 4
      %v1730 = vsel %vm209, %v1728, %v1729
      %v1731 = vrot.slane %v1717, 4
      %v1732 = vsel %vm209, %v1726, %v1731
      %v1733 = vrot.slane %v1718, 4
      %v1734 = vsel %vm209, %v1729, %v1733
      %1735 = vrot.lane.b32.xlu0 %v1727, 88
      %v1736 = vpop.permute.xlu0 %1735
      %1737 = vrot.lane.b32.xlu0 %v1730, 88
      %v1738 = vpop.permute.xlu0 %1737
      %1739 = vrot.lane.b32.xlu0 %v1732, 88
      %v1740 = vpop.permute.xlu0 %1739
      %1741 = vrot.lane.b32.xlu0 %v1734, 88
      %v1742 = vpop.permute.xlu0 %1741
      %v1743 = vsel %vm387, %v1736, %v1738
      %v1744 = vsel %vm387, %v1740, %v1742
      %v1747 = vadd.f32 %v1706, %v1743
      %v1748 = vadd.f32 %v1707, %v1744
      %v1749 = vperm.slane %v239, 2
      %1751 = vrot.lane.b32.xlu0 %v1749, 48
      %v1752 = vpop.permute.xlu0 %1751
      %v1754 = vmul.f32 %v1524, %v1752
      %v1755 = vmul.f32 %v1525, %v1752
      %v1756 = vmul.f32 %v247, %v1752
      %v1757 = vmul.f32 %v248, %v1752
      %v1758 = vmul.f32 %v1526, %v1752
      %v1759 = vmul.f32 %v1527, %v1752
      %v1766 = vrot.slane %v1754, 4
      %v1767 = vrot.slane %v1756, 4
      %v1768 = vsel %vm209, %v1766, %v1767
      %v1769 = vrot.slane %v1755, 4
      %v1770 = vrot.slane %v1757, 4
      %v1771 = vsel %vm209, %v1769, %v1770
      %v1772 = vrot.slane %v1758, 4
      %v1773 = vsel %vm209, %v1767, %v1772
      %v1774 = vrot.slane %v1759, 4
      %v1775 = vsel %vm209, %v1770, %v1774
      %1776 = vrot.lane.b32.xlu0 %v1768, 80
      %v1777 = vpop.permute.xlu0 %1776
      %1778 = vrot.lane.b32.xlu0 %v1771, 80
      %v1779 = vpop.permute.xlu0 %1778
      %1780 = vrot.lane.b32.xlu0 %v1773, 80
      %v1781 = vpop.permute.xlu0 %1780
      %1782 = vrot.lane.b32.xlu0 %v1775, 80
      %v1783 = vpop.permute.xlu0 %1782
      %v1784 = vsel %vm415, %v1777, %v1779
      %v1785 = vsel %vm415, %v1781, %v1783
      %v1788 = vadd.f32 %v1747, %v1784
      %v1789 = vadd.f32 %v1748, %v1785
      %v1790 = vperm.slane %v239, 3
      %1792 = vrot.lane.b32.xlu0 %v1790, 56
      %v1793 = vpop.permute.xlu0 %1792
      %v1795 = vmul.f32 %v1524, %v1793
      %v1796 = vmul.f32 %v1525, %v1793
      %v1797 = vmul.f32 %v247, %v1793
      %v1798 = vmul.f32 %v248, %v1793
      %v1799 = vmul.f32 %v1526, %v1793
      %v1800 = vmul.f32 %v1527, %v1793
      %v1807 = vrot.slane %v1795, 4
      %v1808 = vrot.slane %v1797, 4
      %v1809 = vsel %vm209, %v1807, %v1808
      %v1810 = vrot.slane %v1796, 4
      %v1811 = vrot.slane %v1798, 4
      %v1812 = vsel %vm209, %v1810, %v1811
      %v1813 = vrot.slane %v1799, 4
      %v1814 = vsel %vm209, %v1808, %v1813
      %v1815 = vrot.slane %v1800, 4
      %v1816 = vsel %vm209, %v1811, %v1815
      %1817 = vrot.lane.b32.xlu0 %v1809, 72
      %v1818 = vpop.permute.xlu0 %1817
      %1819 = vrot.lane.b32.xlu0 %v1812, 72
      %v1820 = vpop.permute.xlu0 %1819
      %1821 = vrot.lane.b32.xlu0 %v1814, 72
      %v1822 = vpop.permute.xlu0 %1821
      %1823 = vrot.lane.b32.xlu0 %v1816, 72
      %v1824 = vpop.permute.xlu0 %1823
      %v1825 = vsel %vm443, %v1818, %v1820
      %v1826 = vsel %vm443, %v1822, %v1824
      %v1829 = vadd.f32 %v1788, %v1825
      %v1830 = vadd.f32 %v1789, %v1826
      %v1831 = vperm.slane %v239, 4
      %1833 = vrot.lane.b32.xlu0 %v1831, 64
      %v1834 = vpop.permute.xlu0 %1833
      %v1836 = vmul.f32 %v1524, %v1834
      %v1837 = vmul.f32 %v1525, %v1834
      %v1838 = vmul.f32 %v247, %v1834
      %v1839 = vmul.f32 %v248, %v1834
      %v1840 = vmul.f32 %v1526, %v1834
      %v1841 = vmul.f32 %v1527, %v1834
      %v1848 = vrot.slane %v1836, 4
      %v1849 = vrot.slane %v1838, 4
      %v1850 = vsel %vm209, %v1848, %v1849
      %v1851 = vrot.slane %v1837, 4
      %v1852 = vrot.slane %v1839, 4
      %v1853 = vsel %vm209, %v1851, %v1852
      %v1854 = vrot.slane %v1840, 4
      %v1855 = vsel %vm209, %v1849, %v1854
      %v1856 = vrot.slane %v1841, 4
      %v1857 = vsel %vm209, %v1852, %v1856
      %1858 = vrot.lane.b32.xlu0 %v1850, 64
      %v1859 = vpop.permute.xlu0 %1858
      %1860 = vrot.lane.b32.xlu0 %v1853, 64
      %v1861 = vpop.permute.xlu0 %1860
      %1862 = vrot.lane.b32.xlu0 %v1855, 64
      %v1863 = vpop.permute.xlu0 %1862
      %1864 = vrot.lane.b32.xlu0 %v1857, 64
      %v1865 = vpop.permute.xlu0 %1864
      %v1866 = vsel %vm199, %v1859, %v1861
      %v1867 = vsel %vm199, %v1863, %v1865
      %v1870 = vadd.f32 %v1829, %v1866
      %v1871 = vadd.f32 %v1830, %v1867
      %v1872 = vld [vmem:[#allocation2] sm:$0xe0]
      %v1873 = vld [vmem:[#allocation2 + $0x8] sm:$0xe0]
      %v1874 = vld [vmem:[#allocation2 + $0x20] sm:$0x1f]
      %v1875 = vld [vmem:[#allocation2 + $0x28] sm:$0x1f]
      %v1876 = vperm.slane %v239, 5
      %v1877 = vmul.f32 %v1872, %v1876
      %v1878 = vmul.f32 %v247, %v1876
      %v1879 = vmul.f32 %v1874, %v1876
      %vm1883 = vcmask 1042432
      %v1884 = vrot.slane %v1877, 5
      %v1885 = vrot.slane %v1878, 5
      %v1886 = vsel %vm1883, %v1884, %v1885
      %v1887 = vrot.slane %v1879, 5
      %v1888 = vsel %vm1883, %v1885, %v1887
      %v1891 = vadd.f32 %v1870, %v1886
      %v1892 = vadd.f32 %v1871, %v1888
      %v1893 = vperm.slane %v239, 6
      %1895 = vrot.lane.b32.xlu0 %v1893, 8
      %v1896 = vpop.permute.xlu0 %1895
      %v1898 = vmul.f32 %v1872, %v1896
      %v1899 = vmul.f32 %v1873, %v1896
      %v1900 = vmul.f32 %v247, %v1896
      %v1901 = vmul.f32 %v248, %v1896
      %v1902 = vmul.f32 %v1874, %v1896
      %v1903 = vmul.f32 %v1875, %v1896
      %v1910 = vrot.slane %v1898, 5
      %v1911 = vrot.slane %v1900, 5
      %v1912 = vsel %vm1883, %v1910, %v1911
      %v1913 = vrot.slane %v1899, 5
      %v1914 = vrot.slane %v1901, 5
      %v1915 = vsel %vm1883, %v1913, %v1914
      %v1916 = vrot.slane %v1902, 5
      %v1917 = vsel %vm1883, %v1911, %v1916
      %v1918 = vrot.slane %v1903, 5
      %v1919 = vsel %vm1883, %v1914, %v1918
      %1920 = vrot.lane.b32.xlu0 %v1912, 120
      %v1921 = vpop.permute.xlu0 %1920
      %1922 = vrot.lane.b32.xlu0 %v1915, 120
      %v1923 = vpop.permute.xlu0 %1922
      %1924 = vrot.lane.b32.xlu0 %v1917, 120
      %v1925 = vpop.permute.xlu0 %1924
      %1926 = vrot.lane.b32.xlu0 %v1919, 120
      %v1927 = vpop.permute.xlu0 %1926
      %v1928 = vsel %vm275, %v1921, %v1923
      %v1929 = vsel %vm275, %v1925, %v1927
      %v1932 = vadd.f32 %v1891, %v1928
      %v1933 = vadd.f32 %v1892, %v1929
      %v1934 = vperm.slane %v239, 7
      %1936 = vrot.lane.b32.xlu0 %v1934, 16
      %v1937 = vpop.permute.xlu0 %1936
      %v1939 = vmul.f32 %v1872, %v1937
      %v1940 = vmul.f32 %v1873, %v1937
      %v1941 = vmul.f32 %v247, %v1937
      %v1942 = vmul.f32 %v248, %v1937
      %v1943 = vmul.f32 %v1874, %v1937
      %v1944 = vmul.f32 %v1875, %v1937
      %v1951 = vrot.slane %v1939, 5
      %v1952 = vrot.slane %v1941, 5
      %v1953 = vsel %vm1883, %v1951, %v1952
      %v1954 = vrot.slane %v1940, 5
      %v1955 = vrot.slane %v1942, 5
      %v1956 = vsel %vm1883, %v1954, %v1955
      %v1957 = vrot.slane %v1943, 5
      %v1958 = vsel %vm1883, %v1952, %v1957
      %v1959 = vrot.slane %v1944, 5
      %v1960 = vsel %vm1883, %v1955, %v1959
      %1961 = vrot.lane.b32.xlu0 %v1953, 112
      %v1962 = vpop.permute.xlu0 %1961
      %1963 = vrot.lane.b32.xlu0 %v1956, 112
      %v1964 = vpop.permute.xlu0 %1963
      %1965 = vrot.lane.b32.xlu0 %v1958, 112
      %v1966 = vpop.permute.xlu0 %1965
      %1967 = vrot.lane.b32.xlu0 %v1960, 112
      %v1968 = vpop.permute.xlu0 %1967
      %v1969 = vsel %vm303, %v1962, %v1964
      %v1970 = vsel %vm303, %v1966, %v1968
      %v1973 = vadd.f32 %v1932, %v1969
      %v1974 = vadd.f32 %v1933, %v1970
      %v1975 = vperm.slane %v240, 0
      %1977 = vrot.lane.b32.xlu0 %v1975, 24
      %v1978 = vpop.permute.xlu0 %1977
      %v1980 = vmul.f32 %v1872, %v1978
      %v1981 = vmul.f32 %v1873, %v1978
      %v1982 = vmul.f32 %v247, %v1978
      %v1983 = vmul.f32 %v248, %v1978
      %v1984 = vmul.f32 %v1874, %v1978
      %v1985 = vmul.f32 %v1875, %v1978
      %v1992 = vrot.slane %v1980, 5
      %v1993 = vrot.slane %v1982, 5
      %v1994 = vsel %vm1883, %v1992, %v1993
      %v1995 = vrot.slane %v1981, 5
      %v1996 = vrot.slane %v1983, 5
      %v1997 = vsel %vm1883, %v1995, %v1996
      %v1998 = vrot.slane %v1984, 5
      %v1999 = vsel %vm1883, %v1993, %v1998
      %v2000 = vrot.slane %v1985, 5
      %v2001 = vsel %vm1883, %v1996, %v2000
      %2002 = vrot.lane.b32.xlu0 %v1994, 104
      %v2003 = vpop.permute.xlu0 %2002
      %2004 = vrot.lane.b32.xlu0 %v1997, 104
      %v2005 = vpop.permute.xlu0 %2004
      %2006 = vrot.lane.b32.xlu0 %v1999, 104
      %v2007 = vpop.permute.xlu0 %2006
      %2008 = vrot.lane.b32.xlu0 %v2001, 104
      %v2009 = vpop.permute.xlu0 %2008
      %v2010 = vsel %vm331, %v2003, %v2005
      %v2011 = vsel %vm331, %v2007, %v2009
      %v2014 = vadd.f32 %v1973, %v2010
      %v2015 = vadd.f32 %v1974, %v2011
      %v2016 = vperm.slane %v240, 1
      %2018 = vrot.lane.b32.xlu0 %v2016, 32
      %v2019 = vpop.permute.xlu0 %2018
      %v2021 = vmul.f32 %v1872, %v2019
      %v2022 = vmul.f32 %v1873, %v2019
      %v2023 = vmul.f32 %v247, %v2019
      %v2024 = vmul.f32 %v248, %v2019
      %v2025 = vmul.f32 %v1874, %v2019
      %v2026 = vmul.f32 %v1875, %v2019
      %v2033 = vrot.slane %v2021, 5
      %v2034 = vrot.slane %v2023, 5
      %v2035 = vsel %vm1883, %v2033, %v2034
      %v2036 = vrot.slane %v2022, 5
      %v2037 = vrot.slane %v2024, 5
      %v2038 = vsel %vm1883, %v2036, %v2037
      %v2039 = vrot.slane %v2025, 5
      %v2040 = vsel %vm1883, %v2034, %v2039
      %v2041 = vrot.slane %v2026, 5
      %v2042 = vsel %vm1883, %v2037, %v2041
      %2043 = vrot.lane.b32.xlu0 %v2035, 96
      %v2044 = vpop.permute.xlu0 %2043
      %2045 = vrot.lane.b32.xlu0 %v2038, 96
      %v2046 = vpop.permute.xlu0 %2045
      %2047 = vrot.lane.b32.xlu0 %v2040, 96
      %v2048 = vpop.permute.xlu0 %2047
      %2049 = vrot.lane.b32.xlu0 %v2042, 96
      %v2050 = vpop.permute.xlu0 %2049
      %v2051 = vsel %vm359, %v2044, %v2046
      %v2052 = vsel %vm359, %v2048, %v2050
      %v2055 = vadd.f32 %v2014, %v2051
      %v2056 = vadd.f32 %v2015, %v2052
      %v2057 = vperm.slane %v240, 2
      %2059 = vrot.lane.b32.xlu0 %v2057, 40
      %v2060 = vpop.permute.xlu0 %2059
      %v2062 = vmul.f32 %v1872, %v2060
      %v2063 = vmul.f32 %v1873, %v2060
      %v2064 = vmul.f32 %v247, %v2060
      %v2065 = vmul.f32 %v248, %v2060
      %v2066 = vmul.f32 %v1874, %v2060
      %v2067 = vmul.f32 %v1875, %v2060
      %v2074 = vrot.slane %v2062, 5
      %v2075 = vrot.slane %v2064, 5
      %v2076 = vsel %vm1883, %v2074, %v2075
      %v2077 = vrot.slane %v2063, 5
      %v2078 = vrot.slane %v2065, 5
      %v2079 = vsel %vm1883, %v2077, %v2078
      %v2080 = vrot.slane %v2066, 5
      %v2081 = vsel %vm1883, %v2075, %v2080
      %v2082 = vrot.slane %v2067, 5
      %v2083 = vsel %vm1883, %v2078, %v2082
      %2084 = vrot.lane.b32.xlu0 %v2076, 88
      %v2085 = vpop.permute.xlu0 %2084
      %2086 = vrot.lane.b32.xlu0 %v2079, 88
      %v2087 = vpop.permute.xlu0 %2086
      %2088 = vrot.lane.b32.xlu0 %v2081, 88
      %v2089 = vpop.permute.xlu0 %2088
      %2090 = vrot.lane.b32.xlu0 %v2083, 88
      %v2091 = vpop.permute.xlu0 %2090
      %v2092 = vsel %vm387, %v2085, %v2087
      %v2093 = vsel %vm387, %v2089, %v2091
      %v2096 = vadd.f32 %v2055, %v2092
      %v2097 = vadd.f32 %v2056, %v2093
      %v2098 = vperm.slane %v240, 3
      %2100 = vrot.lane.b32.xlu0 %v2098, 48
      %v2101 = vpop.permute.xlu0 %2100
      %v2103 = vmul.f32 %v1872, %v2101
      %v2104 = vmul.f32 %v1873, %v2101
      %v2105 = vmul.f32 %v247, %v2101
      %v2106 = vmul.f32 %v248, %v2101
      %v2107 = vmul.f32 %v1874, %v2101
      %v2108 = vmul.f32 %v1875, %v2101
      %v2115 = vrot.slane %v2103, 5
      %v2116 = vrot.slane %v2105, 5
      %v2117 = vsel %vm1883, %v2115, %v2116
      %v2118 = vrot.slane %v2104, 5
      %v2119 = vrot.slane %v2106, 5
      %v2120 = vsel %vm1883, %v2118, %v2119
      %v2121 = vrot.slane %v2107, 5
      %v2122 = vsel %vm1883, %v2116, %v2121
      %v2123 = vrot.slane %v2108, 5
      %v2124 = vsel %vm1883, %v2119, %v2123
      %2125 = vrot.lane.b32.xlu0 %v2117, 80
      %v2126 = vpop.permute.xlu0 %2125
      %2127 = vrot.lane.b32.xlu0 %v2120, 80
      %v2128 = vpop.permute.xlu0 %2127
      %2129 = vrot.lane.b32.xlu0 %v2122, 80
      %v2130 = vpop.permute.xlu0 %2129
      %2131 = vrot.lane.b32.xlu0 %v2124, 80
      %v2132 = vpop.permute.xlu0 %2131
      %v2133 = vsel %vm415, %v2126, %v2128
      %v2134 = vsel %vm415, %v2130, %v2132
      %v2137 = vadd.f32 %v2096, %v2133
      %v2138 = vadd.f32 %v2097, %v2134
      %v2139 = vperm.slane %v240, 4
      %2141 = vrot.lane.b32.xlu0 %v2139, 56
      %v2142 = vpop.permute.xlu0 %2141
      %v2144 = vmul.f32 %v1872, %v2142
      %v2145 = vmul.f32 %v1873, %v2142
      %v2146 = vmul.f32 %v247, %v2142
      %v2147 = vmul.f32 %v248, %v2142
      %v2148 = vmul.f32 %v1874, %v2142
      %v2149 = vmul.f32 %v1875, %v2142
      %v2156 = vrot.slane %v2144, 5
      %v2157 = vrot.slane %v2146, 5
      %v2158 = vsel %vm1883, %v2156, %v2157
      %v2159 = vrot.slane %v2145, 5
      %v2160 = vrot.slane %v2147, 5
      %v2161 = vsel %vm1883, %v2159, %v2160
      %v2162 = vrot.slane %v2148, 5
      %v2163 = vsel %vm1883, %v2157, %v2162
      %v2164 = vrot.slane %v2149, 5
      %v2165 = vsel %vm1883, %v2160, %v2164
      %2166 = vrot.lane.b32.xlu0 %v2158, 72
      %v2167 = vpop.permute.xlu0 %2166
      %2168 = vrot.lane.b32.xlu0 %v2161, 72
      %v2169 = vpop.permute.xlu0 %2168
      %2170 = vrot.lane.b32.xlu0 %v2163, 72
      %v2171 = vpop.permute.xlu0 %2170
      %2172 = vrot.lane.b32.xlu0 %v2165, 72
      %v2173 = vpop.permute.xlu0 %2172
      %v2174 = vsel %vm443, %v2167, %v2169
      %v2175 = vsel %vm443, %v2171, %v2173
      %v2178 = vadd.f32 %v2137, %v2174
      %v2179 = vadd.f32 %v2138, %v2175
      %v2180 = vperm.slane %v240, 5
      %2182 = vrot.lane.b32.xlu0 %v2180, 64
      %v2183 = vpop.permute.xlu0 %2182
      %v2185 = vmul.f32 %v1872, %v2183
      %v2186 = vmul.f32 %v1873, %v2183
      %v2187 = vmul.f32 %v247, %v2183
      %v2188 = vmul.f32 %v248, %v2183
      %v2189 = vmul.f32 %v1874, %v2183
      %v2190 = vmul.f32 %v1875, %v2183
      %v2197 = vrot.slane %v2185, 5
      %v2198 = vrot.slane %v2187, 5
      %v2199 = vsel %vm1883, %v2197, %v2198
      %v2200 = vrot.slane %v2186, 5
      %v2201 = vrot.slane %v2188, 5
      %v2202 = vsel %vm1883, %v2200, %v2201
      %v2203 = vrot.slane %v2189, 5
      %v2204 = vsel %vm1883, %v2198, %v2203
      %v2205 = vrot.slane %v2190, 5
      %v2206 = vsel %vm1883, %v2201, %v2205
      %2207 = vrot.lane.b32.xlu0 %v2199, 64
      %v2208 = vpop.permute.xlu0 %2207
      %2209 = vrot.lane.b32.xlu0 %v2202, 64
      %v2210 = vpop.permute.xlu0 %2209
      %2211 = vrot.lane.b32.xlu0 %v2204, 64
      %v2212 = vpop.permute.xlu0 %2211
      %2213 = vrot.lane.b32.xlu0 %v2206, 64
      %v2214 = vpop.permute.xlu0 %2213
      %v2215 = vsel %vm199, %v2208, %v2210
      %v2216 = vsel %vm199, %v2212, %v2214
      %v2219 = vadd.f32 %v2178, %v2215
      %v2220 = vadd.f32 %v2179, %v2216
      %v2221 = vld [vmem:[#allocation2] sm:$0xc0]
      %v2222 = vld [vmem:[#allocation2 + $0x8] sm:$0xc0]
      %v2223 = vld [vmem:[#allocation2 + $0x20] sm:$0x3f]
      %v2224 = vld [vmem:[#allocation2 + $0x28] sm:$0x3f]
      %v2225 = vperm.slane %v240, 6
      %v2226 = vmul.f32 %v2221, %v2225
      %v2227 = vmul.f32 %v247, %v2225
      %v2228 = vmul.f32 %v2223, %v2225
      %vm2232 = vcmask 1041408
      %v2233 = vrot.slane %v2226, 6
      %v2234 = vrot.slane %v2227, 6
      %v2235 = vsel %vm2232, %v2233, %v2234
      %v2236 = vrot.slane %v2228, 6
      %v2237 = vsel %vm2232, %v2234, %v2236
      %v2240 = vadd.f32 %v2219, %v2235
      %v2241 = vadd.f32 %v2220, %v2237
      %v2242 = vperm.slane %v240, 7
      %2244 = vrot.lane.b32.xlu0 %v2242, 8
      %v2245 = vpop.permute.xlu0 %2244
      %v2247 = vmul.f32 %v2221, %v2245
      %v2248 = vmul.f32 %v2222, %v2245
      %v2249 = vmul.f32 %v247, %v2245
      %v2250 = vmul.f32 %v248, %v2245
      %v2251 = vmul.f32 %v2223, %v2245
      %v2252 = vmul.f32 %v2224, %v2245
      %v2259 = vrot.slane %v2247, 6
      %v2260 = vrot.slane %v2249, 6
      %v2261 = vsel %vm2232, %v2259, %v2260
      %v2262 = vrot.slane %v2248, 6
      %v2263 = vrot.slane %v2250, 6
      %v2264 = vsel %vm2232, %v2262, %v2263
      %v2265 = vrot.slane %v2251, 6
      %v2266 = vsel %vm2232, %v2260, %v2265
      %v2267 = vrot.slane %v2252, 6
      %v2268 = vsel %vm2232, %v2263, %v2267
      %2269 = vrot.lane.b32.xlu0 %v2261, 120
      %v2270 = vpop.permute.xlu0 %2269
      %2271 = vrot.lane.b32.xlu0 %v2264, 120
      %v2272 = vpop.permute.xlu0 %2271
      %2273 = vrot.lane.b32.xlu0 %v2266, 120
      %v2274 = vpop.permute.xlu0 %2273
      %2275 = vrot.lane.b32.xlu0 %v2268, 120
      %v2276 = vpop.permute.xlu0 %2275
      %v2277 = vsel %vm275, %v2270, %v2272
      %v2278 = vsel %vm275, %v2274, %v2276
      %v2281 = vadd.f32 %v2240, %v2277
      %v2282 = vadd.f32 %v2241, %v2278
      %v2283 = vperm.slane %v241, 0
      %2285 = vrot.lane.b32.xlu0 %v2283, 16
      %v2286 = vpop.permute.xlu0 %2285
      %v2288 = vmul.f32 %v2221, %v2286
      %v2289 = vmul.f32 %v2222, %v2286
      %v2290 = vmul.f32 %v247, %v2286
      %v2291 = vmul.f32 %v248, %v2286
      %v2292 = vmul.f32 %v2223, %v2286
      %v2293 = vmul.f32 %v2224, %v2286
      %v2300 = vrot.slane %v2288, 6
      %v2301 = vrot.slane %v2290, 6
      %v2302 = vsel %vm2232, %v2300, %v2301
      %v2303 = vrot.slane %v2289, 6
      %v2304 = vrot.slane %v2291, 6
      %v2305 = vsel %vm2232, %v2303, %v2304
      %v2306 = vrot.slane %v2292, 6
      %v2307 = vsel %vm2232, %v2301, %v2306
      %v2308 = vrot.slane %v2293, 6
      %v2309 = vsel %vm2232, %v2304, %v2308
      %2310 = vrot.lane.b32.xlu0 %v2302, 112
      %v2311 = vpop.permute.xlu0 %2310
      %2312 = vrot.lane.b32.xlu0 %v2305, 112
      %v2313 = vpop.permute.xlu0 %2312
      %2314 = vrot.lane.b32.xlu0 %v2307, 112
      %v2315 = vpop.permute.xlu0 %2314
      %2316 = vrot.lane.b32.xlu0 %v2309, 112
      %v2317 = vpop.permute.xlu0 %2316
      %v2318 = vsel %vm303, %v2311, %v2313
      %v2319 = vsel %vm303, %v2315, %v2317
      %v2322 = vadd.f32 %v2281, %v2318
      %v2323 = vadd.f32 %v2282, %v2319
      %v2324 = vperm.slane %v241, 1
      %2326 = vrot.lane.b32.xlu0 %v2324, 24
      %v2327 = vpop.permute.xlu0 %2326
      %v2329 = vmul.f32 %v2221, %v2327
      %v2330 = vmul.f32 %v2222, %v2327
      %v2331 = vmul.f32 %v247, %v2327
      %v2332 = vmul.f32 %v248, %v2327
      %v2333 = vmul.f32 %v2223, %v2327
      %v2334 = vmul.f32 %v2224, %v2327
      %v2341 = vrot.slane %v2329, 6
      %v2342 = vrot.slane %v2331, 6
      %v2343 = vsel %vm2232, %v2341, %v2342
      %v2344 = vrot.slane %v2330, 6
      %v2345 = vrot.slane %v2332, 6
      %v2346 = vsel %vm2232, %v2344, %v2345
      %v2347 = vrot.slane %v2333, 6
      %v2348 = vsel %vm2232, %v2342, %v2347
      %v2349 = vrot.slane %v2334, 6
      %v2350 = vsel %vm2232, %v2345, %v2349
      %2351 = vrot.lane.b32.xlu0 %v2343, 104
      %v2352 = vpop.permute.xlu0 %2351
      %2353 = vrot.lane.b32.xlu0 %v2346, 104
      %v2354 = vpop.permute.xlu0 %2353
      %2355 = vrot.lane.b32.xlu0 %v2348, 104
      %v2356 = vpop.permute.xlu0 %2355
      %2357 = vrot.lane.b32.xlu0 %v2350, 104
      %v2358 = vpop.permute.xlu0 %2357
      %v2359 = vsel %vm331, %v2352, %v2354
      %v2360 = vsel %vm331, %v2356, %v2358
      %v2363 = vadd.f32 %v2322, %v2359
      %v2364 = vadd.f32 %v2323, %v2360
      %v2365 = vperm.slane %v241, 2
      %2367 = vrot.lane.b32.xlu0 %v2365, 32
      %v2368 = vpop.permute.xlu0 %2367
      %v2370 = vmul.f32 %v2221, %v2368
      %v2371 = vmul.f32 %v2222, %v2368
      %v2372 = vmul.f32 %v247, %v2368
      %v2373 = vmul.f32 %v248, %v2368
      %v2374 = vmul.f32 %v2223, %v2368
      %v2375 = vmul.f32 %v2224, %v2368
      %v2382 = vrot.slane %v2370, 6
      %v2383 = vrot.slane %v2372, 6
      %v2384 = vsel %vm2232, %v2382, %v2383
      %v2385 = vrot.slane %v2371, 6
      %v2386 = vrot.slane %v2373, 6
      %v2387 = vsel %vm2232, %v2385, %v2386
      %v2388 = vrot.slane %v2374, 6
      %v2389 = vsel %vm2232, %v2383, %v2388
      %v2390 = vrot.slane %v2375, 6
      %v2391 = vsel %vm2232, %v2386, %v2390
      %2392 = vrot.lane.b32.xlu0 %v2384, 96
      %v2393 = vpop.permute.xlu0 %2392
      %2394 = vrot.lane.b32.xlu0 %v2387, 96
      %v2395 = vpop.permute.xlu0 %2394
      %2396 = vrot.lane.b32.xlu0 %v2389, 96
      %v2397 = vpop.permute.xlu0 %2396
      %2398 = vrot.lane.b32.xlu0 %v2391, 96
      %v2399 = vpop.permute.xlu0 %2398
      %v2400 = vsel %vm359, %v2393, %v2395
      %v2401 = vsel %vm359, %v2397, %v2399
      %v2404 = vadd.f32 %v2363, %v2400
      %v2405 = vadd.f32 %v2364, %v2401
      %v2406 = vperm.slane %v241, 3
      %2408 = vrot.lane.b32.xlu0 %v2406, 40
      %v2409 = vpop.permute.xlu0 %2408
      %v2411 = vmul.f32 %v2221, %v2409
      %v2412 = vmul.f32 %v2222, %v2409
      %v2413 = vmul.f32 %v247, %v2409
      %v2414 = vmul.f32 %v248, %v2409
      %v2415 = vmul.f32 %v2223, %v2409
      %v2416 = vmul.f32 %v2224, %v2409
      %v2423 = vrot.slane %v2411, 6
      %v2424 = vrot.slane %v2413, 6
      %v2425 = vsel %vm2232, %v2423, %v2424
      %v2426 = vrot.slane %v2412, 6
      %v2427 = vrot.slane %v2414, 6
      %v2428 = vsel %vm2232, %v2426, %v2427
      %v2429 = vrot.slane %v2415, 6
      %v2430 = vsel %vm2232, %v2424, %v2429
      %v2431 = vrot.slane %v2416, 6
      %v2432 = vsel %vm2232, %v2427, %v2431
      %2433 = vrot.lane.b32.xlu0 %v2425, 88
      %v2434 = vpop.permute.xlu0 %2433
      %2435 = vrot.lane.b32.xlu0 %v2428, 88
      %v2436 = vpop.permute.xlu0 %2435
      %2437 = vrot.lane.b32.xlu0 %v2430, 88
      %v2438 = vpop.permute.xlu0 %2437
      %2439 = vrot.lane.b32.xlu0 %v2432, 88
      %v2440 = vpop.permute.xlu0 %2439
      %v2441 = vsel %vm387, %v2434, %v2436
      %v2442 = vsel %vm387, %v2438, %v2440
      %v2445 = vadd.f32 %v2404, %v2441
      %v2446 = vadd.f32 %v2405, %v2442
      %v2447 = vperm.slane %v241, 4
      %2449 = vrot.lane.b32.xlu0 %v2447, 48
      %v2450 = vpop.permute.xlu0 %2449
      %v2452 = vmul.f32 %v2221, %v2450
      %v2453 = vmul.f32 %v2222, %v2450
      %v2454 = vmul.f32 %v247, %v2450
      %v2455 = vmul.f32 %v248, %v2450
      %v2456 = vmul.f32 %v2223, %v2450
      %v2457 = vmul.f32 %v2224, %v2450
      %v2464 = vrot.slane %v2452, 6
      %v2465 = vrot.slane %v2454, 6
      %v2466 = vsel %vm2232, %v2464, %v2465
      %v2467 = vrot.slane %v2453, 6
      %v2468 = vrot.slane %v2455, 6
      %v2469 = vsel %vm2232, %v2467, %v2468
      %v2470 = vrot.slane %v2456, 6
      %v2471 = vsel %vm2232, %v2465, %v2470
      %v2472 = vrot.slane %v2457, 6
      %v2473 = vsel %vm2232, %v2468, %v2472
      %2474 = vrot.lane.b32.xlu0 %v2466, 80
      %v2475 = vpop.permute.xlu0 %2474
      %2476 = vrot.lane.b32.xlu0 %v2469, 80
      %v2477 = vpop.permute.xlu0 %2476
      %2478 = vrot.lane.b32.xlu0 %v2471, 80
      %v2479 = vpop.permute.xlu0 %2478
      %2480 = vrot.lane.b32.xlu0 %v2473, 80
      %v2481 = vpop.permute.xlu0 %2480
      %v2482 = vsel %vm415, %v2475, %v2477
      %v2483 = vsel %vm415, %v2479, %v2481
      %v2486 = vadd.f32 %v2445, %v2482
      %v2487 = vadd.f32 %v2446, %v2483
      %v2488 = vperm.slane %v241, 5
      %2490 = vrot.lane.b32.xlu0 %v2488, 56
      %v2491 = vpop.permute.xlu0 %2490
      %v2493 = vmul.f32 %v2221, %v2491
      %v2494 = vmul.f32 %v2222, %v2491
      %v2495 = vmul.f32 %v247, %v2491
      %v2496 = vmul.f32 %v248, %v2491
      %v2497 = vmul.f32 %v2223, %v2491
      %v2498 = vmul.f32 %v2224, %v2491
      %v2505 = vrot.slane %v2493, 6
      %v2506 = vrot.slane %v2495, 6
      %v2507 = vsel %vm2232, %v2505, %v2506
      %v2508 = vrot.slane %v2494, 6
      %v2509 = vrot.slane %v2496, 6
      %v2510 = vsel %vm2232, %v2508, %v2509
      %v2511 = vrot.slane %v2497, 6
      %v2512 = vsel %vm2232, %v2506, %v2511
      %v2513 = vrot.slane %v2498, 6
      %v2514 = vsel %vm2232, %v2509, %v2513
      %2515 = vrot.lane.b32.xlu0 %v2507, 72
      %v2516 = vpop.permute.xlu0 %2515
      %2517 = vrot.lane.b32.xlu0 %v2510, 72
      %v2518 = vpop.permute.xlu0 %2517
      %2519 = vrot.lane.b32.xlu0 %v2512, 72
      %v2520 = vpop.permute.xlu0 %2519
      %2521 = vrot.lane.b32.xlu0 %v2514, 72
      %v2522 = vpop.permute.xlu0 %2521
      %v2523 = vsel %vm443, %v2516, %v2518
      %v2524 = vsel %vm443, %v2520, %v2522
      %v2527 = vadd.f32 %v2486, %v2523
      %v2528 = vadd.f32 %v2487, %v2524
      %v2529 = vperm.slane %v241, 6
      %2531 = vrot.lane.b32.xlu0 %v2529, 64
      %v2532 = vpop.permute.xlu0 %2531
      %v2534 = vmul.f32 %v2221, %v2532
      %v2535 = vmul.f32 %v2222, %v2532
      %v2536 = vmul.f32 %v247, %v2532
      %v2537 = vmul.f32 %v248, %v2532
      %v2538 = vmul.f32 %v2223, %v2532
      %v2539 = vmul.f32 %v2224, %v2532
      %v2546 = vrot.slane %v2534, 6
      %v2547 = vrot.slane %v2536, 6
      %v2548 = vsel %vm2232, %v2546, %v2547
      %v2549 = vrot.slane %v2535, 6
      %v2550 = vrot.slane %v2537, 6
      %v2551 = vsel %vm2232, %v2549, %v2550
      %v2552 = vrot.slane %v2538, 6
      %v2553 = vsel %vm2232, %v2547, %v2552
      %v2554 = vrot.slane %v2539, 6
      %v2555 = vsel %vm2232, %v2550, %v2554
      %2556 = vrot.lane.b32.xlu0 %v2548, 64
      %v2557 = vpop.permute.xlu0 %2556
      %2558 = vrot.lane.b32.xlu0 %v2551, 64
      %v2559 = vpop.permute.xlu0 %2558
      %2560 = vrot.lane.b32.xlu0 %v2553, 64
      %v2561 = vpop.permute.xlu0 %2560
      %2562 = vrot.lane.b32.xlu0 %v2555, 64
      %v2563 = vpop.permute.xlu0 %2562
      %v2564 = vsel %vm199, %v2557, %v2559
      %v2565 = vsel %vm199, %v2561, %v2563
      %v2568 = vadd.f32 %v2527, %v2564
      %v2569 = vadd.f32 %v2528, %v2565
      %v2570 = vld [vmem:[#allocation2] sm:$0x80]
      %v2571 = vld [vmem:[#allocation2 + $0x8] sm:$0x80]
      %v2572 = vld [vmem:[#allocation2 + $0x20] sm:$0x7f]
      %v2573 = vld [vmem:[#allocation2 + $0x28] sm:$0x7f]
      %v2574 = vperm.slane %v241, 7
      %v2575 = vmul.f32 %v2570, %v2574
      %v2576 = vmul.f32 %v247, %v2574
      %v2577 = vmul.f32 %v2572, %v2574
      %vm2581 = vcmask 1040384
      %v2582 = vrot.slane %v2575, 7
      %v2583 = vrot.slane %v2576, 7
      %v2584 = vsel %vm2581, %v2582, %v2583
      %v2585 = vrot.slane %v2577, 7
      %v2586 = vsel %vm2581, %v2583, %v2585
      %v2589 = vadd.f32 %v2568, %v2584
      %v2590 = vadd.f32 %v2569, %v2586
      %v2591 = vperm.slane %v242, 0
      %2593 = vrot.lane.b32.xlu0 %v2591, 8
      %v2594 = vpop.permute.xlu0 %2593
      %v2596 = vmul.f32 %v2570, %v2594
      %v2597 = vmul.f32 %v2571, %v2594
      %v2598 = vmul.f32 %v247, %v2594
      %v2599 = vmul.f32 %v248, %v2594
      %v2600 = vmul.f32 %v2572, %v2594
      %v2601 = vmul.f32 %v2573, %v2594
      %v2608 = vrot.slane %v2596, 7
      %v2609 = vrot.slane %v2598, 7
      %v2610 = vsel %vm2581, %v2608, %v2609
      %v2611 = vrot.slane %v2597, 7
      %v2612 = vrot.slane %v2599, 7
      %v2613 = vsel %vm2581, %v2611, %v2612
      %v2614 = vrot.slane %v2600, 7
      %v2615 = vsel %vm2581, %v2609, %v2614
      %v2616 = vrot.slane %v2601, 7
      %v2617 = vsel %vm2581, %v2612, %v2616
      %2618 = vrot.lane.b32.xlu0 %v2610, 120
      %v2619 = vpop.permute.xlu0 %2618
      %2620 = vrot.lane.b32.xlu0 %v2613, 120
      %v2621 = vpop.permute.xlu0 %2620
      %2622 = vrot.lane.b32.xlu0 %v2615, 120
      %v2623 = vpop.permute.xlu0 %2622
      %2624 = vrot.lane.b32.xlu0 %v2617, 120
      %v2625 = vpop.permute.xlu0 %2624
      %v2626 = vsel %vm275, %v2619, %v2621
      %v2627 = vsel %vm275, %v2623, %v2625
      %v2630 = vadd.f32 %v2589, %v2626
      %v2631 = vadd.f32 %v2590, %v2627
      %v2632 = vperm.slane %v242, 1
      %2634 = vrot.lane.b32.xlu0 %v2632, 16
      %v2635 = vpop.permute.xlu0 %2634
      %v2637 = vmul.f32 %v2570, %v2635
      %v2638 = vmul.f32 %v2571, %v2635
      %v2639 = vmul.f32 %v247, %v2635
      %v2640 = vmul.f32 %v248, %v2635
      %v2641 = vmul.f32 %v2572, %v2635
      %v2642 = vmul.f32 %v2573, %v2635
      %v2649 = vrot.slane %v2637, 7
      %v2650 = vrot.slane %v2639, 7
      %v2651 = vsel %vm2581, %v2649, %v2650
      %v2652 = vrot.slane %v2638, 7
      %v2653 = vrot.slane %v2640, 7
      %v2654 = vsel %vm2581, %v2652, %v2653
      %v2655 = vrot.slane %v2641, 7
      %v2656 = vsel %vm2581, %v2650, %v2655
      %v2657 = vrot.slane %v2642, 7
      %v2658 = vsel %vm2581, %v2653, %v2657
      %2659 = vrot.lane.b32.xlu0 %v2651, 112
      %v2660 = vpop.permute.xlu0 %2659
      %2661 = vrot.lane.b32.xlu0 %v2654, 112
      %v2662 = vpop.permute.xlu0 %2661
      %2663 = vrot.lane.b32.xlu0 %v2656, 112
      %v2664 = vpop.permute.xlu0 %2663
      %2665 = vrot.lane.b32.xlu0 %v2658, 112
      %v2666 = vpop.permute.xlu0 %2665
      %v2667 = vsel %vm303, %v2660, %v2662
      %v2668 = vsel %vm303, %v2664, %v2666
      %v2671 = vadd.f32 %v2630, %v2667
      %v2672 = vadd.f32 %v2631, %v2668
      %v2673 = vperm.slane %v242, 2
      %2675 = vrot.lane.b32.xlu0 %v2673, 24
      %v2676 = vpop.permute.xlu0 %2675
      %v2678 = vmul.f32 %v2570, %v2676
      %v2679 = vmul.f32 %v2571, %v2676
      %v2680 = vmul.f32 %v247, %v2676
      %v2681 = vmul.f32 %v248, %v2676
      %v2682 = vmul.f32 %v2572, %v2676
      %v2683 = vmul.f32 %v2573, %v2676
      %v2690 = vrot.slane %v2678, 7
      %v2691 = vrot.slane %v2680, 7
      %v2692 = vsel %vm2581, %v2690, %v2691
      %v2693 = vrot.slane %v2679, 7
      %v2694 = vrot.slane %v2681, 7
      %v2695 = vsel %vm2581, %v2693, %v2694
      %v2696 = vrot.slane %v2682, 7
      %v2697 = vsel %vm2581, %v2691, %v2696
      %v2698 = vrot.slane %v2683, 7
      %v2699 = vsel %vm2581, %v2694, %v2698
      %2700 = vrot.lane.b32.xlu0 %v2692, 104
      %v2701 = vpop.permute.xlu0 %2700
      %2702 = vrot.lane.b32.xlu0 %v2695, 104
      %v2703 = vpop.permute.xlu0 %2702
      %2704 = vrot.lane.b32.xlu0 %v2697, 104
      %v2705 = vpop.permute.xlu0 %2704
      %2706 = vrot.lane.b32.xlu0 %v2699, 104
      %v2707 = vpop.permute.xlu0 %2706
      %v2708 = vsel %vm331, %v2701, %v2703
      %v2709 = vsel %vm331, %v2705, %v2707
      %v2712 = vadd.f32 %v2671, %v2708
      %v2713 = vadd.f32 %v2672, %v2709
      %v2714 = vperm.slane %v242, 3
      %2716 = vrot.lane.b32.xlu0 %v2714, 32
      %v2717 = vpop.permute.xlu0 %2716
      %v2719 = vmul.f32 %v2570, %v2717
      %v2720 = vmul.f32 %v2571, %v2717
      %v2721 = vmul.f32 %v247, %v2717
      %v2722 = vmul.f32 %v248, %v2717
      %v2723 = vmul.f32 %v2572, %v2717
      %v2724 = vmul.f32 %v2573, %v2717
      %v2731 = vrot.slane %v2719, 7
      %v2732 = vrot.slane %v2721, 7
      %v2733 = vsel %vm2581, %v2731, %v2732
      %v2734 = vrot.slane %v2720, 7
      %v2735 = vrot.slane %v2722, 7
      %v2736 = vsel %vm2581, %v2734, %v2735
      %v2737 = vrot.slane %v2723, 7
      %v2738 = vsel %vm2581, %v2732, %v2737
      %v2739 = vrot.slane %v2724, 7
      %v2740 = vsel %vm2581, %v2735, %v2739
      %2741 = vrot.lane.b32.xlu0 %v2733, 96
      %v2742 = vpop.permute.xlu0 %2741
      %2743 = vrot.lane.b32.xlu0 %v2736, 96
      %v2744 = vpop.permute.xlu0 %2743
      %2745 = vrot.lane.b32.xlu0 %v2738, 96
      %v2746 = vpop.permute.xlu0 %2745
      %2747 = vrot.lane.b32.xlu0 %v2740, 96
      %v2748 = vpop.permute.xlu0 %2747
      %v2749 = vsel %vm359, %v2742, %v2744
      %v2750 = vsel %vm359, %v2746, %v2748
      %v2753 = vadd.f32 %v2712, %v2749
      %v2754 = vadd.f32 %v2713, %v2750
      %v2755 = vperm.slane %v242, 4
      %2757 = vrot.lane.b32.xlu0 %v2755, 40
      %v2758 = vpop.permute.xlu0 %2757
      %v2760 = vmul.f32 %v2570, %v2758
      %v2761 = vmul.f32 %v2571, %v2758
      %v2762 = vmul.f32 %v247, %v2758
      %v2763 = vmul.f32 %v248, %v2758
      %v2764 = vmul.f32 %v2572, %v2758
      %v2765 = vmul.f32 %v2573, %v2758
      %v2772 = vrot.slane %v2760, 7
      %v2773 = vrot.slane %v2762, 7
      %v2774 = vsel %vm2581, %v2772, %v2773
      %v2775 = vrot.slane %v2761, 7
      %v2776 = vrot.slane %v2763, 7
      %v2777 = vsel %vm2581, %v2775, %v2776
      %v2778 = vrot.slane %v2764, 7
      %v2779 = vsel %vm2581, %v2773, %v2778
      %v2780 = vrot.slane %v2765, 7
      %v2781 = vsel %vm2581, %v2776, %v2780
      %2782 = vrot.lane.b32.xlu0 %v2774, 88
      %v2783 = vpop.permute.xlu0 %2782
      %2784 = vrot.lane.b32.xlu0 %v2777, 88
      %v2785 = vpop.permute.xlu0 %2784
      %2786 = vrot.lane.b32.xlu0 %v2779, 88
      %v2787 = vpop.permute.xlu0 %2786
      %2788 = vrot.lane.b32.xlu0 %v2781, 88
      %v2789 = vpop.permute.xlu0 %2788
      %v2790 = vsel %vm387, %v2783, %v2785
      %v2791 = vsel %vm387, %v2787, %v2789
      %v2794 = vadd.f32 %v2753, %v2790
      %v2795 = vadd.f32 %v2754, %v2791
      %v2796 = vperm.slane %v242, 5
      %2798 = vrot.lane.b32.xlu0 %v2796, 48
      %v2799 = vpop.permute.xlu0 %2798
      %v2801 = vmul.f32 %v2570, %v2799
      %v2802 = vmul.f32 %v2571, %v2799
      %v2803 = vmul.f32 %v247, %v2799
      %v2804 = vmul.f32 %v248, %v2799
      %v2805 = vmul.f32 %v2572, %v2799
      %v2806 = vmul.f32 %v2573, %v2799
      %v2813 = vrot.slane %v2801, 7
      %v2814 = vrot.slane %v2803, 7
      %v2815 = vsel %vm2581, %v2813, %v2814
      %v2816 = vrot.slane %v2802, 7
      %v2817 = vrot.slane %v2804, 7
      %v2818 = vsel %vm2581, %v2816, %v2817
      %v2819 = vrot.slane %v2805, 7
      %v2820 = vsel %vm2581, %v2814, %v2819
      %v2821 = vrot.slane %v2806, 7
      %v2822 = vsel %vm2581, %v2817, %v2821
      %2823 = vrot.lane.b32.xlu0 %v2815, 80
      %v2824 = vpop.permute.xlu0 %2823
      %2825 = vrot.lane.b32.xlu0 %v2818, 80
      %v2826 = vpop.permute.xlu0 %2825
      %2827 = vrot.lane.b32.xlu0 %v2820, 80
      %v2828 = vpop.permute.xlu0 %2827
      %2829 = vrot.lane.b32.xlu0 %v2822, 80
      %v2830 = vpop.permute.xlu0 %2829
      %v2831 = vsel %vm415, %v2824, %v2826
      %v2832 = vsel %vm415, %v2828, %v2830
      %v2835 = vadd.f32 %v2794, %v2831
      %v2836 = vadd.f32 %v2795, %v2832
      %v2837 = vperm.slane %v242, 6
      %2839 = vrot.lane.b32.xlu0 %v2837, 56
      %v2840 = vpop.permute.xlu0 %2839
      %v2842 = vmul.f32 %v2570, %v2840
      %v2843 = vmul.f32 %v2571, %v2840
      %v2844 = vmul.f32 %v247, %v2840
      %v2845 = vmul.f32 %v248, %v2840
      %v2846 = vmul.f32 %v2572, %v2840
      %v2847 = vmul.f32 %v2573, %v2840
      %v2854 = vrot.slane %v2842, 7
      %v2855 = vrot.slane %v2844, 7
      %v2856 = vsel %vm2581, %v2854, %v2855
      %v2857 = vrot.slane %v2843, 7
      %v2858 = vrot.slane %v2845, 7
      %v2859 = vsel %vm2581, %v2857, %v2858
      %v2860 = vrot.slane %v2846, 7
      %v2861 = vsel %vm2581, %v2855, %v2860
      %v2862 = vrot.slane %v2847, 7
      %v2863 = vsel %vm2581, %v2858, %v2862
      %2864 = vrot.lane.b32.xlu0 %v2856, 72
      %v2865 = vpop.permute.xlu0 %2864
      %2866 = vrot.lane.b32.xlu0 %v2859, 72
      %v2867 = vpop.permute.xlu0 %2866
      %2868 = vrot.lane.b32.xlu0 %v2861, 72
      %v2869 = vpop.permute.xlu0 %2868
      %2870 = vrot.lane.b32.xlu0 %v2863, 72
      %v2871 = vpop.permute.xlu0 %2870
      %v2872 = vsel %vm443, %v2865, %v2867
      %v2873 = vsel %vm443, %v2869, %v2871
      %v2876 = vadd.f32 %v2835, %v2872
      %v2877 = vadd.f32 %v2836, %v2873
      %v2878 = vperm.slane %v242, 7
      %2880 = vrot.lane.b32.xlu0 %v2878, 64
      %v2881 = vpop.permute.xlu0 %2880
      %v2883 = vmul.f32 %v2570, %v2881
      %v2884 = vmul.f32 %v2571, %v2881
      %v2885 = vmul.f32 %v247, %v2881
      %v2886 = vmul.f32 %v248, %v2881
      %v2887 = vmul.f32 %v2572, %v2881
      %v2888 = vmul.f32 %v2573, %v2881
      %v2895 = vrot.slane %v2883, 7
      %v2896 = vrot.slane %v2885, 7
      %v2897 = vsel %vm2581, %v2895, %v2896
      %v2898 = vrot.slane %v2884, 7
      %v2899 = vrot.slane %v2886, 7
      %v2900 = vsel %vm2581, %v2898, %v2899
      %v2901 = vrot.slane %v2887, 7
      %v2902 = vsel %vm2581, %v2896, %v2901
      %v2903 = vrot.slane %v2888, 7
      %v2904 = vsel %vm2581, %v2899, %v2903
      %2905 = vrot.lane.b32.xlu0 %v2897, 64
      %v2906 = vpop.permute.xlu0 %2905
      %2907 = vrot.lane.b32.xlu0 %v2900, 64
      %v2908 = vpop.permute.xlu0 %2907
      %2909 = vrot.lane.b32.xlu0 %v2902, 64
      %v2910 = vpop.permute.xlu0 %2909
      %2911 = vrot.lane.b32.xlu0 %v2904, 64
      %v2912 = vpop.permute.xlu0 %2911
      %v2913 = vsel %vm199, %v2906, %v2908
      %v2914 = vsel %vm199, %v2910, %v2912
      %v2917 = vadd.f32 %v2876, %v2913
      %v2918 = vadd.f32 %v2877, %v2914
      %v2919 = vld [vmem:[#allocation2 + $0x20] sm:$0xff]
      %v2920 = vld [vmem:[#allocation2 + $0x28] sm:$0xff]
      %v2921 = vperm.slane %v243, 0
      %v2922 = vmul.f32 %v247, %v2921
      %v2923 = vmul.f32 %v2919, %v2921
      %v2924 = vadd.f32 %v2917, %v2922
      %v2925 = vadd.f32 %v2918, %v2923
      %v2926 = vperm.slane %v243, 1
      %2928 = vrot.lane.b32.xlu0 %v2926, 8
      %v2929 = vpop.permute.xlu0 %2928
      %v2931 = vmul.f32 %v247, %v2929
      %v2932 = vmul.f32 %v248, %v2929
      %v2933 = vmul.f32 %v2919, %v2929
      %v2934 = vmul.f32 %v2920, %v2929
      %2939 = vrot.lane.b32.xlu0 %v2931, 120
      %v2940 = vpop.permute.xlu0 %2939
      %2941 = vrot.lane.b32.xlu0 %v2932, 120
      %v2942 = vpop.permute.xlu0 %2941
      %2943 = vrot.lane.b32.xlu0 %v2933, 120
      %v2944 = vpop.permute.xlu0 %2943
      %2945 = vrot.lane.b32.xlu0 %v2934, 120
      %v2946 = vpop.permute.xlu0 %2945
      %v2947 = vsel %vm275, %v2940, %v2942
      %v2948 = vsel %vm275, %v2944, %v2946
      %v2951 = vadd.f32 %v2924, %v2947
      %v2952 = vadd.f32 %v2925, %v2948
      %v2953 = vperm.slane %v243, 2
      %2955 = vrot.lane.b32.xlu0 %v2953, 16
      %v2956 = vpop.permute.xlu0 %2955
      %v2958 = vmul.f32 %v247, %v2956
      %v2959 = vmul.f32 %v248, %v2956
      %v2960 = vmul.f32 %v2919, %v2956
      %v2961 = vmul.f32 %v2920, %v2956
      %2966 = vrot.lane.b32.xlu0 %v2958, 112
      %v2967 = vpop.permute.xlu0 %2966
      %2968 = vrot.lane.b32.xlu0 %v2959, 112
      %v2969 = vpop.permute.xlu0 %2968
      %2970 = vrot.lane.b32.xlu0 %v2960, 112
      %v2971 = vpop.permute.xlu0 %2970
      %2972 = vrot.lane.b32.xlu0 %v2961, 112
      %v2973 = vpop.permute.xlu0 %2972
      %v2974 = vsel %vm303, %v2967, %v2969
      %v2975 = vsel %vm303, %v2971, %v2973
      %v2978 = vadd.f32 %v2951, %v2974
      %v2979 = vadd.f32 %v2952, %v2975
      %v2980 = vperm.slane %v243, 3
      %2982 = vrot.lane.b32.xlu0 %v2980, 24
      %v2983 = vpop.permute.xlu0 %2982
      %v2985 = vmul.f32 %v247, %v2983
      %v2986 = vmul.f32 %v248, %v2983
      %v2987 = vmul.f32 %v2919, %v2983
      %v2988 = vmul.f32 %v2920, %v2983
      %2993 = vrot.lane.b32.xlu0 %v2985, 104
      %v2994 = vpop.permute.xlu0 %2993
      %2995 = vrot.lane.b32.xlu0 %v2986, 104
      %v2996 = vpop.permute.xlu0 %2995
      %2997 = vrot.lane.b32.xlu0 %v2987, 104
      %v2998 = vpop.permute.xlu0 %2997
      %2999 = vrot.lane.b32.xlu0 %v2988, 104
      %v3000 = vpop.permute.xlu0 %2999
      %v3001 = vsel %vm331, %v2994, %v2996
      %v3002 = vsel %vm331, %v2998, %v3000
      %v3005 = vadd.f32 %v2978, %v3001
      %v3006 = vadd.f32 %v2979, %v3002
      %v3007 = vperm.slane %v243, 4
      %3009 = vrot.lane.b32.xlu0 %v3007, 32
      %v3010 = vpop.permute.xlu0 %3009
      %v3012 = vmul.f32 %v247, %v3010
      %v3013 = vmul.f32 %v248, %v3010
      %v3014 = vmul.f32 %v2919, %v3010
      %v3015 = vmul.f32 %v2920, %v3010
      %3020 = vrot.lane.b32.xlu0 %v3012, 96
      %v3021 = vpop.permute.xlu0 %3020
      %3022 = vrot.lane.b32.xlu0 %v3013, 96
      %v3023 = vpop.permute.xlu0 %3022
      %3024 = vrot.lane.b32.xlu0 %v3014, 96
      %v3025 = vpop.permute.xlu0 %3024
      %3026 = vrot.lane.b32.xlu0 %v3015, 96
      %v3027 = vpop.permute.xlu0 %3026
      %v3028 = vsel %vm359, %v3021, %v3023
      %v3029 = vsel %vm359, %v3025, %v3027
      %v3032 = vadd.f32 %v3005, %v3028
      %v3033 = vadd.f32 %v3006, %v3029
      %v3034 = vperm.slane %v243, 5
      %3036 = vrot.lane.b32.xlu0 %v3034, 40
      %v3037 = vpop.permute.xlu0 %3036
      %v3039 = vmul.f32 %v247, %v3037
      %v3040 = vmul.f32 %v248, %v3037
      %v3041 = vmul.f32 %v2919, %v3037
      %v3042 = vmul.f32 %v2920, %v3037
      %3047 = vrot.lane.b32.xlu0 %v3039, 88
      %v3048 = vpop.permute.xlu0 %3047
      %3049 = vrot.lane.b32.xlu0 %v3040, 88
      %v3050 = vpop.permute.xlu0 %3049
      %3051 = vrot.lane.b32.xlu0 %v3041, 88
      %v3052 = vpop.permute.xlu0 %3051
      %3053 = vrot.lane.b32.xlu0 %v3042, 88
      %v3054 = vpop.permute.xlu0 %3053
      %v3055 = vsel %vm387, %v3048, %v3050
      %v3056 = vsel %vm387, %v3052, %v3054
      %v3059 = vadd.f32 %v3032, %v3055
      %v3060 = vadd.f32 %v3033, %v3056
      %v3061 = vperm.slane %v243, 6
      %3063 = vrot.lane.b32.xlu0 %v3061, 48
      %v3064 = vpop.permute.xlu0 %3063
      %v3066 = vmul.f32 %v247, %v3064
      %v3067 = vmul.f32 %v248, %v3064
      %v3068 = vmul.f32 %v2919, %v3064
      %v3069 = vmul.f32 %v2920, %v3064
      %3074 = vrot.lane.b32.xlu0 %v3066, 80
      %v3075 = vpop.permute.xlu0 %3074
      %3076 = vrot.lane.b32.xlu0 %v3067, 80
      %v3077 = vpop.permute.xlu0 %3076
      %3078 = vrot.lane.b32.xlu0 %v3068, 80
      %v3079 = vpop.permute.xlu0 %3078
      %3080 = vrot.lane.b32.xlu0 %v3069, 80
      %v3081 = vpop.permute.xlu0 %3080
      %v3082 = vsel %vm415, %v3075, %v3077
      %v3083 = vsel %vm415, %v3079, %v3081
      %v3086 = vadd.f32 %v3059, %v3082
      %v3087 = vadd.f32 %v3060, %v3083
      %v3088 = vperm.slane %v243, 7
      %3090 = vrot.lane.b32.xlu0 %v3088, 56
      %v3091 = vpop.permute.xlu0 %3090
      %v3093 = vmul.f32 %v247, %v3091
      %v3094 = vmul.f32 %v248, %v3091
      %v3095 = vmul.f32 %v2919, %v3091
      %v3096 = vmul.f32 %v2920, %v3091
      %3101 = vrot.lane.b32.xlu0 %v3093, 72
      %v3102 = vpop.permute.xlu0 %3101
      %3103 = vrot.lane.b32.xlu0 %v3094, 72
      %v3104 = vpop.permute.xlu0 %3103
      %3105 = vrot.lane.b32.xlu0 %v3095, 72
      %v3106 = vpop.permute.xlu0 %3105
      %3107 = vrot.lane.b32.xlu0 %v3096, 72
      %v3108 = vpop.permute.xlu0 %3107
      %v3109 = vsel %vm443, %v3102, %v3104
      %v3110 = vsel %vm443, %v3106, %v3108
      %v3113 = vadd.f32 %v3086, %v3109
      %v3114 = vadd.f32 %v3087, %v3110
      %v3115 = vperm.slane %v244, 0
      %3117 = vrot.lane.b32.xlu0 %v3115, 64
      %v3118 = vpop.permute.xlu0 %3117
      %v3120 = vmul.f32 %v247, %v3118
      %v3121 = vmul.f32 %v248, %v3118
      %v3122 = vmul.f32 %v2919, %v3118
      %v3123 = vmul.f32 %v2920, %v3118
      %3128 = vrot.lane.b32.xlu0 %v3120, 64
      %v3129 = vpop.permute.xlu0 %3128
      %3130 = vrot.lane.b32.xlu0 %v3121, 64
      %v3131 = vpop.permute.xlu0 %3130
      %3132 = vrot.lane.b32.xlu0 %v3122, 64
      %v3133 = vpop.permute.xlu0 %3132
      %3134 = vrot.lane.b32.xlu0 %v3123, 64
      %v3135 = vpop.permute.xlu0 %3134
      %v3136 = vsel %vm199, %v3129, %v3131
      %v3137 = vsel %vm199, %v3133, %v3135
      %v3140 = vadd.f32 %v3113, %v3136
      %v3141 = vadd.f32 %v3114, %v3137
      %v3142 = vld [vmem:[%s2] sm:$0x1]
      %v3144 = vperm.slane %v3142, 0
      %v3146 = vmul.f32 %v3140, %v3144
      %v3147 = vmul.f32 %v3141, %v3144
      %v3148 = vld [vmem:[%s3] sm:$0x1]
      %v3150 = vperm.slane %v3148, 0
      %v3152 = vadd.f32 %v3146, %v3150
      %v3153 = vadd.f32 %v3147, %v3150
      %v3154 = vmax.f32 %v3152, 0.0
      %v3155 = vmax.f32 %v3153, 0.0
      %v3156 = vmin.f32 %v3154, 6.0
      %v3157 = vmin.f32 %v3155, 6.0
      %3158 = vst [vmem:[%s197] sm:$0xff] %v3156
      %3159 = vst [vmem:[%s197 + $0x8] sm:$0xff] %v3157
      %p3160 = scmp.lt.s32.totalorder %s15, 1
      %s3161 = scalar_select %p3160, %s15, 1
      %s3162 = smul.addr %s3161, 2
      %s3163 = smul.addr %s3162, 8
      %s3164 = scalar_lea.vmem %s4, %s3163
      // Predicated region
      $region37: #{mpd_block_forward.1} parent=35 // pred_check
        %p3165 = pneg %p122
      $region38: #{mpd_block_forward.1} parent=35 // pred_check_branch
        %3167 = sbr.rel (%p3165) target = $region40
      $region39: #{mpd_block_forward.1} parent=35 // pred_region
        _
      $region40: #{mpd_block_forward.1} parent=35 // pred_fallthru
        _
    $region36: #{mpd_block_forward.1} parent=5 // pred_fallthru
      _
    %p3168 = scmp.le.s32.totalorder 2, %s10
    // Predicated region
    $region41: #{mpd_block_forward.1} parent=5 // pred_check
      %p3169 = pneg %p3168
    $region42: #{mpd_block_forward.1} parent=5 // pred_check_branch
      %3171 = sbr.rel (%p3169) target = $region44
    $region43: #{mpd_block_forward.1} parent=5 // pred_region
      %s3172 = ssub.s32 %s10, 2
      // Predicated region
      $region45: #{mpd_block_forward.1} parent=43 // pred_check
        %p3173 = pneg %p128
      $region46: #{mpd_block_forward.1} parent=43 // pred_check_branch
        %3175 = sbr.rel (%p3173) target = $region48
      $region47: #{mpd_block_forward.1} parent=43 // pred_region
        %p3176 = scmp.lt.s32.totalorder %s16, 1
        %s3177 = scalar_select %p3176, %s16, 1
        %s3178 = smul.addr %s3177, 2
        %s3179 = smul.addr %s3178, 8
        %s3180 = scalar_lea.vmem %s4, %s3179
      $region48: #{mpd_block_forward.1} parent=43 // pred_fallthru
        _
    $region44: #{mpd_block_forward.1} parent=5 // pred_fallthru
      _
  $region6: #{mpd_block_forward.1} parent=0 // loop_footer
    %s14 = sadd.s32 1, %s10
  $region7: #{mpd_block_forward.1} parent=0 // loop_footer_branch
    %9 = sbr.rel target = $region3
  $region8: #{mpd_block_forward.1} parent=0 // loop_exit
    _

</llo_original>
